<compile_context>
chip_gen: v7x
topology: tpu7x:2x2x1
jax: 0.10.0
libtpu: 0.0.40
codegen_flags: <defaults>
</compile_context>

<pallas_src>
import functools

import jax
import jax.numpy as jnp
from jax.experimental import pallas as pl
from jax.experimental.pallas import tpu as pltpu

_BN_EPS = 1e-5
_VMEM_LIMIT = 32 * 1024 * 1024
_ROW_TILE_CAP = 512


# ------------------------------- spec helpers -------------------------------

def _full(shape):
    nd = len(shape)
    return pl.BlockSpec(shape, lambda *_: (0,) * nd)


def _cparams(*sem):
    if sem:
        return pltpu.CompilerParams(dimension_semantics=sem,
                                    vmem_limit_bytes=_VMEM_LIMIT)
    return pltpu.CompilerParams(vmem_limit_bytes=_VMEM_LIMIT)


def _row_tile(r, cap=_ROW_TILE_CAP):
    if r <= cap:
        return r
    t = (cap // 8) * 8
    while t >= 8 and r % t:
        t -= 8
    if t >= 8 and r % t == 0:
        return t
    t = cap
    while r % t:
        t -= 1
    return t


def _bn_scale_shift(sum_ref, sq_ref, g_ref, b_ref, rows):
    inv_n = 1.0 / rows
    mean = sum_ref[...] * inv_n
    var = jnp.maximum(sq_ref[...] * inv_n - mean * mean, 0.0)
    scale = g_ref[...] * jax.lax.rsqrt(var + _BN_EPS)
    shift = b_ref[...] - mean * scale
    return scale, shift


# ------------------------------ Pallas kernels ------------------------------

def _mm_stats_kernel(x_ref, w_ref, y_ref, osum_ref, osq_ref):
    """Row-tiled 1x1-conv matmul + per-channel sum / sum-of-squares."""
    @pl.when(pl.program_id(0) == 0)
    def _init():
        osum_ref[...] = jnp.zeros(osum_ref.shape, osum_ref.dtype)
        osq_ref[...] = jnp.zeros(osq_ref.shape, osq_ref.dtype)

    y = jnp.dot(x_ref[...], w_ref[...], preferred_element_type=jnp.float32)
    y_ref[...] = y
    osum_ref[...] = osum_ref[...] + jnp.sum(y, axis=0, keepdims=True)
    osq_ref[...] = osq_ref[...] + jnp.sum(y * y, axis=0, keepdims=True)


def _bn_mm_stats_kernel(x_ref, sum_ref, sq_ref, g_ref, b_ref, w_ref,
                        y_ref, osum_ref, osq_ref, *, rows):
    """BN-apply (from input stats) -> 1x1-conv matmul -> output stats."""
    @pl.when(pl.program_id(0) == 0)
    def _init():
        osum_ref[...] = jnp.zeros(osum_ref.shape, osum_ref.dtype)
        osq_ref[...] = jnp.zeros(osq_ref.shape, osq_ref.dtype)

    scale, shift = _bn_scale_shift(sum_ref, sq_ref, g_ref, b_ref, rows)
    x = x_ref[...] * scale + shift
    y = jnp.dot(x, w_ref[...], preferred_element_type=jnp.float32)
    y_ref[...] = y
    osum_ref[...] = osum_ref[...] + jnp.sum(y, axis=0, keepdims=True)
    osq_ref[...] = osq_ref[...] + jnp.sum(y * y, axis=0, keepdims=True)


def _bn_relu_dw_s1_kernel(y1_ref, sum_ref, sq_ref, g_ref, b_ref, w_ref,
                          y2_ref, osum_ref, osq_ref, xpad_ref, *, rows):
    """BN1-apply + ReLU + 3x3 depthwise conv (stride 1) + BN2 stats, fused."""
    h, w, c = y1_ref.shape

    @pl.when(pl.program_id(0) == 0)
    def _init():
        osum_ref[...] = jnp.zeros(osum_ref.shape, osum_ref.dtype)
        osq_ref[...] = jnp.zeros(osq_ref.shape, osq_ref.dtype)
        xpad_ref[...] = jnp.zeros(xpad_ref.shape, xpad_ref.dtype)  # zero halo

    scale, shift = _bn_scale_shift(sum_ref, sq_ref, g_ref, b_ref, rows)
    act = jnp.maximum(
        y1_ref[...] * scale.reshape(1, 1, c) + shift.reshape(1, 1, c), 0.0)
    xpad_ref[1:h + 1, 1:w + 1, :] = act          # interior; halo stays zero

    xp = xpad_ref[...]
    wk = w_ref[...]
    acc = jnp.zeros((h, w, c), jnp.float32)
    for kh in range(3):
        for kw in range(3):
            acc = acc + xp[kh:kh + h, kw:kw + w, :] * wk[kh * 3 + kw].reshape(1, 1, c)
    y2_ref[...] = acc

    flat = acc.reshape(h * w, c)
    osum_ref[...] = osum_ref[...] + jnp.sum(flat, axis=0, keepdims=True)
    osq_ref[...] = osq_ref[...] + jnp.sum(flat * flat, axis=0, keepdims=True)


def _dw_s2_stats_kernel(ph_ref, w_ref, y2_ref, osum_ref, osq_ref):
    """3x3 depthwise conv, stride 2, from polyphase-split padded input + stats."""
    _, hp, wp, c = ph_ref.shape
    ho, wo = hp - 1, wp - 1

    @pl.when(pl.program_id(0) == 0)
    def _init():
        osum_ref[...] = jnp.zeros(osum_ref.shape, osum_ref.dtype)
        osq_ref[...] = jnp.zeros(osq_ref.shape, osq_ref.dtype)

    phv = ph_ref[...]
    wk = w_ref[...]
    acc = jnp.zeros((ho, wo, c), jnp.float32)
    for kh in range(3):
        for kw in range(3):
            ph = phv[(kh % 2) * 2 + (kw % 2)]
            tap = ph[kh // 2:kh // 2 + ho, kw // 2:kw // 2 + wo, :]
            acc = acc + tap * wk[kh * 3 + kw].reshape(1, 1, c)
    y2_ref[...] = acc

    flat = acc.reshape(ho * wo, c)
    osum_ref[...] = osum_ref[...] + jnp.sum(flat, axis=0, keepdims=True)
    osq_ref[...] = osq_ref[...] + jnp.sum(flat * flat, axis=0, keepdims=True)


def _pool_s2_kernel(ph_ref, o_ref, *, mode):
    """3x3 stride-2 max/avg pool from polyphase-split padded input."""
    _, hp, wp, c = ph_ref.shape
    ho, wo = hp - 1, wp - 1
    phv = ph_ref[...]
    if mode == "max":
        acc = jnp.full((ho, wo, c), -jnp.inf, jnp.float32)
    else:
        acc = jnp.zeros((ho, wo, c), jnp.float32)
    for kh in range(3):
        for kw in range(3):
            ph = phv[(kh % 2) * 2 + (kw % 2)]
            tap = ph[kh // 2:kh // 2 + ho, kw // 2:kw // 2 + wo, :]
            acc = jnp.maximum(acc, tap) if mode == "max" else acc + tap
    if mode == "avg":
        acc = acc * (1.0 / 9.0)
    o_ref[...] = acc


def _stem_conv_kernel(ph_ref, w_ref, o_ref):
    """3x3 stride-2 full conv (tiny Cin) from polyphase-split padded input."""
    _, hp, wp, cin = ph_ref.shape
    ho, wo, cout = o_ref.shape
    phv = ph_ref[...]
    wv = w_ref[...]
    acc = jnp.zeros((ho, wo, cout), jnp.float32)
    for kh in range(3):
        for kw in range(3):
            ph = phv[(kh % 2) * 2 + (kw % 2)]
            tap = ph[kh // 2:kh // 2 + ho, kw // 2:kw // 2 + wo, :]
            for ci in range(cin):
                acc = acc + tap[:, :, ci:ci + 1] * wv[kh, kw, ci].reshape(1, 1, cout)
    o_ref[...] = acc


def _bn_act_kernel(x_ref, sum_ref, sq_ref, g_ref, b_ref, o_ref, *, rows, relu):
    scale, shift = _bn_scale_shift(sum_ref, sq_ref, g_ref, b_ref, rows)
    y = x_ref[...] * scale + shift
    if relu:
        y = jnp.maximum(y, 0.0)
    o_ref[...] = y


def _bn_add_kernel(x_ref, sum_ref, sq_ref, g_ref, b_ref, r_ref, o_ref, *, rows):
    scale, shift = _bn_scale_shift(sum_ref, sq_ref, g_ref, b_ref, rows)
    o_ref[...] = x_ref[...] * scale + shift + r_ref[...]


def _pool_fc_kernel(x_ref, w_ref, b_ref, o_ref):
    x = x_ref[...]
    pooled = jnp.sum(x, axis=1) * (1.0 / x_ref.shape[1])      # (N, C)
    o_ref[...] = (jnp.dot(pooled, w_ref[...],
                          preferred_element_type=jnp.float32) + b_ref[...])


# --------------------------------- wrappers ---------------------------------

def _phase_split(xp):
    # xp: (N, Hp, Wp, C), Hp/Wp even  ->  (N, 4, Hp//2, Wp//2, C)
    # phases[n, 2*p + q, a, b, c] == xp[n, 2*a + p, 2*b + q, c]
    n, hp, wp, c = xp.shape
    assert hp % 2 == 0 and wp % 2 == 0
    x = xp.reshape(n, hp // 2, 2, wp // 2, 2, c)
    x = jnp.transpose(x, (0, 2, 4, 1, 3, 5))
    return x.reshape(n, 4, hp // 2, wp // 2, c)


def pointwise_conv_stats(x2, w):
    r, cin = x2.shape
    cout = w.shape[1]
    tr = _row_tile(r)
    return pl.pallas_call(
        _mm_stats_kernel,
        grid=(r // tr,),
        in_specs=[pl.BlockSpec((tr, cin), lambda i: (i, 0)), _full(w.shape)],
        out_specs=(pl.BlockSpec((tr, cout), lambda i: (i, 0)),
                   pl.BlockSpec((1, cout), lambda i: (0, 0)),
                   pl.BlockSpec((1, cout), lambda i: (0, 0))),
        out_shape=(jax.ShapeDtypeStruct((r, cout), jnp.float32),
                   jax.ShapeDtypeStruct((1, cout), jnp.float32),
                   jax.ShapeDtypeStruct((1, cout), jnp.float32)),
        compiler_params=_cparams("arbitrary"),
    )(x2, w)


def bn_pointwise_conv_stats(x2, ssum, ssq, gamma, beta, w, rows):
    r, cin = x2.shape
    cout = w.shape[1]
    tr = _row_tile(r)
    kern = functools.partial(_bn_mm_stats_kernel, rows=float(rows))
    return pl.pallas_call(
        kern,
        grid=(r // tr,),
        in_specs=[pl.BlockSpec((tr, cin), lambda i: (i, 0)),
                  _full(ssum.shape), _full(ssq.shape),
                  _full(gamma.shape), _full(beta.shape), _full(w.shape)],
        out_specs=(pl.BlockSpec((tr, cout), lambda i: (i, 0)),
                   pl.BlockSpec((1, cout), lambda i: (0, 0)),
                   pl.BlockSpec((1, cout), lambda i: (0, 0))),
        out_shape=(jax.ShapeDtypeStruct((r, cout), jnp.float32),
                   jax.ShapeDtypeStruct((1, cout), jnp.float32),
                   jax.ShapeDtypeStruct((1, cout), jnp.float32)),
        compiler_params=_cparams("arbitrary"),
    )(x2, ssum, ssq, gamma, beta, w)


def bn_relu_dw_s1(y1, ssum, ssq, gamma, beta, w9, rows):
    n, h, w, c = y1.shape
    kern = functools.partial(_bn_relu_dw_s1_kernel, rows=float(rows))
    return pl.pallas_call(
        kern,
        grid=(n,),
        in_specs=[pl.BlockSpec((None, h, w, c), lambda i: (i, 0, 0, 0)),
                  _full(ssum.shape), _full(ssq.shape),
                  _full(gamma.shape), _full(beta.shape), _full(w9.shape)],
        out_specs=(pl.BlockSpec((None, h, w, c), lambda i: (i, 0, 0, 0)),
                   pl.BlockSpec((1, c), lambda i: (0, 0)),
                   pl.BlockSpec((1, c), lambda i: (0, 0))),
        out_shape=(jax.ShapeDtypeStruct((n, h, w, c), jnp.float32),
                   jax.ShapeDtypeStruct((1, c), jnp.float32),
                   jax.ShapeDtypeStruct((1, c), jnp.float32)),
        scratch_shapes=[pltpu.VMEM((h + 2, w + 2, c), jnp.float32)],
        compiler_params=_cparams("arbitrary"),
    )(y1, ssum, ssq, gamma, beta, w9)


def dw_s2_stats(phases, w9):
    n, _, hp, wp, c = phases.shape
    ho, wo = hp - 1, wp - 1
    return pl.pallas_call(
        _dw_s2_stats_kernel,
        grid=(n,),
        in_specs=[pl.BlockSpec((None, 4, hp, wp, c), lambda i: (i, 0, 0, 0, 0)),
                  _full(w9.shape)],
        out_specs=(pl.BlockSpec((None, ho, wo, c), lambda i: (i, 0, 0, 0)),
                   pl.BlockSpec((1, c), lambda i: (0, 0)),
                   pl.BlockSpec((1, c), lambda i: (0, 0))),
        out_shape=(jax.ShapeDtypeStruct((n, ho, wo, c), jnp.float32),
                   jax.ShapeDtypeStruct((1, c), jnp.float32),
                   jax.ShapeDtypeStruct((1, c), jnp.float32)),
        compiler_params=_cparams("arbitrary"),
    )(phases, w9)


@functools.partial(jax.jit, static_argnames=("mode",))
def pool3x3_s2(x, mode):
    pad_val = -jnp.inf if mode == "max" else 0.0
    xp = jnp.pad(x, ((0, 0), (1, 1), (1, 1), (0, 0)), constant_values=pad_val)
    phases = _phase_split(xp)
    n, _, hp, wp, c = phases.shape
    ho, wo = hp - 1, wp - 1
    kern = functools.partial(_pool_s2_kernel, mode=mode)
    return pl.pallas_call(
        kern,
        grid=(n,),
        in_specs=[pl.BlockSpec((None, 4, hp, wp, c), lambda i: (i, 0, 0, 0, 0))],
        out_specs=pl.BlockSpec((None, ho, wo, c), lambda i: (i, 0, 0, 0)),
        out_shape=jax.ShapeDtypeStruct((n, ho, wo, c), jnp.float32),
        compiler_params=_cparams("parallel"),
    )(phases)


@jax.jit
def stem_conv_s2(x, w):
    # x: (N, H, W, 3); w: (3, 3, Cin, Cout); stride 2, pad 1, no bias/BN.
    xp = jnp.pad(x, ((0, 0), (1, 1), (1, 1), (0, 0)))
    phases = _phase_split(xp)
    n, _, hp, wp, cin = phases.shape
    ho, wo = hp - 1, wp - 1
    cout = w.shape[-1]
    return pl.pallas_call(
        _stem_conv_kernel,
        grid=(n,),
        in_specs=[pl.BlockSpec((None, 4, hp, wp, cin), lambda i: (i, 0, 0, 0, 0)),
                  _full(w.shape)],
        out_specs=pl.BlockSpec((None, ho, wo, cout), lambda i: (i, 0, 0, 0)),
        out_shape=jax.ShapeDtypeStruct((n, ho, wo, cout), jnp.float32),
        compiler_params=_cparams("parallel"),
    )(phases, w)


def bn_act(x2, ssum, ssq, gamma, beta, rows, relu):
    r, c = x2.shape
    tr = _row_tile(r)
    kern = functools.partial(_bn_act_kernel, rows=float(rows), relu=relu)
    return pl.pallas_call(
        kern,
        grid=(r // tr,),
        in_specs=[pl.BlockSpec((tr, c), lambda i: (i, 0)),
                  _full(ssum.shape), _full(ssq.shape),
                  _full(gamma.shape), _full(beta.shape)],
        out_specs=pl.BlockSpec((tr, c), lambda i: (i, 0)),
        out_shape=jax.ShapeDtypeStruct((r, c), jnp.float32),
        compiler_params=_cparams("parallel"),
    )(x2, ssum, ssq, gamma, beta)


def bn_add(x2, ssum, ssq, gamma, beta, res2, rows):
    r, c = x2.shape
    tr = _row_tile(r)
    kern = functools.partial(_bn_add_kernel, rows=float(rows))
    return pl.pallas_call(
        kern,
        grid=(r // tr,),
        in_specs=[pl.BlockSpec((tr, c), lambda i: (i, 0)),
                  _full(ssum.shape), _full(ssq.shape),
                  _full(gamma.shape), _full(beta.shape),
                  pl.BlockSpec((tr, c), lambda i: (i, 0))],
        out_specs=pl.BlockSpec((tr, c), lambda i: (i, 0)),
        out_shape=jax.ShapeDtypeStruct((r, c), jnp.float32),
        compiler_params=_cparams("parallel"),
    )(x2, ssum, ssq, gamma, beta, res2)


@jax.jit
def global_pool_fc(x, w, b):
    n, h, wd, c = x.shape
    x3 = x.reshape(n, h * wd, c)
    out_dim = w.shape[1]
    b2 = b.reshape(1, out_dim)
    return pl.pallas_call(
        _pool_fc_kernel,
        in_specs=[_full(x3.shape), _full(w.shape), _full(b2.shape)],
        out_specs=_full((n, out_dim)),
        out_shape=jax.ShapeDtypeStruct((n, out_dim), jnp.float32),
        compiler_params=_cparams(),
    )(x3, w, b2)


# -------------------------------- block / net -------------------------------

@functools.partial(jax.jit, static_argnames=("stride",))
def inverted_residual(x, p, stride):
    n, h, w, cin = x.shape
    hidden = p["w1"].shape[1]
    r1 = n * h * w
    x2 = x.reshape(r1, cin)

    # K1: merged-group 1x1 conv (shuffle folded into weights) + BN1 stats.
    y1, s1sum, s1sq = pointwise_conv_stats(x2, p["w1"])

    if stride == 1:
        # K2: BN1-apply + ReLU + depthwise 3x3 (stride 1) + BN2 stats, fused.
        y2, s2sum, s2sq = bn_relu_dw_s1(y1.reshape(n, h, w, hidden),
                                        s1sum, s1sq, p["g1"], p["b1"],
                                        p["dw_w"], rows=r1)
        ho, wo = h, w
    else:
        # K2a: BN1-apply + ReLU; K2b: depthwise 3x3 stride-2 on polyphase input.
        a1 = bn_act(y1, s1sum, s1sq, p["g1"], p["b1"], rows=r1, relu=True)
        a1 = a1.reshape(n, h, w, hidden)
        a1p = jnp.pad(a1, ((0, 0), (1, 1), (1, 1), (0, 0)))
        y2, s2sum, s2sq = dw_s2_stats(_phase_split(a1p), p["dw_w"])
        ho, wo = h // 2, w // 2

    r2 = n * ho * wo
    # K3: BN2-apply + merged-group 1x1 conv + BN3 stats, fused.
    y3, s3sum, s3sq = bn_pointwise_conv_stats(y2.reshape(r2, hidden),
                                              s2sum, s2sq, p["g2"], p["b2"],
                                              p["w2"], rows=r2)
    cout2 = p["w2"].shape[1]

    if stride == 1:
        # K4: BN3-apply + residual add.
        out = bn_add(y3, s3sum, s3sq, p["g3"], p["b3"], x2, rows=r2)
        return out.reshape(n, ho, wo, cout2)

    # stride 2: BN3-apply, avgpool branch, channel concat.
    route2 = bn_act(y3, s3sum, s3sq, p["g3"], p["b3"], rows=r2, relu=False)
    route1 = pool3x3_s2(x, mode="avg")
    out = jnp.concatenate([route1.reshape(r2, cin), route2], axis=-1)
    return out.reshape(n, ho, wo, cin + cout2)


def shufflenet_forward(x_nchw, params):
    x = jnp.transpose(x_nchw, (0, 2, 3, 1)).astype(jnp.float32)   # NCHW -> NHWC
    x = stem_conv_s2(x, params["conv1_w"])
    x = pool3x3_s2(x, mode="max")
    for stage in ("stage2", "stage3", "stage4"):
        for bi, blk in enumerate(params[stage]):
            x = inverted_residual(x, blk, stride=2 if bi == 0 else 1)
    return global_pool_fc(x, params["fc_w"], params["fc_b"])


# -------------------------------- parameters --------------------------------

_GROUPS_MAPPER = {1: [144, 288, 576], 2: [200, 400, 800], 3: [240, 480, 960],
                  4: [272, 544, 1088], 8: [384, 768, 1536]}


def _shuffle_src(c, g=2):
    # channel_shuffle output channel j takes original channel src[j].
    return jnp.arange(c).reshape(g, c // g).T.reshape(-1)


def _grouped_dense(wg, inc, groups):
    # PyTorch grouped 1x1 weight (out, inc // groups) -> dense (inc, out).
    out = wg.shape[0]
    cig, cog = inc // groups, out // groups
    dense = jnp.zeros((inc, out), jnp.float32)
    for g in range(groups):
        dense = dense.at[g * cig:(g + 1) * cig, g * cog:(g + 1) * cog].set(
            wg[g * cog:(g + 1) * cog, :].T)
    return dense


def init_params(key, groups=2):
    chans = _GROUPS_MAPPER[groups]
    keys = iter(jax.random.split(key, 256))

    def nrm(shape, scale=0.1):
        return scale * jax.random.normal(next(keys), shape, jnp.float32)

    def make_block(inc, outc, stride):
        hidden = outc // 4
        outc2 = outc - inc if stride > 1 else outc
        src = _shuffle_src(hidden, 2)
        p1_grouped = nrm((hidden, inc // groups))          # PyTorch layout
        w1 = _grouped_dense(p1_grouped, inc, groups)[:, src]   # fold shuffle
        g1 = jnp.ones((hidden,), jnp.float32)[src].reshape(1, hidden)
        b1 = jnp.zeros((hidden,), jnp.float32)[src].reshape(1, hidden)
        dw = nrm((hidden, 3, 3))
        p2_grouped = nrm((outc2, hidden // 2))
        w2 = _grouped_dense(p2_grouped, hidden, 2)
        return {
            "w1": w1, "g1": g1, "b1": b1,
            "dw_w": dw.reshape(hidden, 9).T,               # (9, hidden)
            "g2": jnp.ones((1, hidden), jnp.float32),
            "b2": jnp.zeros((1, hidden), jnp.float32),
            "w2": w2,
            "g3": jnp.ones((1, outc2), jnp.float32),
            "b3": jnp.zeros((1, outc2), jnp.float32),
        }

    def make_stage(inc, outc, times):
        return [make_block(inc, outc, 2)] + [make_block(outc, outc, 1)
                                             for _ in range(times)]

    conv1 = nrm((24, 3, 3, 3))                             # (Cout, Cin, kh, kw)
    return {
        "conv1_w": jnp.transpose(conv1, (2, 3, 1, 0)),     # (kh, kw, Cin, Cout)
        "stage2": make_stage(24, chans[0], 3),
        "stage3": make_stage(chans[0], chans[1], 7),
        "stage4": make_stage(chans[1], chans[2], 3),
        "fc_w": nrm((chans[2], 1000), 0.05),               # stored as W^T
        "fc_b": jnp.zeros((1000,), jnp.float32),
    }


if __name__ == "__main__":
    key = jax.random.PRNGKey(0)
    pkey, xkey = jax.random.split(key)
    params = init_params(pkey, groups=2)
    x = jax.random.normal(xkey, (2, 3, 32, 32), jnp.float32)  # NCHW like PyTorch
    out = shufflenet_forward(x, params)
    out = jax.block_until_ready(out)
    assert out.shape == (2, 1000), out.shape
    print("KERNEL_OK")
</pallas_src>

<mosaic_0001>
module attributes {stable_mosaic.version = 11 : i64} {
  func.func @_stem_conv_kernel(%arg0: i32, %arg1: memref<1x4x17x17x3xf32, #tpu.memory_space<vmem>>, %arg2: memref<3x3x3x24xf32, #tpu.memory_space<vmem>>, %arg3: memref<1x16x16x24xf32, #tpu.memory_space<vmem>>) attributes {dimension_semantics = [#tpu.dimension_semantics<parallel>], iteration_bounds = array<i64: 2>, scalar_prefetch = 0 : i64, scratch_operands = 0 : i64, tpu.core_type = #tpu.core_type<tc>, window_params = [{transform_indices = @transform_0, window_bounds = array<i64: 1, 4, 17, 17, 3>}, {pipeline_mode = #tpu.pipeline_mode<synchronous>, transform_indices = @transform_1, window_bounds = array<i64: 3, 3, 3, 24>}, {transform_indices = @transform_2, window_bounds = array<i64: 1, 16, 16, 24>}]} {
    %c0 = arith.constant 0 : index
    %c0_0 = arith.constant 0 : index
    %c0_1 = arith.constant 0 : index
    %c0_2 = arith.constant 0 : index
    %c0_3 = arith.constant 0 : index
    %0 = vector.load %arg1[%c0, %c0_0, %c0_1, %c0_2, %c0_3] : memref<1x4x17x17x3xf32, #tpu.memory_space<vmem>>, vector<1x4x17x17x3xf32>
    %1 = vector.shape_cast %0 : vector<1x4x17x17x3xf32> to vector<4x17x17x3xf32>
    %c0_4 = arith.constant 0 : index
    %c0_5 = arith.constant 0 : index
    %c0_6 = arith.constant 0 : index
    %c0_7 = arith.constant 0 : index
    %2 = vector.load %arg2[%c0_4, %c0_5, %c0_6, %c0_7] : memref<3x3x3x24xf32, #tpu.memory_space<vmem>>, vector<3x3x3x24xf32>
    %cst = arith.constant 0.000000e+00 : f32
    %3 = vector.broadcast %cst : f32 to vector<16x16x24xf32>
    %4 = vector.extract_strided_slice %1 {offsets = [0, 0, 0, 0], sizes = [1, 17, 17, 3], strides = [1, 1, 1, 1]} : vector<4x17x17x3xf32> to vector<1x17x17x3xf32>
    %5 = vector.shape_cast %4 : vector<1x17x17x3xf32> to vector<17x17x3xf32>
    %6 = vector.extract_strided_slice %5 {offsets = [0, 0, 0], sizes = [16, 16, 3], strides = [1, 1, 1]} : vector<17x17x3xf32> to vector<16x16x3xf32>
    %7 = vector.extract_strided_slice %6 {offsets = [0, 0, 0], sizes = [16, 16, 1], strides = [1, 1, 1]} : vector<16x16x3xf32> to vector<16x16x1xf32>
    %8 = vector.extract_strided_slice %2 {offsets = [0, 0, 0, 0], sizes = [1, 1, 1, 24], strides = [1, 1, 1, 1]} : vector<3x3x3x24xf32> to vector<1x1x1x24xf32>
    %9 = vector.shape_cast %8 : vector<1x1x1x24xf32> to vector<24xf32>
    %10 = vector.shape_cast %9 : vector<24xf32> to vector<1x1x24xf32>
    %11 = vector.broadcast %7 : vector<16x16x1xf32> to vector<16x16x24xf32>
    %12 = vector.broadcast %10 : vector<1x1x24xf32> to vector<16x16x24xf32>
    %13 = arith.mulf %11, %12 : vector<16x16x24xf32>
    %14 = arith.addf %3, %13 : vector<16x16x24xf32>
    %15 = vector.extract_strided_slice %6 {offsets = [0, 0, 1], sizes = [16, 16, 1], strides = [1, 1, 1]} : vector<16x16x3xf32> to vector<16x16x1xf32>
    %16 = vector.extract_strided_slice %2 {offsets = [0, 0, 1, 0], sizes = [1, 1, 1, 24], strides = [1, 1, 1, 1]} : vector<3x3x3x24xf32> to vector<1x1x1x24xf32>
    %17 = vector.shape_cast %16 : vector<1x1x1x24xf32> to vector<24xf32>
    %18 = vector.shape_cast %17 : vector<24xf32> to vector<1x1x24xf32>
    %19 = vector.broadcast %15 : vector<16x16x1xf32> to vector<16x16x24xf32>
    %20 = vector.broadcast %18 : vector<1x1x24xf32> to vector<16x16x24xf32>
    %21 = arith.mulf %19, %20 : vector<16x16x24xf32>
    %22 = arith.addf %14, %21 : vector<16x16x24xf32>
    %23 = vector.extract_strided_slice %6 {offsets = [0, 0, 2], sizes = [16, 16, 1], strides = [1, 1, 1]} : vector<16x16x3xf32> to vector<16x16x1xf32>
    %24 = vector.extract_strided_slice %2 {offsets = [0, 0, 2, 0], sizes = [1, 1, 1, 24], strides = [1, 1, 1, 1]} : vector<3x3x3x24xf32> to vector<1x1x1x24xf32>
    %25 = vector.shape_cast %24 : vector<1x1x1x24xf32> to vector<24xf32>
    %26 = vector.shape_cast %25 : vector<24xf32> to vector<1x1x24xf32>
    %27 = vector.broadcast %23 : vector<16x16x1xf32> to vector<16x16x24xf32>
    %28 = vector.broadcast %26 : vector<1x1x24xf32> to vector<16x16x24xf32>
    %29 = arith.mulf %27, %28 : vector<16x16x24xf32>
    %30 = arith.addf %22, %29 : vector<16x16x24xf32>
    %31 = vector.extract_strided_slice %1 {offsets = [1, 0, 0, 0], sizes = [1, 17, 17, 3], strides = [1, 1, 1, 1]} : vector<4x17x17x3xf32> to vector<1x17x17x3xf32>
    %32 = vector.shape_cast %31 : vector<1x17x17x3xf32> to vector<17x17x3xf32>
    %33 = vector.extract_strided_slice %32 {offsets = [0, 0, 0], sizes = [16, 16, 3], strides = [1, 1, 1]} : vector<17x17x3xf32> to vector<16x16x3xf32>
    %34 = vector.extract_strided_slice %33 {offsets = [0, 0, 0], sizes = [16, 16, 1], strides = [1, 1, 1]} : vector<16x16x3xf32> to vector<16x16x1xf32>
    %35 = vector.extract_strided_slice %2 {offsets = [0, 1, 0, 0], sizes = [1, 1, 1, 24], strides = [1, 1, 1, 1]} : vector<3x3x3x24xf32> to vector<1x1x1x24xf32>
    %36 = vector.shape_cast %35 : vector<1x1x1x24xf32> to vector<24xf32>
    %37 = vector.shape_cast %36 : vector<24xf32> to vector<1x1x24xf32>
    %38 = vector.broadcast %34 : vector<16x16x1xf32> to vector<16x16x24xf32>
    %39 = vector.broadcast %37 : vector<1x1x24xf32> to vector<16x16x24xf32>
    %40 = arith.mulf %38, %39 : vector<16x16x24xf32>
    %41 = arith.addf %30, %40 : vector<16x16x24xf32>
    %42 = vector.extract_strided_slice %33 {offsets = [0, 0, 1], sizes = [16, 16, 1], strides = [1, 1, 1]} : vector<16x16x3xf32> to vector<16x16x1xf32>
    %43 = vector.extract_strided_slice %2 {offsets = [0, 1, 1, 0], sizes = [1, 1, 1, 24], strides = [1, 1, 1, 1]} : vector<3x3x3x24xf32> to vector<1x1x1x24xf32>
    %44 = vector.shape_cast %43 : vector<1x1x1x24xf32> to vector<24xf32>
    %45 = vector.shape_cast %44 : vector<24xf32> to vector<1x1x24xf32>
    %46 = vector.broadcast %42 : vector<16x16x1xf32> to vector<16x16x24xf32>
    %47 = vector.broadcast %45 : vector<1x1x24xf32> to vector<16x16x24xf32>
    %48 = arith.mulf %46, %47 : vector<16x16x24xf32>
    %49 = arith.addf %41, %48 : vector<16x16x24xf32>
    %50 = vector.extract_strided_slice %33 {offsets = [0, 0, 2], sizes = [16, 16, 1], strides = [1, 1, 1]} : vector<16x16x3xf32> to vector<16x16x1xf32>
    %51 = vector.extract_strided_slice %2 {offsets = [0, 1, 2, 0], sizes = [1, 1, 1, 24], strides = [1, 1, 1, 1]} : vector<3x3x3x24xf32> to vector<1x1x1x24xf32>
    %52 = vector.shape_cast %51 : vector<1x1x1x24xf32> to vector<24xf32>
    %53 = vector.shape_cast %52 : vector<24xf32> to vector<1x1x24xf32>
    %54 = vector.broadcast %50 : vector<16x16x1xf32> to vector<16x16x24xf32>
    %55 = vector.broadcast %53 : vector<1x1x24xf32> to vector<16x16x24xf32>
    %56 = arith.mulf %54, %55 : vector<16x16x24xf32>
    %57 = arith.addf %49, %56 : vector<16x16x24xf32>
    %58 = vector.extract_strided_slice %1 {offsets = [0, 0, 0, 0], sizes = [1, 17, 17, 3], strides = [1, 1, 1, 1]} : vector<4x17x17x3xf32> to vector<1x17x17x3xf32>
    %59 = vector.shape_cast %58 : vector<1x17x17x3xf32> to vector<17x17x3xf32>
    %60 = vector.extract_strided_slice %59 {offsets = [0, 1, 0], sizes = [16, 16, 3], strides = [1, 1, 1]} : vector<17x17x3xf32> to vector<16x16x3xf32>
    %61 = vector.extract_strided_slice %60 {offsets = [0, 0, 0], sizes = [16, 16, 1], strides = [1, 1, 1]} : vector<16x16x3xf32> to vector<16x16x1xf32>
    %62 = vector.extract_strided_slice %2 {offsets = [0, 2, 0, 0], sizes = [1, 1, 1, 24], strides = [1, 1, 1, 1]} : vector<3x3x3x24xf32> to vector<1x1x1x24xf32>
    %63 = vector.shape_cast %62 : vector<1x1x1x24xf32> to vector<24xf32>
    %64 = vector.shape_cast %63 : vector<24xf32> to vector<1x1x24xf32>
    %65 = vector.broadcast %61 : vector<16x16x1xf32> to vector<16x16x24xf32>
    %66 = vector.broadcast %64 : vector<1x1x24xf32> to vector<16x16x24xf32>
    %67 = arith.mulf %65, %66 : vector<16x16x24xf32>
    %68 = arith.addf %57, %67 : vector<16x16x24xf32>
    %69 = vector.extract_strided_slice %60 {offsets = [0, 0, 1], sizes = [16, 16, 1], strides = [1, 1, 1]} : vector<16x16x3xf32> to vector<16x16x1xf32>
    %70 = vector.extract_strided_slice %2 {offsets = [0, 2, 1, 0], sizes = [1, 1, 1, 24], strides = [1, 1, 1, 1]} : vector<3x3x3x24xf32> to vector<1x1x1x24xf32>
    %71 = vector.shape_cast %70 : vector<1x1x1x24xf32> to vector<24xf32>
    %72 = vector.shape_cast %71 : vector<24xf32> to vector<1x1x24xf32>
    %73 = vector.broadcast %69 : vector<16x16x1xf32> to vector<16x16x24xf32>
    %74 = vector.broadcast %72 : vector<1x1x24xf32> to vector<16x16x24xf32>
    %75 = arith.mulf %73, %74 : vector<16x16x24xf32>
    %76 = arith.addf %68, %75 : vector<16x16x24xf32>
    %77 = vector.extract_strided_slice %60 {offsets = [0, 0, 2], sizes = [16, 16, 1], strides = [1, 1, 1]} : vector<16x16x3xf32> to vector<16x16x1xf32>
    %78 = vector.extract_strided_slice %2 {offsets = [0, 2, 2, 0], sizes = [1, 1, 1, 24], strides = [1, 1, 1, 1]} : vector<3x3x3x24xf32> to vector<1x1x1x24xf32>
    %79 = vector.shape_cast %78 : vector<1x1x1x24xf32> to vector<24xf32>
    %80 = vector.shape_cast %79 : vector<24xf32> to vector<1x1x24xf32>
    %81 = vector.broadcast %77 : vector<16x16x1xf32> to vector<16x16x24xf32>
    %82 = vector.broadcast %80 : vector<1x1x24xf32> to vector<16x16x24xf32>
    %83 = arith.mulf %81, %82 : vector<16x16x24xf32>
    %84 = arith.addf %76, %83 : vector<16x16x24xf32>
    %85 = vector.extract_strided_slice %1 {offsets = [2, 0, 0, 0], sizes = [1, 17, 17, 3], strides = [1, 1, 1, 1]} : vector<4x17x17x3xf32> to vector<1x17x17x3xf32>
    %86 = vector.shape_cast %85 : vector<1x17x17x3xf32> to vector<17x17x3xf32>
    %87 = vector.extract_strided_slice %86 {offsets = [0, 0, 0], sizes = [16, 16, 3], strides = [1, 1, 1]} : vector<17x17x3xf32> to vector<16x16x3xf32>
    %88 = vector.extract_strided_slice %87 {offsets = [0, 0, 0], sizes = [16, 16, 1], strides = [1, 1, 1]} : vector<16x16x3xf32> to vector<16x16x1xf32>
    %89 = vector.extract_strided_slice %2 {offsets = [1, 0, 0, 0], sizes = [1, 1, 1, 24], strides = [1, 1, 1, 1]} : vector<3x3x3x24xf32> to vector<1x1x1x24xf32>
    %90 = vector.shape_cast %89 : vector<1x1x1x24xf32> to vector<24xf32>
    %91 = vector.shape_cast %90 : vector<24xf32> to vector<1x1x24xf32>
    %92 = vector.broadcast %88 : vector<16x16x1xf32> to vector<16x16x24xf32>
    %93 = vector.broadcast %91 : vector<1x1x24xf32> to vector<16x16x24xf32>
    %94 = arith.mulf %92, %93 : vector<16x16x24xf32>
    %95 = arith.addf %84, %94 : vector<16x16x24xf32>
    %96 = vector.extract_strided_slice %87 {offsets = [0, 0, 1], sizes = [16, 16, 1], strides = [1, 1, 1]} : vector<16x16x3xf32> to vector<16x16x1xf32>
    %97 = vector.extract_strided_slice %2 {offsets = [1, 0, 1, 0], sizes = [1, 1, 1, 24], strides = [1, 1, 1, 1]} : vector<3x3x3x24xf32> to vector<1x1x1x24xf32>
    %98 = vector.shape_cast %97 : vector<1x1x1x24xf32> to vector<24xf32>
    %99 = vector.shape_cast %98 : vector<24xf32> to vector<1x1x24xf32>
    %100 = vector.broadcast %96 : vector<16x16x1xf32> to vector<16x16x24xf32>
    %101 = vector.broadcast %99 : vector<1x1x24xf32> to vector<16x16x24xf32>
    %102 = arith.mulf %100, %101 : vector<16x16x24xf32>
    %103 = arith.addf %95, %102 : vector<16x16x24xf32>
    %104 = vector.extract_strided_slice %87 {offsets = [0, 0, 2], sizes = [16, 16, 1], strides = [1, 1, 1]} : vector<16x16x3xf32> to vector<16x16x1xf32>
    %105 = vector.extract_strided_slice %2 {offsets = [1, 0, 2, 0], sizes = [1, 1, 1, 24], strides = [1, 1, 1, 1]} : vector<3x3x3x24xf32> to vector<1x1x1x24xf32>
    %106 = vector.shape_cast %105 : vector<1x1x1x24xf32> to vector<24xf32>
    %107 = vector.shape_cast %106 : vector<24xf32> to vector<1x1x24xf32>
    %108 = vector.broadcast %104 : vector<16x16x1xf32> to vector<16x16x24xf32>
    %109 = vector.broadcast %107 : vector<1x1x24xf32> to vector<16x16x24xf32>
    %110 = arith.mulf %108, %109 : vector<16x16x24xf32>
    %111 = arith.addf %103, %110 : vector<16x16x24xf32>
    %112 = vector.extract_strided_slice %1 {offsets = [3, 0, 0, 0], sizes = [1, 17, 17, 3], strides = [1, 1, 1, 1]} : vector<4x17x17x3xf32> to vector<1x17x17x3xf32>
    %113 = vector.shape_cast %112 : vector<1x17x17x3xf32> to vector<17x17x3xf32>
    %114 = vector.extract_strided_slice %113 {offsets = [0, 0, 0], sizes = [16, 16, 3], strides = [1, 1, 1]} : vector<17x17x3xf32> to vector<16x16x3xf32>
    %115 = vector.extract_strided_slice %114 {offsets = [0, 0, 0], sizes = [16, 16, 1], strides = [1, 1, 1]} : vector<16x16x3xf32> to vector<16x16x1xf32>
    %116 = vector.extract_strided_slice %2 {offsets = [1, 1, 0, 0], sizes = [1, 1, 1, 24], strides = [1, 1, 1, 1]} : vector<3x3x3x24xf32> to vector<1x1x1x24xf32>
    %117 = vector.shape_cast %116 : vector<1x1x1x24xf32> to vector<24xf32>
    %118 = vector.shape_cast %117 : vector<24xf32> to vector<1x1x24xf32>
    %119 = vector.broadcast %115 : vector<16x16x1xf32> to vector<16x16x24xf32>
    %120 = vector.broadcast %118 : vector<1x1x24xf32> to vector<16x16x24xf32>
    %121 = arith.mulf %119, %120 : vector<16x16x24xf32>
    %122 = arith.addf %111, %121 : vector<16x16x24xf32>
    %123 = vector.extract_strided_slice %114 {offsets = [0, 0, 1], sizes = [16, 16, 1], strides = [1, 1, 1]} : vector<16x16x3xf32> to vector<16x16x1xf32>
    %124 = vector.extract_strided_slice %2 {offsets = [1, 1, 1, 0], sizes = [1, 1, 1, 24], strides = [1, 1, 1, 1]} : vector<3x3x3x24xf32> to vector<1x1x1x24xf32>
    %125 = vector.shape_cast %124 : vector<1x1x1x24xf32> to vector<24xf32>
    %126 = vector.shape_cast %125 : vector<24xf32> to vector<1x1x24xf32>
    %127 = vector.broadcast %123 : vector<16x16x1xf32> to vector<16x16x24xf32>
    %128 = vector.broadcast %126 : vector<1x1x24xf32> to vector<16x16x24xf32>
    %129 = arith.mulf %127, %128 : vector<16x16x24xf32>
    %130 = arith.addf %122, %129 : vector<16x16x24xf32>
    %131 = vector.extract_strided_slice %114 {offsets = [0, 0, 2], sizes = [16, 16, 1], strides = [1, 1, 1]} : vector<16x16x3xf32> to vector<16x16x1xf32>
    %132 = vector.extract_strided_slice %2 {offsets = [1, 1, 2, 0], sizes = [1, 1, 1, 24], strides = [1, 1, 1, 1]} : vector<3x3x3x24xf32> to vector<1x1x1x24xf32>
    %133 = vector.shape_cast %132 : vector<1x1x1x24xf32> to vector<24xf32>
    %134 = vector.shape_cast %133 : vector<24xf32> to vector<1x1x24xf32>
    %135 = vector.broadcast %131 : vector<16x16x1xf32> to vector<16x16x24xf32>
    %136 = vector.broadcast %134 : vector<1x1x24xf32> to vector<16x16x24xf32>
    %137 = arith.mulf %135, %136 : vector<16x16x24xf32>
    %138 = arith.addf %130, %137 : vector<16x16x24xf32>
    %139 = vector.extract_strided_slice %1 {offsets = [2, 0, 0, 0], sizes = [1, 17, 17, 3], strides = [1, 1, 1, 1]} : vector<4x17x17x3xf32> to vector<1x17x17x3xf32>
    %140 = vector.shape_cast %139 : vector<1x17x17x3xf32> to vector<17x17x3xf32>
    %141 = vector.extract_strided_slice %140 {offsets = [0, 1, 0], sizes = [16, 16, 3], strides = [1, 1, 1]} : vector<17x17x3xf32> to vector<16x16x3xf32>
    %142 = vector.extract_strided_slice %141 {offsets = [0, 0, 0], sizes = [16, 16, 1], strides = [1, 1, 1]} : vector<16x16x3xf32> to vector<16x16x1xf32>
    %143 = vector.extract_strided_slice %2 {offsets = [1, 2, 0, 0], sizes = [1, 1, 1, 24], strides = [1, 1, 1, 1]} : vector<3x3x3x24xf32> to vector<1x1x1x24xf32>
    %144 = vector.shape_cast %143 : vector<1x1x1x24xf32> to vector<24xf32>
    %145 = vector.shape_cast %144 : vector<24xf32> to vector<1x1x24xf32>
    %146 = vector.broadcast %142 : vector<16x16x1xf32> to vector<16x16x24xf32>
    %147 = vector.broadcast %145 : vector<1x1x24xf32> to vector<16x16x24xf32>
    %148 = arith.mulf %146, %147 : vector<16x16x24xf32>
    %149 = arith.addf %138, %148 : vector<16x16x24xf32>
    %150 = vector.extract_strided_slice %141 {offsets = [0, 0, 1], sizes = [16, 16, 1], strides = [1, 1, 1]} : vector<16x16x3xf32> to vector<16x16x1xf32>
    %151 = vector.extract_strided_slice %2 {offsets = [1, 2, 1, 0], sizes = [1, 1, 1, 24], strides = [1, 1, 1, 1]} : vector<3x3x3x24xf32> to vector<1x1x1x24xf32>
    %152 = vector.shape_cast %151 : vector<1x1x1x24xf32> to vector<24xf32>
    %153 = vector.shape_cast %152 : vector<24xf32> to vector<1x1x24xf32>
    %154 = vector.broadcast %150 : vector<16x16x1xf32> to vector<16x16x24xf32>
    %155 = vector.broadcast %153 : vector<1x1x24xf32> to vector<16x16x24xf32>
    %156 = arith.mulf %154, %155 : vector<16x16x24xf32>
    %157 = arith.addf %149, %156 : vector<16x16x24xf32>
    %158 = vector.extract_strided_slice %141 {offsets = [0, 0, 2], sizes = [16, 16, 1], strides = [1, 1, 1]} : vector<16x16x3xf32> to vector<16x16x1xf32>
    %159 = vector.extract_strided_slice %2 {offsets = [1, 2, 2, 0], sizes = [1, 1, 1, 24], strides = [1, 1, 1, 1]} : vector<3x3x3x24xf32> to vector<1x1x1x24xf32>
    %160 = vector.shape_cast %159 : vector<1x1x1x24xf32> to vector<24xf32>
    %161 = vector.shape_cast %160 : vector<24xf32> to vector<1x1x24xf32>
    %162 = vector.broadcast %158 : vector<16x16x1xf32> to vector<16x16x24xf32>
    %163 = vector.broadcast %161 : vector<1x1x24xf32> to vector<16x16x24xf32>
    %164 = arith.mulf %162, %163 : vector<16x16x24xf32>
    %165 = arith.addf %157, %164 : vector<16x16x24xf32>
    %166 = vector.extract_strided_slice %1 {offsets = [0, 0, 0, 0], sizes = [1, 17, 17, 3], strides = [1, 1, 1, 1]} : vector<4x17x17x3xf32> to vector<1x17x17x3xf32>
    %167 = vector.shape_cast %166 : vector<1x17x17x3xf32> to vector<17x17x3xf32>
    %168 = vector.extract_strided_slice %167 {offsets = [1, 0, 0], sizes = [16, 16, 3], strides = [1, 1, 1]} : vector<17x17x3xf32> to vector<16x16x3xf32>
    %169 = vector.extract_strided_slice %168 {offsets = [0, 0, 0], sizes = [16, 16, 1], strides = [1, 1, 1]} : vector<16x16x3xf32> to vector<16x16x1xf32>
    %170 = vector.extract_strided_slice %2 {offsets = [2, 0, 0, 0], sizes = [1, 1, 1, 24], strides = [1, 1, 1, 1]} : vector<3x3x3x24xf32> to vector<1x1x1x24xf32>
    %171 = vector.shape_cast %170 : vector<1x1x1x24xf32> to vector<24xf32>
    %172 = vector.shape_cast %171 : vector<24xf32> to vector<1x1x24xf32>
    %173 = vector.broadcast %169 : vector<16x16x1xf32> to vector<16x16x24xf32>
    %174 = vector.broadcast %172 : vector<1x1x24xf32> to vector<16x16x24xf32>
    %175 = arith.mulf %173, %174 : vector<16x16x24xf32>
    %176 = arith.addf %165, %175 : vector<16x16x24xf32>
    %177 = vector.extract_strided_slice %168 {offsets = [0, 0, 1], sizes = [16, 16, 1], strides = [1, 1, 1]} : vector<16x16x3xf32> to vector<16x16x1xf32>
    %178 = vector.extract_strided_slice %2 {offsets = [2, 0, 1, 0], sizes = [1, 1, 1, 24], strides = [1, 1, 1, 1]} : vector<3x3x3x24xf32> to vector<1x1x1x24xf32>
    %179 = vector.shape_cast %178 : vector<1x1x1x24xf32> to vector<24xf32>
    %180 = vector.shape_cast %179 : vector<24xf32> to vector<1x1x24xf32>
    %181 = vector.broadcast %177 : vector<16x16x1xf32> to vector<16x16x24xf32>
    %182 = vector.broadcast %180 : vector<1x1x24xf32> to vector<16x16x24xf32>
    %183 = arith.mulf %181, %182 : vector<16x16x24xf32>
    %184 = arith.addf %176, %183 : vector<16x16x24xf32>
    %185 = vector.extract_strided_slice %168 {offsets = [0, 0, 2], sizes = [16, 16, 1], strides = [1, 1, 1]} : vector<16x16x3xf32> to vector<16x16x1xf32>
    %186 = vector.extract_strided_slice %2 {offsets = [2, 0, 2, 0], sizes = [1, 1, 1, 24], strides = [1, 1, 1, 1]} : vector<3x3x3x24xf32> to vector<1x1x1x24xf32>
    %187 = vector.shape_cast %186 : vector<1x1x1x24xf32> to vector<24xf32>
    %188 = vector.shape_cast %187 : vector<24xf32> to vector<1x1x24xf32>
    %189 = vector.broadcast %185 : vector<16x16x1xf32> to vector<16x16x24xf32>
    %190 = vector.broadcast %188 : vector<1x1x24xf32> to vector<16x16x24xf32>
    %191 = arith.mulf %189, %190 : vector<16x16x24xf32>
    %192 = arith.addf %184, %191 : vector<16x16x24xf32>
    %193 = vector.extract_strided_slice %1 {offsets = [1, 0, 0, 0], sizes = [1, 17, 17, 3], strides = [1, 1, 1, 1]} : vector<4x17x17x3xf32> to vector<1x17x17x3xf32>
    %194 = vector.shape_cast %193 : vector<1x17x17x3xf32> to vector<17x17x3xf32>
    %195 = vector.extract_strided_slice %194 {offsets = [1, 0, 0], sizes = [16, 16, 3], strides = [1, 1, 1]} : vector<17x17x3xf32> to vector<16x16x3xf32>
    %196 = vector.extract_strided_slice %195 {offsets = [0, 0, 0], sizes = [16, 16, 1], strides = [1, 1, 1]} : vector<16x16x3xf32> to vector<16x16x1xf32>
    %197 = vector.extract_strided_slice %2 {offsets = [2, 1, 0, 0], sizes = [1, 1, 1, 24], strides = [1, 1, 1, 1]} : vector<3x3x3x24xf32> to vector<1x1x1x24xf32>
    %198 = vector.shape_cast %197 : vector<1x1x1x24xf32> to vector<24xf32>
    %199 = vector.shape_cast %198 : vector<24xf32> to vector<1x1x24xf32>
    %200 = vector.broadcast %196 : vector<16x16x1xf32> to vector<16x16x24xf32>
    %201 = vector.broadcast %199 : vector<1x1x24xf32> to vector<16x16x24xf32>
    %202 = arith.mulf %200, %201 : vector<16x16x24xf32>
    %203 = arith.addf %192, %202 : vector<16x16x24xf32>
    %204 = vector.extract_strided_slice %195 {offsets = [0, 0, 1], sizes = [16, 16, 1], strides = [1, 1, 1]} : vector<16x16x3xf32> to vector<16x16x1xf32>
    %205 = vector.extract_strided_slice %2 {offsets = [2, 1, 1, 0], sizes = [1, 1, 1, 24], strides = [1, 1, 1, 1]} : vector<3x3x3x24xf32> to vector<1x1x1x24xf32>
    %206 = vector.shape_cast %205 : vector<1x1x1x24xf32> to vector<24xf32>
    %207 = vector.shape_cast %206 : vector<24xf32> to vector<1x1x24xf32>
    %208 = vector.broadcast %204 : vector<16x16x1xf32> to vector<16x16x24xf32>
    %209 = vector.broadcast %207 : vector<1x1x24xf32> to vector<16x16x24xf32>
    %210 = arith.mulf %208, %209 : vector<16x16x24xf32>
    %211 = arith.addf %203, %210 : vector<16x16x24xf32>
    %212 = vector.extract_strided_slice %195 {offsets = [0, 0, 2], sizes = [16, 16, 1], strides = [1, 1, 1]} : vector<16x16x3xf32> to vector<16x16x1xf32>
    %213 = vector.extract_strided_slice %2 {offsets = [2, 1, 2, 0], sizes = [1, 1, 1, 24], strides = [1, 1, 1, 1]} : vector<3x3x3x24xf32> to vector<1x1x1x24xf32>
    %214 = vector.shape_cast %213 : vector<1x1x1x24xf32> to vector<24xf32>
    %215 = vector.shape_cast %214 : vector<24xf32> to vector<1x1x24xf32>
    %216 = vector.broadcast %212 : vector<16x16x1xf32> to vector<16x16x24xf32>
    %217 = vector.broadcast %215 : vector<1x1x24xf32> to vector<16x16x24xf32>
    %218 = arith.mulf %216, %217 : vector<16x16x24xf32>
    %219 = arith.addf %211, %218 : vector<16x16x24xf32>
    %220 = vector.extract_strided_slice %1 {offsets = [0, 0, 0, 0], sizes = [1, 17, 17, 3], strides = [1, 1, 1, 1]} : vector<4x17x17x3xf32> to vector<1x17x17x3xf32>
    %221 = vector.shape_cast %220 : vector<1x17x17x3xf32> to vector<17x17x3xf32>
    %222 = vector.extract_strided_slice %221 {offsets = [1, 1, 0], sizes = [16, 16, 3], strides = [1, 1, 1]} : vector<17x17x3xf32> to vector<16x16x3xf32>
    %223 = vector.extract_strided_slice %222 {offsets = [0, 0, 0], sizes = [16, 16, 1], strides = [1, 1, 1]} : vector<16x16x3xf32> to vector<16x16x1xf32>
    %224 = vector.extract_strided_slice %2 {offsets = [2, 2, 0, 0], sizes = [1, 1, 1, 24], strides = [1, 1, 1, 1]} : vector<3x3x3x24xf32> to vector<1x1x1x24xf32>
    %225 = vector.shape_cast %224 : vector<1x1x1x24xf32> to vector<24xf32>
    %226 = vector.shape_cast %225 : vector<24xf32> to vector<1x1x24xf32>
    %227 = vector.broadcast %223 : vector<16x16x1xf32> to vector<16x16x24xf32>
    %228 = vector.broadcast %226 : vector<1x1x24xf32> to vector<16x16x24xf32>
    %229 = arith.mulf %227, %228 : vector<16x16x24xf32>
    %230 = arith.addf %219, %229 : vector<16x16x24xf32>
    %231 = vector.extract_strided_slice %222 {offsets = [0, 0, 1], sizes = [16, 16, 1], strides = [1, 1, 1]} : vector<16x16x3xf32> to vector<16x16x1xf32>
    %232 = vector.extract_strided_slice %2 {offsets = [2, 2, 1, 0], sizes = [1, 1, 1, 24], strides = [1, 1, 1, 1]} : vector<3x3x3x24xf32> to vector<1x1x1x24xf32>
    %233 = vector.shape_cast %232 : vector<1x1x1x24xf32> to vector<24xf32>
    %234 = vector.shape_cast %233 : vector<24xf32> to vector<1x1x24xf32>
    %235 = vector.broadcast %231 : vector<16x16x1xf32> to vector<16x16x24xf32>
    %236 = vector.broadcast %234 : vector<1x1x24xf32> to vector<16x16x24xf32>
    %237 = arith.mulf %235, %236 : vector<16x16x24xf32>
    %238 = arith.addf %230, %237 : vector<16x16x24xf32>
    %239 = vector.extract_strided_slice %222 {offsets = [0, 0, 2], sizes = [16, 16, 1], strides = [1, 1, 1]} : vector<16x16x3xf32> to vector<16x16x1xf32>
    %240 = vector.extract_strided_slice %2 {offsets = [2, 2, 2, 0], sizes = [1, 1, 1, 24], strides = [1, 1, 1, 1]} : vector<3x3x3x24xf32> to vector<1x1x1x24xf32>
    %241 = vector.shape_cast %240 : vector<1x1x1x24xf32> to vector<24xf32>
    %242 = vector.shape_cast %241 : vector<24xf32> to vector<1x1x24xf32>
    %243 = vector.broadcast %239 : vector<16x16x1xf32> to vector<16x16x24xf32>
    %244 = vector.broadcast %242 : vector<1x1x24xf32> to vector<16x16x24xf32>
    %245 = arith.mulf %243, %244 : vector<16x16x24xf32>
    %246 = arith.addf %238, %245 : vector<16x16x24xf32>
    %c0_8 = arith.constant 0 : index
    %c0_9 = arith.constant 0 : index
    %c0_10 = arith.constant 0 : index
    %c0_11 = arith.constant 0 : index
    %247 = vector.load %arg3[%c0_8, %c0_9, %c0_10, %c0_11] : memref<1x16x16x24xf32, #tpu.memory_space<vmem>>, vector<1x16x16x24xf32>
    %248 = vector.shape_cast %247 : vector<1x16x16x24xf32> to vector<16x16x24xf32>
    %249 = vector.shape_cast %246 : vector<16x16x24xf32> to vector<1x16x16x24xf32>
    tpu.vector_store %arg3[%c0_8, %c0_9, %c0_10, %c0_11], %249 {strides = array<i32>} : memref<1x16x16x24xf32, #tpu.memory_space<vmem>>, vector<1x16x16x24xf32>,
    return
  }
  func.func @transform_0(%arg0: i32) -> (i32, i32, i32, i32, i32) {
    %c0_i32 = arith.constant 0 : i32
    %c0_i32_0 = arith.constant 0 : i32
    %c0_i32_1 = arith.constant 0 : i32
    %c0_i32_2 = arith.constant 0 : i32
    %c0_i32_3 = arith.constant 0 : i32
    return %arg0, %c0_i32, %c0_i32_0, %c0_i32_1, %c0_i32_2 : i32, i32, i32, i32, i32
  }
  func.func @transform_1(%arg0: i32) -> (i32, i32, i32, i32) {
    %c0_i32 = arith.constant 0 : i32
    %c0_i32_0 = arith.constant 0 : i32
    %c0_i32_1 = arith.constant 0 : i32
    %c0_i32_2 = arith.constant 0 : i32
    %c0_i32_3 = arith.constant 0 : i32
    return %c0_i32, %c0_i32_0, %c0_i32_1, %c0_i32_2 : i32, i32, i32, i32
  }
  func.func @transform_2(%arg0: i32) -> (i32, i32, i32, i32) {
    %c0_i32 = arith.constant 0 : i32
    %c0_i32_0 = arith.constant 0 : i32
    %c0_i32_1 = arith.constant 0 : i32
    %c0_i32_2 = arith.constant 0 : i32
    return %arg0, %c0_i32, %c0_i32_0, %c0_i32_1 : i32, i32, i32, i32
  }
}

</mosaic_0001>

<llo_original>
// kernel: stem_conv_s2.1
$region0: #{stem_conv_s2.1}
  #allocation0 [shape = 'u32[]', space=smem, size = 0x4, offset = 0x4, fixed_abs, tag = 'smem constant byte address 0x4 - core index']
  #allocation1 [shape = 'u32[144,128]{1,0:T(1,128)}', space=vmem, size = 0x12000, scoped, tag = 'internal scratch']
  %s0 = inlined_call_operand.vmem [shape: f32[2,4,17,17,3], index: 0, kind: input, shape index: {}]
  %s1 = inlined_call_operand.vmem [shape: f32[3,3,3,24], index: 1, kind: input, shape index: {}]
  %s2 = inlined_call_operand.hbm [shape: f32[2,16,16,24], index: 2, kind: output, shape index: {}]
  %s3 = sld [smem:[#allocation0]]
  $region41: #{stem_conv_s2.1} parent=0
    _
  %s5 = ssub.s32 1, %s3
  %s6 = scalar_select 0, %s5, %s3
  $region1: #{stem_conv_s2.1} parent=0
    #allocation2 [shape = 'u8[262144]{0}', space=vmem, size = 0x40000, scoped, tag = 'output window, operand 0']
    #allocation3 [shape = 's32[2]{0}', space=sflag, size = 0x8, scoped, tag = 'scoped memory for stem_conv_s2.1']
    %7 = vsyncpa [#allocation3], 0
    %s8 = scalar_lea.sflag [#allocation3], 1
    %9 = vsyncpa %s8, 0
    loop: start=0, step=1, limit=4
    $region2: #{stem_conv_s2.1} parent=1 // loop_pre_header
      _
    $region3: #{stem_conv_s2.1} parent=1 // loop_header
      %s11 = sphi 0, %s15
      %p12 = scmp.ge.s32.totalorder %s11, 4
      %s21 = sphi 0, %s23
      %s24 = sphi 0, %s21
      %s25 = sphi 0, %s24
      %s41 = sphi 0, %s25
      %s45 = sphi 0, %s45
      %s47 = sphi 0, %s45
      %s48 = sphi 0, %s47
      %s62 = sphi 0, %s48
      %s68 = sphi 0, %s70
      %s71 = sphi 0, %s68
      %s72 = sphi 0, %s71
      %s88 = sphi 0, %s72
    $region4: #{stem_conv_s2.1} parent=1 // loop_header_branch
      %14 = sbr.rel (%p12) target = $region8
    $region5: #{stem_conv_s2.1} parent=1 // loop_body
      %s16 = ssub.s32 %s11, 1
      %s17 = ssub.s32 %s11, 2
      %s18 = sadd.s32 %s11, 1
      %s19 = ssub.s32 %s11, %s18
      %p20 = scmp.eq.s32.totalorder %s19, 0
      %s22 = sadd.s32 %s21, 1
      %s23 = scalar_select %p20, %s21, %s22
      %p26 = pneg %p20
      %p27 = scmp.eq.s32.totalorder %s11, 1
      %p28 = por %p26, %p27
      %p29 = scmp.ne.s32.totalorder %s21, %s24
      %p30 = scmp.eq.s32.totalorder %s11, 0
      %p31 = por %p29, %p30
      %p32 = scmp.ne.s32.totalorder %s21, %s24
      %p33 = scmp.eq.s32.totalorder %s16, 1
      %p34 = por %p32, %p33
      %p35 = scmp.ne.s32.totalorder %s24, %s25
      %p36 = scmp.eq.s32.totalorder %s16, 0
      %p37 = por %p35, %p36
      %p38 = scmp.ne.s32.totalorder %s24, %s25
      %p39 = scmp.eq.s32.totalorder %s17, 1
      %p40 = por %p38, %p39
      %p42 = scmp.ne.s32.totalorder %s25, %s41
      %p43 = scmp.eq.s32.totalorder %s17, 0
      %p44 = por %p42, %p43
      %s46 = sadd.s32 %s45, 1
      %p49 = scmp.eq.s32.totalorder %s11, 1
      %p50 = scmp.ne.s32.totalorder %s45, %s47
      %p51 = scmp.eq.s32.totalorder %s11, 0
      %p52 = por %p50, %p51
      %p53 = scmp.ne.s32.totalorder %s45, %s47
      %p54 = scmp.eq.s32.totalorder %s16, 1
      %p55 = por %p53, %p54
      %p56 = scmp.ne.s32.totalorder %s47, %s48
      %p57 = scmp.eq.s32.totalorder %s16, 0
      %p58 = por %p56, %p57
      %p59 = scmp.ne.s32.totalorder %s47, %s48
      %p60 = scmp.eq.s32.totalorder %s17, 1
      %p61 = por %p59, %p60
      %p63 = scmp.ne.s32.totalorder %s48, %s62
      %p64 = scmp.eq.s32.totalorder %s17, 0
      %p65 = por %p63, %p64
      %s66 = ssub.s32 %s11, %s18
      %p67 = scmp.eq.s32.totalorder %s66, 0
      %s69 = sadd.s32 %s68, 1
      %s70 = scalar_select %p67, %s68, %s69
      %p73 = pneg %p67
      %p74 = scmp.eq.s32.totalorder %s11, 1
      %p75 = por %p73, %p74
      %p76 = scmp.ne.s32.totalorder %s68, %s71
      %p77 = scmp.eq.s32.totalorder %s11, 0
      %p78 = por %p76, %p77
      %p79 = scmp.ne.s32.totalorder %s68, %s71
      %p80 = scmp.eq.s32.totalorder %s16, 1
      %p81 = por %p79, %p80
      %p82 = scmp.ne.s32.totalorder %s71, %s72
      %p83 = scmp.eq.s32.totalorder %s16, 0
      %p84 = por %p82, %p83
      %p85 = scmp.ne.s32.totalorder %s71, %s72
      %p86 = scmp.eq.s32.totalorder %s17, 1
      %p87 = por %p85, %p86
      %p89 = scmp.ne.s32.totalorder %s72, %s88
      %p90 = scmp.eq.s32.totalorder %s17, 0
      %p91 = por %p89, %p90
      %p92 = scmp.le.s32.totalorder 1, %s11
      %p93 = scmp.lt.s32.totalorder %s11, 3
      %p94 = pnand %p92, %p93
      %p95 = pneg %p94
      // Predicated region
      $region9: #{stem_conv_s2.1} parent=5 // pred_check
        _
      $region10: #{stem_conv_s2.1} parent=5 // pred_check_branch
        %97 = sbr.rel (%p94) target = $region12
      $region11: #{stem_conv_s2.1} parent=5 // pred_region
        %s98 = ssub.s32 %s11, 1
        // Predicated region
        $region13: #{stem_conv_s2.1} parent=11 // pred_check
          %p99 = pneg %p58
        $region14: #{stem_conv_s2.1} parent=11 // pred_check_branch
          %101 = sbr.rel (%p99) target = $region16
        $region15: #{stem_conv_s2.1} parent=11 // pred_region
          _
        $region16: #{stem_conv_s2.1} parent=11 // pred_fallthru
          _
      $region12: #{stem_conv_s2.1} parent=5 // pred_fallthru
        _
      %p102 = scmp.lt.s32.totalorder %s11, 2
      // Predicated region
      $region17: #{stem_conv_s2.1} parent=5 // pred_check
        %p103 = pneg %p102
      $region18: #{stem_conv_s2.1} parent=5 // pred_check_branch
        %105 = sbr.rel (%p103) target = $region20
      $region19: #{stem_conv_s2.1} parent=5 // pred_region
        // Predicated region
        $region21: #{stem_conv_s2.1} parent=19 // pred_check
          %p106 = pneg %p31
        $region22: #{stem_conv_s2.1} parent=19 // pred_check_branch
          %108 = sbr.rel (%p106) target = $region24
        $region23: #{stem_conv_s2.1} parent=19 // pred_region
          %p109 = scmp.lt.s32.totalorder %s11, 1
          %s110 = scalar_select %p109, %s11, 1
          %s111 = smul.addr %s110, 204
          %s112 = smul.addr %s111, 8
          %s113 = scalar_lea.vmem %s0, %s112
        $region24: #{stem_conv_s2.1} parent=19 // pred_fallthru
          _
      $region20: #{stem_conv_s2.1} parent=5 // pred_fallthru
        _
      %p114 = scmp.le.s32.totalorder 1, %s11
      %p115 = scmp.lt.s32.totalorder %s11, 3
      %p116 = pnand %p114, %p115
      %p117 = pneg %p116
      // Predicated region
      $region25: #{stem_conv_s2.1} parent=5 // pred_check
        _
      $region26: #{stem_conv_s2.1} parent=5 // pred_check_branch
        %119 = sbr.rel (%p116) target = $region28
      $region27: #{stem_conv_s2.1} parent=5 // pred_region
        %s120 = ssub.s32 %s11, 1
        %p121 = scmp.lt.s32.totalorder %s16, 1
        %s122 = scalar_select %p121, %s16, 1
        %s123 = smul.addr %s122, 204
        %s124 = smul.addr %s123, 8
        %s125 = scalar_lea.vmem %s0, %s124
        %p126 = pneg %p37
        %p127 = pneg %p34
        %p128 = pneg %p58
        %p129 = pneg %p55
        %p130 = pneg %p84
        %p131 = pneg %p81
        %s132 = sand.u32 %s71, 1
        %s133 = scalar_lea.sflag [#allocation3], %s132
        %s134 = sand.u32 %s71, 1
        %s135 = smul.addr %s134, 256
        %s136 = scalar_lea.vmem [#allocation2], %s135
        %p137 = scmp.lt.s32.totalorder %s16, 1
        %s138 = scalar_select %p137, %s16, 1
        %s139 = smul.addr %s138, 204
        %s140 = smul.addr %s139, 8
        %s141 = scalar_lea.vmem %s0, %s140
        %v142 = vld [vmem:[%s141] sm:$0xff]
        %v143 = vld [vmem:[%s141 + $0x8] sm:$0xff]
        %v144 = vld [vmem:[%s141 + $0x10] sm:$0x1]
        %v145 = vld [vmem:[%s141 + $0x18] sm:$0xff]
        %v146 = vld [vmem:[%s141 + $0x20] sm:$0xff]
        %v147 = vld [vmem:[%s141 + $0x28] sm:$0x1]
        %v148 = vld [vmem:[%s141 + $0x30] sm:$0xff]
        %v149 = vld [vmem:[%s141 + $0x38] sm:$0xff]
        %v150 = vld [vmem:[%s141 + $0x40] sm:$0x1]
        %v151 = vld [vmem:[%s141 + $0x48] sm:$0xff]
        %v152 = vld [vmem:[%s141 + $0x50] sm:$0xff]
        %v153 = vld [vmem:[%s141 + $0x58] sm:$0x1]
        %v154 = vld [vmem:[%s141 + $0x60] sm:$0xff]
        %v155 = vld [vmem:[%s141 + $0x68] sm:$0xff]
        %v156 = vld [vmem:[%s141 + $0x70] sm:$0x1]
        %v157 = vld [vmem:[%s141 + $0x78] sm:$0xff]
        %v158 = vld [vmem:[%s141 + $0x80] sm:$0xff]
        %v159 = vld [vmem:[%s141 + $0x88] sm:$0x1]
        %v160 = vld [vmem:[%s141 + $0x90] sm:$0xff]
        %v161 = vld [vmem:[%s141 + $0x98] sm:$0xff]
        %v162 = vld [vmem:[%s141 + $0xa0] sm:$0x1]
        %v163 = vld [vmem:[%s141 + $0xa8] sm:$0xff]
        %v164 = vld [vmem:[%s141 + $0xb0] sm:$0xff]
        %v165 = vld [vmem:[%s141 + $0xb8] sm:$0x1]
        %v166 = vld [vmem:[%s141 + $0xc0] sm:$0xff]
        %v167 = vld [vmem:[%s141 + $0xc8] sm:$0xff]
        %v168 = vld [vmem:[%s141 + $0xd0] sm:$0x1]
        %v169 = vld [vmem:[%s141 + $0xd8] sm:$0xff]
        %v170 = vld [vmem:[%s141 + $0xe0] sm:$0xff]
        %v171 = vld [vmem:[%s141 + $0xe8] sm:$0x1]
        %v172 = vld [vmem:[%s141 + $0xf0] sm:$0xff]
        %v173 = vld [vmem:[%s141 + $0xf8] sm:$0xff]
        %v174 = vld [vmem:[%s141 + $0x100] sm:$0x1]
        %v175 = vld [vmem:[%s141 + $0x108] sm:$0xff]
        %v176 = vld [vmem:[%s141 + $0x110] sm:$0xff]
        %v177 = vld [vmem:[%s141 + $0x118] sm:$0x1]
        %v178 = vld [vmem:[%s141 + $0x120] sm:$0xff]
        %v179 = vld [vmem:[%s141 + $0x128] sm:$0xff]
        %v180 = vld [vmem:[%s141 + $0x130] sm:$0x1]
        %v181 = vld [vmem:[%s141 + $0x138] sm:$0xff]
        %v182 = vld [vmem:[%s141 + $0x140] sm:$0xff]
        %v183 = vld [vmem:[%s141 + $0x148] sm:$0x1]
        %v184 = vld [vmem:[%s141 + $0x150] sm:$0xff]
        %v185 = vld [vmem:[%s141 + $0x158] sm:$0xff]
        %v186 = vld [vmem:[%s141 + $0x160] sm:$0x1]
        %v187 = vld [vmem:[%s141 + $0x168] sm:$0xff]
        %v188 = vld [vmem:[%s141 + $0x170] sm:$0xff]
        %v189 = vld [vmem:[%s141 + $0x178] sm:$0x1]
        %v190 = vld [vmem:[%s141 + $0x180] sm:$0xff]
        %v191 = vld [vmem:[%s141 + $0x188] sm:$0xff]
        %v192 = vld [vmem:[%s141 + $0x190] sm:$0x1]
        %v193 = vld [vmem:[%s141 + $0x198] sm:$0xff]
        %v194 = vld [vmem:[%s141 + $0x1a0] sm:$0xff]
        %v195 = vld [vmem:[%s141 + $0x1b0] sm:$0xff]
        %v196 = vld [vmem:[%s141 + $0x1b8] sm:$0xff]
        %v197 = vld [vmem:[%s141 + $0x1c8] sm:$0xff]
        %v198 = vld [vmem:[%s141 + $0x1d0] sm:$0xff]
        %v199 = vld [vmem:[%s141 + $0x1e0] sm:$0xff]
        %v200 = vld [vmem:[%s141 + $0x1e8] sm:$0xff]
        %v201 = vld [vmem:[%s141 + $0x1f8] sm:$0xff]
        %v202 = vld [vmem:[%s141 + $0x200] sm:$0xff]
        %v203 = vld [vmem:[%s141 + $0x210] sm:$0xff]
        %v204 = vld [vmem:[%s141 + $0x218] sm:$0xff]
        %v205 = vld [vmem:[%s141 + $0x228] sm:$0xff]
        %v206 = vld [vmem:[%s141 + $0x230] sm:$0xff]
        %v207 = vld [vmem:[%s141 + $0x240] sm:$0xff]
        %v208 = vld [vmem:[%s141 + $0x248] sm:$0xff]
        %v209 = vld [vmem:[%s141 + $0x258] sm:$0xff]
        %v210 = vld [vmem:[%s141 + $0x260] sm:$0xff]
        %v211 = vld [vmem:[%s141 + $0x270] sm:$0xff]
        %v212 = vld [vmem:[%s141 + $0x278] sm:$0xff]
        %v213 = vld [vmem:[%s141 + $0x288] sm:$0xff]
        %v214 = vld [vmem:[%s141 + $0x290] sm:$0xff]
        %v215 = vld [vmem:[%s141 + $0x2a0] sm:$0xff]
        %v216 = vld [vmem:[%s141 + $0x2a8] sm:$0xff]
        %v217 = vld [vmem:[%s141 + $0x2b8] sm:$0xff]
        %v218 = vld [vmem:[%s141 + $0x2c0] sm:$0xff]
        %v219 = vld [vmem:[%s141 + $0x2d0] sm:$0xff]
        %v220 = vld [vmem:[%s141 + $0x2d8] sm:$0xff]
        %v221 = vld [vmem:[%s141 + $0x2e8] sm:$0xff]
        %v222 = vld [vmem:[%s141 + $0x2f0] sm:$0xff]
        %v223 = vld [vmem:[%s141 + $0x300] sm:$0xff]
        %v224 = vld [vmem:[%s141 + $0x308] sm:$0xff]
        %v225 = vld [vmem:[%s141 + $0x318] sm:$0xff]
        %v226 = vld [vmem:[%s141 + $0x320] sm:$0xff]
        %v227 = vld [vmem:[%s141 + $0x330] sm:$0xff]
        %v228 = vld [vmem:[%s141 + $0x338] sm:$0xff]
        %v229 = vld [vmem:[%s141 + $0x340] sm:$0x1]
        %v230 = vld [vmem:[%s141 + $0x348] sm:$0xff]
        %v231 = vld [vmem:[%s141 + $0x350] sm:$0xff]
        %v232 = vld [vmem:[%s141 + $0x358] sm:$0x1]
        %v233 = vld [vmem:[%s141 + $0x360] sm:$0xff]
        %v234 = vld [vmem:[%s141 + $0x368] sm:$0xff]
        %v235 = vld [vmem:[%s141 + $0x370] sm:$0x1]
        %v236 = vld [vmem:[%s141 + $0x378] sm:$0xff]
        %v237 = vld [vmem:[%s141 + $0x380] sm:$0xff]
        %v238 = vld [vmem:[%s141 + $0x388] sm:$0x1]
        %v239 = vld [vmem:[%s141 + $0x390] sm:$0xff]
        %v240 = vld [vmem:[%s141 + $0x398] sm:$0xff]
        %v241 = vld [vmem:[%s141 + $0x3a0] sm:$0x1]
        %v242 = vld [vmem:[%s141 + $0x3a8] sm:$0xff]
        %v243 = vld [vmem:[%s141 + $0x3b0] sm:$0xff]
        %v244 = vld [vmem:[%s141 + $0x3b8] sm:$0x1]
        %v245 = vld [vmem:[%s141 + $0x3c0] sm:$0xff]
        %v246 = vld [vmem:[%s141 + $0x3c8] sm:$0xff]
        %v247 = vld [vmem:[%s141 + $0x3d0] sm:$0x1]
        %v248 = vld [vmem:[%s141 + $0x3d8] sm:$0xff]
        %v249 = vld [vmem:[%s141 + $0x3e0] sm:$0xff]
        %v250 = vld [vmem:[%s141 + $0x3e8] sm:$0x1]
        %v251 = vld [vmem:[%s141 + $0x3f0] sm:$0xff]
        %v252 = vld [vmem:[%s141 + $0x3f8] sm:$0xff]
        %v253 = vld [vmem:[%s141 + $0x400] sm:$0x1]
        %v254 = vld [vmem:[%s141 + $0x408] sm:$0xff]
        %v255 = vld [vmem:[%s141 + $0x410] sm:$0xff]
        %v256 = vld [vmem:[%s141 + $0x418] sm:$0x1]
        %v257 = vld [vmem:[%s141 + $0x420] sm:$0xff]
        %v258 = vld [vmem:[%s141 + $0x428] sm:$0xff]
        %v259 = vld [vmem:[%s141 + $0x430] sm:$0x1]
        %v260 = vld [vmem:[%s141 + $0x438] sm:$0xff]
        %v261 = vld [vmem:[%s141 + $0x440] sm:$0xff]
        %v262 = vld [vmem:[%s141 + $0x448] sm:$0x1]
        %v263 = vld [vmem:[%s141 + $0x450] sm:$0xff]
        %v264 = vld [vmem:[%s141 + $0x458] sm:$0xff]
        %v265 = vld [vmem:[%s141 + $0x460] sm:$0x1]
        %v266 = vld [vmem:[%s141 + $0x468] sm:$0xff]
        %v267 = vld [vmem:[%s141 + $0x470] sm:$0xff]
        %v268 = vld [vmem:[%s141 + $0x478] sm:$0x1]
        %v269 = vld [vmem:[%s141 + $0x480] sm:$0xff]
        %v270 = vld [vmem:[%s141 + $0x488] sm:$0xff]
        %v271 = vld [vmem:[%s141 + $0x490] sm:$0x1]
        %v272 = vld [vmem:[%s141 + $0x498] sm:$0xff]
        %v273 = vld [vmem:[%s141 + $0x4a0] sm:$0xff]
        %v274 = vld [vmem:[%s141 + $0x4a8] sm:$0x1]
        %v275 = vld [vmem:[%s141 + $0x4c8] sm:$0xff]
        %v276 = vld [vmem:[%s141 + $0x4d0] sm:$0xff]
        %v277 = vld [vmem:[%s141 + $0x4e0] sm:$0xff]
        %v278 = vld [vmem:[%s141 + $0x4e8] sm:$0xff]
        %v279 = vld [vmem:[%s141 + $0x4f8] sm:$0xff]
        %v280 = vld [vmem:[%s141 + $0x500] sm:$0xff]
        %v281 = vld [vmem:[%s141 + $0x510] sm:$0xff]
        %v282 = vld [vmem:[%s141 + $0x518] sm:$0xff]
        %v283 = vld [vmem:[%s141 + $0x528] sm:$0xff]
        %v284 = vld [vmem:[%s141 + $0x530] sm:$0xff]
        %v285 = vld [vmem:[%s141 + $0x540] sm:$0xff]
        %v286 = vld [vmem:[%s141 + $0x548] sm:$0xff]
        %v287 = vld [vmem:[%s141 + $0x558] sm:$0xff]
        %v288 = vld [vmem:[%s141 + $0x560] sm:$0xff]
        %v289 = vld [vmem:[%s141 + $0x570] sm:$0xff]
        %v290 = vld [vmem:[%s141 + $0x578] sm:$0xff]
        %v291 = vld [vmem:[%s141 + $0x588] sm:$0xff]
        %v292 = vld [vmem:[%s141 + $0x590] sm:$0xff]
        %v293 = vld [vmem:[%s141 + $0x5a0] sm:$0xff]
        %v294 = vld [vmem:[%s141 + $0x5a8] sm:$0xff]
        %v295 = vld [vmem:[%s141 + $0x5b8] sm:$0xff]
        %v296 = vld [vmem:[%s141 + $0x5c0] sm:$0xff]
        %v297 = vld [vmem:[%s141 + $0x5d0] sm:$0xff]
        %v298 = vld [vmem:[%s141 + $0x5d8] sm:$0xff]
        %v299 = vld [vmem:[%s141 + $0x5e8] sm:$0xff]
        %v300 = vld [vmem:[%s141 + $0x5f0] sm:$0xff]
        %v301 = vld [vmem:[%s141 + $0x600] sm:$0xff]
        %v302 = vld [vmem:[%s141 + $0x608] sm:$0xff]
        %v303 = vld [vmem:[%s141 + $0x618] sm:$0xff]
        %v304 = vld [vmem:[%s141 + $0x620] sm:$0xff]
        %v305 = vld [vmem:[%s141 + $0x630] sm:$0xff]
        %v306 = vld [vmem:[%s141 + $0x638] sm:$0xff]
        %v307 = vld [vmem:[%s1] sm:$0x7]
        %v308 = vld [vmem:[%s1 + $0x4] sm:$0x7]
        %v309 = vld [vmem:[%s1 + $0x8] sm:$0x7]
        %v310 = vld [vmem:[%s1 + $0xc] sm:$0x7]
        %v311 = vld [vmem:[%s1 + $0x10] sm:$0x7]
        %v312 = vld [vmem:[%s1 + $0x14] sm:$0x7]
        %v313 = vld [vmem:[%s1 + $0x18] sm:$0x7]
        %v314 = vld [vmem:[%s1 + $0x1c] sm:$0x7]
        %v315 = vld [vmem:[%s1 + $0x20] sm:$0x7]
        %317 = vset.pattern.permute.xlu0 0
        %318 = vperm.xlu0 %317, %v142
        %v319 = vpop.permute.xlu0 %318
        %322 = vset.pattern.permute.xlu0 0
        %323 = vperm.xlu0 %322, %v143
        %v324 = vpop.permute.xlu0 %323
        %327 = vset.pattern.permute.xlu0 0
        %328 = vperm.xlu0 %327, %v145
        %v329 = vpop.permute.xlu0 %328
        %332 = vset.pattern.permute.xlu0 0
        %333 = vperm.xlu0 %332, %v146
        %v334 = vpop.permute.xlu0 %333
        %337 = vset.pattern.permute.xlu0 0
        %338 = vperm.xlu0 %337, %v148
        %v339 = vpop.permute.xlu0 %338
        %342 = vset.pattern.permute.xlu0 0
        %343 = vperm.xlu0 %342, %v149
        %v344 = vpop.permute.xlu0 %343
        %347 = vset.pattern.permute.xlu0 0
        %348 = vperm.xlu0 %347, %v151
        %v349 = vpop.permute.xlu0 %348
        %352 = vset.pattern.permute.xlu0 0
        %353 = vperm.xlu0 %352, %v152
        %v354 = vpop.permute.xlu0 %353
        %357 = vset.pattern.permute.xlu0 0
        %358 = vperm.xlu0 %357, %v154
        %v359 = vpop.permute.xlu0 %358
        %362 = vset.pattern.permute.xlu0 0
        %363 = vperm.xlu0 %362, %v155
        %v364 = vpop.permute.xlu0 %363
        %367 = vset.pattern.permute.xlu0 0
        %368 = vperm.xlu0 %367, %v157
        %v369 = vpop.permute.xlu0 %368
        %372 = vset.pattern.permute.xlu0 0
        %373 = vperm.xlu0 %372, %v158
        %v374 = vpop.permute.xlu0 %373
        %377 = vset.pattern.permute.xlu0 0
        %378 = vperm.xlu0 %377, %v160
        %v379 = vpop.permute.xlu0 %378
        %382 = vset.pattern.permute.xlu0 0
        %383 = vperm.xlu0 %382, %v161
        %v384 = vpop.permute.xlu0 %383
        %387 = vset.pattern.permute.xlu0 0
        %388 = vperm.xlu0 %387, %v163
        %v389 = vpop.permute.xlu0 %388
        %392 = vset.pattern.permute.xlu0 0
        %393 = vperm.xlu0 %392, %v164
        %v394 = vpop.permute.xlu0 %393
        %397 = vset.pattern.permute.xlu0 0
        %398 = vperm.xlu0 %397, %v166
        %v399 = vpop.permute.xlu0 %398
        %402 = vset.pattern.permute.xlu0 0
        %403 = vperm.xlu0 %402, %v167
        %v404 = vpop.permute.xlu0 %403
        %407 = vset.pattern.permute.xlu0 0
        %408 = vperm.xlu0 %407, %v169
        %v409 = vpop.permute.xlu0 %408
        %412 = vset.pattern.permute.xlu0 0
        %413 = vperm.xlu0 %412, %v170
        %v414 = vpop.permute.xlu0 %413
        %417 = vset.pattern.permute.xlu0 0
        %418 = vperm.xlu0 %417, %v172
        %v419 = vpop.permute.xlu0 %418
        %422 = vset.pattern.permute.xlu0 0
        %423 = vperm.xlu0 %422, %v173
        %v424 = vpop.permute.xlu0 %423
        %427 = vset.pattern.permute.xlu0 0
        %428 = vperm.xlu0 %427, %v175
        %v429 = vpop.permute.xlu0 %428
        %432 = vset.pattern.permute.xlu0 0
        %433 = vperm.xlu0 %432, %v176
        %v434 = vpop.permute.xlu0 %433
        %437 = vset.pattern.permute.xlu0 0
        %438 = vperm.xlu0 %437, %v178
        %v439 = vpop.permute.xlu0 %438
        %442 = vset.pattern.permute.xlu0 0
        %443 = vperm.xlu0 %442, %v179
        %v444 = vpop.permute.xlu0 %443
        %447 = vset.pattern.permute.xlu0 0
        %448 = vperm.xlu0 %447, %v181
        %v449 = vpop.permute.xlu0 %448
        %452 = vset.pattern.permute.xlu0 0
        %453 = vperm.xlu0 %452, %v182
        %v454 = vpop.permute.xlu0 %453
        %457 = vset.pattern.permute.xlu0 0
        %458 = vperm.xlu0 %457, %v184
        %v459 = vpop.permute.xlu0 %458
        %462 = vset.pattern.permute.xlu0 0
        %463 = vperm.xlu0 %462, %v185
        %v464 = vpop.permute.xlu0 %463
        %467 = vset.pattern.permute.xlu0 0
        %468 = vperm.xlu0 %467, %v187
        %v469 = vpop.permute.xlu0 %468
        %472 = vset.pattern.permute.xlu0 0
        %473 = vperm.xlu0 %472, %v188
        %v474 = vpop.permute.xlu0 %473
        %v476 = vlaneseq
        %v477 = vshrl.u32 %v476, 7
        %v478 = vsub.s32 0, %v477
        %v479 = vrot.slane %v307, %v478
        %v480 = vmul.f32 %v319, %v479
        %v481 = vmul.f32 %v324, %v479
        %v482 = vmul.f32 %v329, %v479
        %v483 = vmul.f32 %v334, %v479
        %v484 = vmul.f32 %v339, %v479
        %v485 = vmul.f32 %v344, %v479
        %v486 = vmul.f32 %v349, %v479
        %v487 = vmul.f32 %v354, %v479
        %v488 = vmul.f32 %v359, %v479
        %v489 = vmul.f32 %v364, %v479
        %v490 = vmul.f32 %v369, %v479
        %v491 = vmul.f32 %v374, %v479
        %v492 = vmul.f32 %v379, %v479
        %v493 = vmul.f32 %v384, %v479
        %v494 = vmul.f32 %v389, %v479
        %v495 = vmul.f32 %v394, %v479
        %v496 = vmul.f32 %v399, %v479
        %v497 = vmul.f32 %v404, %v479
        %v498 = vmul.f32 %v409, %v479
        %v499 = vmul.f32 %v414, %v479
        %v500 = vmul.f32 %v419, %v479
        %v501 = vmul.f32 %v424, %v479
        %v502 = vmul.f32 %v429, %v479
        %v503 = vmul.f32 %v434, %v479
        %v504 = vmul.f32 %v439, %v479
        %v505 = vmul.f32 %v444, %v479
        %v506 = vmul.f32 %v449, %v479
        %v507 = vmul.f32 %v454, %v479
        %v508 = vmul.f32 %v459, %v479
        %v509 = vmul.f32 %v464, %v479
        %v510 = vmul.f32 %v469, %v479
        %v511 = vmul.f32 %v474, %v479
        %v512 = vadd.f32 %v480, 0.0
        %v513 = vadd.f32 %v481, 0.0
        %v514 = vadd.f32 %v482, 0.0
        %v515 = vadd.f32 %v483, 0.0
        %v516 = vadd.f32 %v484, 0.0
        %v517 = vadd.f32 %v485, 0.0
        %v518 = vadd.f32 %v486, 0.0
        %v519 = vadd.f32 %v487, 0.0
        %v520 = vadd.f32 %v488, 0.0
        %v521 = vadd.f32 %v489, 0.0
        %v522 = vadd.f32 %v490, 0.0
        %v523 = vadd.f32 %v491, 0.0
        %v524 = vadd.f32 %v492, 0.0
        %v525 = vadd.f32 %v493, 0.0
        %v526 = vadd.f32 %v494, 0.0
        %v527 = vadd.f32 %v495, 0.0
        %v528 = vadd.f32 %v496, 0.0
        %v529 = vadd.f32 %v497, 0.0
        %v530 = vadd.f32 %v498, 0.0
        %v531 = vadd.f32 %v499, 0.0
        %v532 = vadd.f32 %v500, 0.0
        %v533 = vadd.f32 %v501, 0.0
        %v534 = vadd.f32 %v502, 0.0
        %v535 = vadd.f32 %v503, 0.0
        %v536 = vadd.f32 %v504, 0.0
        %v537 = vadd.f32 %v505, 0.0
        %v538 = vadd.f32 %v506, 0.0
        %v539 = vadd.f32 %v507, 0.0
        %v540 = vadd.f32 %v508, 0.0
        %v541 = vadd.f32 %v509, 0.0
        %v542 = vadd.f32 %v510, 0.0
        %v543 = vadd.f32 %v511, 0.0
        %544 = vset.pattern.permute.xlu0 1
        %545 = vperm.xlu0 %544, %v142
        %v546 = vpop.permute.xlu0 %545
        %548 = vset.pattern.permute.xlu0 1
        %549 = vperm.xlu0 %548, %v143
        %v550 = vpop.permute.xlu0 %549
        %552 = vset.pattern.permute.xlu0 1
        %553 = vperm.xlu0 %552, %v145
        %v554 = vpop.permute.xlu0 %553
        %556 = vset.pattern.permute.xlu0 1
        %557 = vperm.xlu0 %556, %v146
        %v558 = vpop.permute.xlu0 %557
        %560 = vset.pattern.permute.xlu0 1
        %561 = vperm.xlu0 %560, %v148
        %v562 = vpop.permute.xlu0 %561
        %564 = vset.pattern.permute.xlu0 1
        %565 = vperm.xlu0 %564, %v149
        %v566 = vpop.permute.xlu0 %565
        %568 = vset.pattern.permute.xlu0 1
        %569 = vperm.xlu0 %568, %v151
        %v570 = vpop.permute.xlu0 %569
        %572 = vset.pattern.permute.xlu0 1
        %573 = vperm.xlu0 %572, %v152
        %v574 = vpop.permute.xlu0 %573
        %576 = vset.pattern.permute.xlu0 1
        %577 = vperm.xlu0 %576, %v154
        %v578 = vpop.permute.xlu0 %577
        %580 = vset.pattern.permute.xlu0 1
        %581 = vperm.xlu0 %580, %v155
        %v582 = vpop.permute.xlu0 %581
        %584 = vset.pattern.permute.xlu0 1
        %585 = vperm.xlu0 %584, %v157
        %v586 = vpop.permute.xlu0 %585
        %588 = vset.pattern.permute.xlu0 1
        %589 = vperm.xlu0 %588, %v158
        %v590 = vpop.permute.xlu0 %589
        %592 = vset.pattern.permute.xlu0 1
        %593 = vperm.xlu0 %592, %v160
        %v594 = vpop.permute.xlu0 %593
        %596 = vset.pattern.permute.xlu0 1
        %597 = vperm.xlu0 %596, %v161
        %v598 = vpop.permute.xlu0 %597
        %600 = vset.pattern.permute.xlu0 1
        %601 = vperm.xlu0 %600, %v163
        %v602 = vpop.permute.xlu0 %601
        %604 = vset.pattern.permute.xlu0 1
        %605 = vperm.xlu0 %604, %v164
        %v606 = vpop.permute.xlu0 %605
        %608 = vset.pattern.permute.xlu0 1
        %609 = vperm.xlu0 %608, %v166
        %v610 = vpop.permute.xlu0 %609
        %612 = vset.pattern.permute.xlu0 1
        %613 = vperm.xlu0 %612, %v167
        %v614 = vpop.permute.xlu0 %613
        %616 = vset.pattern.permute.xlu0 1
        %617 = vperm.xlu0 %616, %v169
        %v618 = vpop.permute.xlu0 %617
        %620 = vset.pattern.permute.xlu0 1
        %621 = vperm.xlu0 %620, %v170
        %v622 = vpop.permute.xlu0 %621
        %624 = vset.pattern.permute.xlu0 1
        %625 = vperm.xlu0 %624, %v172
        %v626 = vpop.permute.xlu0 %625
        %628 = vset.pattern.permute.xlu0 1
        %629 = vperm.xlu0 %628, %v173
        %v630 = vpop.permute.xlu0 %629
        %632 = vset.pattern.permute.xlu0 1
        %633 = vperm.xlu0 %632, %v175
        %v634 = vpop.permute.xlu0 %633
        %636 = vset.pattern.permute.xlu0 1
        %637 = vperm.xlu0 %636, %v176
        %v638 = vpop.permute.xlu0 %637
        %640 = vset.pattern.permute.xlu0 1
        %641 = vperm.xlu0 %640, %v178
        %v642 = vpop.permute.xlu0 %641
        %644 = vset.pattern.permute.xlu0 1
        %645 = vperm.xlu0 %644, %v179
        %v646 = vpop.permute.xlu0 %645
        %648 = vset.pattern.permute.xlu0 1
        %649 = vperm.xlu0 %648, %v181
        %v650 = vpop.permute.xlu0 %649
        %652 = vset.pattern.permute.xlu0 1
        %653 = vperm.xlu0 %652, %v182
        %v654 = vpop.permute.xlu0 %653
        %656 = vset.pattern.permute.xlu0 1
        %657 = vperm.xlu0 %656, %v184
        %v658 = vpop.permute.xlu0 %657
        %660 = vset.pattern.permute.xlu0 1
        %661 = vperm.xlu0 %660, %v185
        %v662 = vpop.permute.xlu0 %661
        %664 = vset.pattern.permute.xlu0 1
        %665 = vperm.xlu0 %664, %v187
        %v666 = vpop.permute.xlu0 %665
        %668 = vset.pattern.permute.xlu0 1
        %669 = vperm.xlu0 %668, %v188
        %v670 = vpop.permute.xlu0 %669
        %v672 = vlaneseq
        %v673 = vshrl.u32 %v672, 7
        %v674 = vsub.s32 1, %v673
        %v675 = vrot.slane %v307, %v674
        %v676 = vmul.f32 %v546, %v675
        %v677 = vmul.f32 %v550, %v675
        %v678 = vmul.f32 %v554, %v675
        %v679 = vmul.f32 %v558, %v675
        %v680 = vmul.f32 %v562, %v675
        %v681 = vmul.f32 %v566, %v675
        %v682 = vmul.f32 %v570, %v675
        %v683 = vmul.f32 %v574, %v675
        %v684 = vmul.f32 %v578, %v675
        %v685 = vmul.f32 %v582, %v675
        %v686 = vmul.f32 %v586, %v675
        %v687 = vmul.f32 %v590, %v675
        %v688 = vmul.f32 %v594, %v675
        %v689 = vmul.f32 %v598, %v675
        %v690 = vmul.f32 %v602, %v675
        %v691 = vmul.f32 %v606, %v675
        %v692 = vmul.f32 %v610, %v675
        %v693 = vmul.f32 %v614, %v675
        %v694 = vmul.f32 %v618, %v675
        %v695 = vmul.f32 %v622, %v675
        %v696 = vmul.f32 %v626, %v675
        %v697 = vmul.f32 %v630, %v675
        %v698 = vmul.f32 %v634, %v675
        %v699 = vmul.f32 %v638, %v675
        %v700 = vmul.f32 %v642, %v675
        %v701 = vmul.f32 %v646, %v675
        %v702 = vmul.f32 %v650, %v675
        %v703 = vmul.f32 %v654, %v675
        %v704 = vmul.f32 %v658, %v675
        %v705 = vmul.f32 %v662, %v675
        %v706 = vmul.f32 %v666, %v675
        %v707 = vmul.f32 %v670, %v675
        %v708 = vadd.f32 %v512, %v676
        %v709 = vadd.f32 %v513, %v677
        %v710 = vadd.f32 %v514, %v678
        %v711 = vadd.f32 %v515, %v679
        %v712 = vadd.f32 %v516, %v680
        %v713 = vadd.f32 %v517, %v681
        %v714 = vadd.f32 %v518, %v682
        %v715 = vadd.f32 %v519, %v683
        %v716 = vadd.f32 %v520, %v684
        %v717 = vadd.f32 %v521, %v685
        %v718 = vadd.f32 %v522, %v686
        %v719 = vadd.f32 %v523, %v687
        %v720 = vadd.f32 %v524, %v688
        %v721 = vadd.f32 %v525, %v689
        %v722 = vadd.f32 %v526, %v690
        %v723 = vadd.f32 %v527, %v691
        %v724 = vadd.f32 %v528, %v692
        %v725 = vadd.f32 %v529, %v693
        %v726 = vadd.f32 %v530, %v694
        %v727 = vadd.f32 %v531, %v695
        %v728 = vadd.f32 %v532, %v696
        %v729 = vadd.f32 %v533, %v697
        %v730 = vadd.f32 %v534, %v698
        %v731 = vadd.f32 %v535, %v699
        %v732 = vadd.f32 %v536, %v700
        %v733 = vadd.f32 %v537, %v701
        %v734 = vadd.f32 %v538, %v702
        %v735 = vadd.f32 %v539, %v703
        %v736 = vadd.f32 %v540, %v704
        %v737 = vadd.f32 %v541, %v705
        %v738 = vadd.f32 %v542, %v706
        %v739 = vadd.f32 %v543, %v707
        %740 = vset.pattern.permute.xlu0 2
        %741 = vperm.xlu0 %740, %v142
        %v742 = vpop.permute.xlu0 %741
        %744 = vset.pattern.permute.xlu0 2
        %745 = vperm.xlu0 %744, %v143
        %v746 = vpop.permute.xlu0 %745
        %748 = vset.pattern.permute.xlu0 2
        %749 = vperm.xlu0 %748, %v145
        %v750 = vpop.permute.xlu0 %749
        %752 = vset.pattern.permute.xlu0 2
        %753 = vperm.xlu0 %752, %v146
        %v754 = vpop.permute.xlu0 %753
        %756 = vset.pattern.permute.xlu0 2
        %757 = vperm.xlu0 %756, %v148
        %v758 = vpop.permute.xlu0 %757
        %760 = vset.pattern.permute.xlu0 2
        %761 = vperm.xlu0 %760, %v149
        %v762 = vpop.permute.xlu0 %761
        %764 = vset.pattern.permute.xlu0 2
        %765 = vperm.xlu0 %764, %v151
        %v766 = vpop.permute.xlu0 %765
        %768 = vset.pattern.permute.xlu0 2
        %769 = vperm.xlu0 %768, %v152
        %v770 = vpop.permute.xlu0 %769
        %772 = vset.pattern.permute.xlu0 2
        %773 = vperm.xlu0 %772, %v154
        %v774 = vpop.permute.xlu0 %773
        %776 = vset.pattern.permute.xlu0 2
        %777 = vperm.xlu0 %776, %v155
        %v778 = vpop.permute.xlu0 %777
        %780 = vset.pattern.permute.xlu0 2
        %781 = vperm.xlu0 %780, %v157
        %v782 = vpop.permute.xlu0 %781
        %784 = vset.pattern.permute.xlu0 2
        %785 = vperm.xlu0 %784, %v158
        %v786 = vpop.permute.xlu0 %785
        %788 = vset.pattern.permute.xlu0 2
        %789 = vperm.xlu0 %788, %v160
        %v790 = vpop.permute.xlu0 %789
        %792 = vset.pattern.permute.xlu0 2
        %793 = vperm.xlu0 %792, %v161
        %v794 = vpop.permute.xlu0 %793
        %796 = vset.pattern.permute.xlu0 2
        %797 = vperm.xlu0 %796, %v163
        %v798 = vpop.permute.xlu0 %797
        %800 = vset.pattern.permute.xlu0 2
        %801 = vperm.xlu0 %800, %v164
        %v802 = vpop.permute.xlu0 %801
        %804 = vset.pattern.permute.xlu0 2
        %805 = vperm.xlu0 %804, %v166
        %v806 = vpop.permute.xlu0 %805
        %808 = vset.pattern.permute.xlu0 2
        %809 = vperm.xlu0 %808, %v167
        %v810 = vpop.permute.xlu0 %809
        %812 = vset.pattern.permute.xlu0 2
        %813 = vperm.xlu0 %812, %v169
        %v814 = vpop.permute.xlu0 %813
        %816 = vset.pattern.permute.xlu0 2
        %817 = vperm.xlu0 %816, %v170
        %v818 = vpop.permute.xlu0 %817
        %820 = vset.pattern.permute.xlu0 2
        %821 = vperm.xlu0 %820, %v172
        %v822 = vpop.permute.xlu0 %821
        %824 = vset.pattern.permute.xlu0 2
        %825 = vperm.xlu0 %824, %v173
        %v826 = vpop.permute.xlu0 %825
        %828 = vset.pattern.permute.xlu0 2
        %829 = vperm.xlu0 %828, %v175
        %v830 = vpop.permute.xlu0 %829
        %832 = vset.pattern.permute.xlu0 2
        %833 = vperm.xlu0 %832, %v176
        %v834 = vpop.permute.xlu0 %833
        %836 = vset.pattern.permute.xlu0 2
        %837 = vperm.xlu0 %836, %v178
        %v838 = vpop.permute.xlu0 %837
        %840 = vset.pattern.permute.xlu0 2
        %841 = vperm.xlu0 %840, %v179
        %v842 = vpop.permute.xlu0 %841
        %844 = vset.pattern.permute.xlu0 2
        %845 = vperm.xlu0 %844, %v181
        %v846 = vpop.permute.xlu0 %845
        %848 = vset.pattern.permute.xlu0 2
        %849 = vperm.xlu0 %848, %v182
        %v850 = vpop.permute.xlu0 %849
        %852 = vset.pattern.permute.xlu0 2
        %853 = vperm.xlu0 %852, %v184
        %v854 = vpop.permute.xlu0 %853
        %856 = vset.pattern.permute.xlu0 2
        %857 = vperm.xlu0 %856, %v185
        %v858 = vpop.permute.xlu0 %857
        %860 = vset.pattern.permute.xlu0 2
        %861 = vperm.xlu0 %860, %v187
        %v862 = vpop.permute.xlu0 %861
        %864 = vset.pattern.permute.xlu0 2
        %865 = vperm.xlu0 %864, %v188
        %v866 = vpop.permute.xlu0 %865
        %v868 = vlaneseq
        %v869 = vshrl.u32 %v868, 7
        %v870 = vsub.s32 2, %v869
        %v871 = vrot.slane %v307, %v870
        %v872 = vmul.f32 %v742, %v871
        %v873 = vmul.f32 %v746, %v871
        %v874 = vmul.f32 %v750, %v871
        %v875 = vmul.f32 %v754, %v871
        %v876 = vmul.f32 %v758, %v871
        %v877 = vmul.f32 %v762, %v871
        %v878 = vmul.f32 %v766, %v871
        %v879 = vmul.f32 %v770, %v871
        %v880 = vmul.f32 %v774, %v871
        %v881 = vmul.f32 %v778, %v871
        %v882 = vmul.f32 %v782, %v871
        %v883 = vmul.f32 %v786, %v871
        %v884 = vmul.f32 %v790, %v871
        %v885 = vmul.f32 %v794, %v871
        %v886 = vmul.f32 %v798, %v871
        %v887 = vmul.f32 %v802, %v871
        %v888 = vmul.f32 %v806, %v871
        %v889 = vmul.f32 %v810, %v871
        %v890 = vmul.f32 %v814, %v871
        %v891 = vmul.f32 %v818, %v871
        %v892 = vmul.f32 %v822, %v871
        %v893 = vmul.f32 %v826, %v871
        %v894 = vmul.f32 %v830, %v871
        %v895 = vmul.f32 %v834, %v871
        %v896 = vmul.f32 %v838, %v871
        %v897 = vmul.f32 %v842, %v871
        %v898 = vmul.f32 %v846, %v871
        %v899 = vmul.f32 %v850, %v871
        %v900 = vmul.f32 %v854, %v871
        %v901 = vmul.f32 %v858, %v871
        %v902 = vmul.f32 %v862, %v871
        %v903 = vmul.f32 %v866, %v871
        %v904 = vadd.f32 %v708, %v872
        %v905 = vadd.f32 %v709, %v873
        %v906 = vadd.f32 %v710, %v874
        %v907 = vadd.f32 %v711, %v875
        %v908 = vadd.f32 %v712, %v876
        %v909 = vadd.f32 %v713, %v877
        %v910 = vadd.f32 %v714, %v878
        %v911 = vadd.f32 %v715, %v879
        %v912 = vadd.f32 %v716, %v880
        %v913 = vadd.f32 %v717, %v881
        %v914 = vadd.f32 %v718, %v882
        %v915 = vadd.f32 %v719, %v883
        %v916 = vadd.f32 %v720, %v884
        %v917 = vadd.f32 %v721, %v885
        %v918 = vadd.f32 %v722, %v886
        %v919 = vadd.f32 %v723, %v887
        %v920 = vadd.f32 %v724, %v888
        %v921 = vadd.f32 %v725, %v889
        %v922 = vadd.f32 %v726, %v890
        %v923 = vadd.f32 %v727, %v891
        %v924 = vadd.f32 %v728, %v892
        %v925 = vadd.f32 %v729, %v893
        %v926 = vadd.f32 %v730, %v894
        %v927 = vadd.f32 %v731, %v895
        %v928 = vadd.f32 %v732, %v896
        %v929 = vadd.f32 %v733, %v897
        %v930 = vadd.f32 %v734, %v898
        %v931 = vadd.f32 %v735, %v899
        %v932 = vadd.f32 %v736, %v900
        %v933 = vadd.f32 %v737, %v901
        %v934 = vadd.f32 %v738, %v902
        %v935 = vadd.f32 %v739, %v903
        %937 = vset.pattern.permute.xlu0 0
        %938 = vperm.xlu0 %937, %v193
        %v939 = vpop.permute.xlu0 %938
        %942 = vset.pattern.permute.xlu0 0
        %943 = vperm.xlu0 %942, %v194
        %v944 = vpop.permute.xlu0 %943
        %947 = vset.pattern.permute.xlu0 0
        %948 = vperm.xlu0 %947, %v195
        %v949 = vpop.permute.xlu0 %948
        %952 = vset.pattern.permute.xlu0 0
        %953 = vperm.xlu0 %952, %v196
        %v954 = vpop.permute.xlu0 %953
        %957 = vset.pattern.permute.xlu0 0
        %958 = vperm.xlu0 %957, %v197
        %v959 = vpop.permute.xlu0 %958
        %962 = vset.pattern.permute.xlu0 0
        %963 = vperm.xlu0 %962, %v198
        %v964 = vpop.permute.xlu0 %963
        %967 = vset.pattern.permute.xlu0 0
        %968 = vperm.xlu0 %967, %v199
        %v969 = vpop.permute.xlu0 %968
        %972 = vset.pattern.permute.xlu0 0
        %973 = vperm.xlu0 %972, %v200
        %v974 = vpop.permute.xlu0 %973
        %977 = vset.pattern.permute.xlu0 0
        %978 = vperm.xlu0 %977, %v201
        %v979 = vpop.permute.xlu0 %978
        %982 = vset.pattern.permute.xlu0 0
        %983 = vperm.xlu0 %982, %v202
        %v984 = vpop.permute.xlu0 %983
        %987 = vset.pattern.permute.xlu0 0
        %988 = vperm.xlu0 %987, %v203
        %v989 = vpop.permute.xlu0 %988
        %992 = vset.pattern.permute.xlu0 0
        %993 = vperm.xlu0 %992, %v204
        %v994 = vpop.permute.xlu0 %993
        %997 = vset.pattern.permute.xlu0 0
        %998 = vperm.xlu0 %997, %v205
        %v999 = vpop.permute.xlu0 %998
        %1002 = vset.pattern.permute.xlu0 0
        %1003 = vperm.xlu0 %1002, %v206
        %v1004 = vpop.permute.xlu0 %1003
        %1007 = vset.pattern.permute.xlu0 0
        %1008 = vperm.xlu0 %1007, %v207
        %v1009 = vpop.permute.xlu0 %1008
        %1012 = vset.pattern.permute.xlu0 0
        %1013 = vperm.xlu0 %1012, %v208
        %v1014 = vpop.permute.xlu0 %1013
        %1017 = vset.pattern.permute.xlu0 0
        %1018 = vperm.xlu0 %1017, %v209
        %v1019 = vpop.permute.xlu0 %1018
        %1022 = vset.pattern.permute.xlu0 0
        %1023 = vperm.xlu0 %1022, %v210
        %v1024 = vpop.permute.xlu0 %1023
        %1027 = vset.pattern.permute.xlu0 0
        %1028 = vperm.xlu0 %1027, %v211
        %v1029 = vpop.permute.xlu0 %1028
        %1032 = vset.pattern.permute.xlu0 0
        %1033 = vperm.xlu0 %1032, %v212
        %v1034 = vpop.permute.xlu0 %1033
        %1037 = vset.pattern.permute.xlu0 0
        %1038 = vperm.xlu0 %1037, %v213
        %v1039 = vpop.permute.xlu0 %1038
        %1042 = vset.pattern.permute.xlu0 0
        %1043 = vperm.xlu0 %1042, %v214
        %v1044 = vpop.permute.xlu0 %1043
        %1047 = vset.pattern.permute.xlu0 0
        %1048 = vperm.xlu0 %1047, %v215
        %v1049 = vpop.permute.xlu0 %1048
        %1052 = vset.pattern.permute.xlu0 0
        %1053 = vperm.xlu0 %1052, %v216
        %v1054 = vpop.permute.xlu0 %1053
        %1057 = vset.pattern.permute.xlu0 0
        %1058 = vperm.xlu0 %1057, %v217
        %v1059 = vpop.permute.xlu0 %1058
        %1062 = vset.pattern.permute.xlu0 0
        %1063 = vperm.xlu0 %1062, %v218
        %v1064 = vpop.permute.xlu0 %1063
        %1067 = vset.pattern.permute.xlu0 0
        %1068 = vperm.xlu0 %1067, %v219
        %v1069 = vpop.permute.xlu0 %1068
        %1072 = vset.pattern.permute.xlu0 0
        %1073 = vperm.xlu0 %1072, %v220
        %v1074 = vpop.permute.xlu0 %1073
        %1077 = vset.pattern.permute.xlu0 0
        %1078 = vperm.xlu0 %1077, %v221
        %v1079 = vpop.permute.xlu0 %1078
        %1082 = vset.pattern.permute.xlu0 0
        %1083 = vperm.xlu0 %1082, %v222
        %v1084 = vpop.permute.xlu0 %1083
        %1087 = vset.pattern.permute.xlu0 0
        %1088 = vperm.xlu0 %1087, %v223
        %v1089 = vpop.permute.xlu0 %1088
        %1092 = vset.pattern.permute.xlu0 0
        %1093 = vperm.xlu0 %1092, %v224
        %v1094 = vpop.permute.xlu0 %1093
        %v1096 = vlaneseq
        %v1097 = vshrl.u32 %v1096, 7
        %v1098 = vsub.s32 0, %v1097
        %v1099 = vrot.slane %v308, %v1098
        %v1100 = vmul.f32 %v939, %v1099
        %v1101 = vmul.f32 %v944, %v1099
        %v1102 = vmul.f32 %v949, %v1099
        %v1103 = vmul.f32 %v954, %v1099
        %v1104 = vmul.f32 %v959, %v1099
        %v1105 = vmul.f32 %v964, %v1099
        %v1106 = vmul.f32 %v969, %v1099
        %v1107 = vmul.f32 %v974, %v1099
        %v1108 = vmul.f32 %v979, %v1099
        %v1109 = vmul.f32 %v984, %v1099
        %v1110 = vmul.f32 %v989, %v1099
        %v1111 = vmul.f32 %v994, %v1099
        %v1112 = vmul.f32 %v999, %v1099
        %v1113 = vmul.f32 %v1004, %v1099
        %v1114 = vmul.f32 %v1009, %v1099
        %v1115 = vmul.f32 %v1014, %v1099
        %v1116 = vmul.f32 %v1019, %v1099
        %v1117 = vmul.f32 %v1024, %v1099
        %v1118 = vmul.f32 %v1029, %v1099
        %v1119 = vmul.f32 %v1034, %v1099
        %v1120 = vmul.f32 %v1039, %v1099
        %v1121 = vmul.f32 %v1044, %v1099
        %v1122 = vmul.f32 %v1049, %v1099
        %v1123 = vmul.f32 %v1054, %v1099
        %v1124 = vmul.f32 %v1059, %v1099
        %v1125 = vmul.f32 %v1064, %v1099
        %v1126 = vmul.f32 %v1069, %v1099
        %v1127 = vmul.f32 %v1074, %v1099
        %v1128 = vmul.f32 %v1079, %v1099
        %v1129 = vmul.f32 %v1084, %v1099
        %v1130 = vmul.f32 %v1089, %v1099
        %v1131 = vmul.f32 %v1094, %v1099
        %v1132 = vadd.f32 %v904, %v1100
        %v1133 = vadd.f32 %v905, %v1101
        %v1134 = vadd.f32 %v906, %v1102
        %v1135 = vadd.f32 %v907, %v1103
        %v1136 = vadd.f32 %v908, %v1104
        %v1137 = vadd.f32 %v909, %v1105
        %v1138 = vadd.f32 %v910, %v1106
        %v1139 = vadd.f32 %v911, %v1107
        %v1140 = vadd.f32 %v912, %v1108
        %v1141 = vadd.f32 %v913, %v1109
        %v1142 = vadd.f32 %v914, %v1110
        %v1143 = vadd.f32 %v915, %v1111
        %v1144 = vadd.f32 %v916, %v1112
        %v1145 = vadd.f32 %v917, %v1113
        %v1146 = vadd.f32 %v918, %v1114
        %v1147 = vadd.f32 %v919, %v1115
        %v1148 = vadd.f32 %v920, %v1116
        %v1149 = vadd.f32 %v921, %v1117
        %v1150 = vadd.f32 %v922, %v1118
        %v1151 = vadd.f32 %v923, %v1119
        %v1152 = vadd.f32 %v924, %v1120
        %v1153 = vadd.f32 %v925, %v1121
        %v1154 = vadd.f32 %v926, %v1122
        %v1155 = vadd.f32 %v927, %v1123
        %v1156 = vadd.f32 %v928, %v1124
        %v1157 = vadd.f32 %v929, %v1125
        %v1158 = vadd.f32 %v930, %v1126
        %v1159 = vadd.f32 %v931, %v1127
        %v1160 = vadd.f32 %v932, %v1128
        %v1161 = vadd.f32 %v933, %v1129
        %v1162 = vadd.f32 %v934, %v1130
        %v1163 = vadd.f32 %v935, %v1131
        %1164 = vset.pattern.permute.xlu0 1
        %1165 = vperm.xlu0 %1164, %v193
        %v1166 = vpop.permute.xlu0 %1165
        %1168 = vset.pattern.permute.xlu0 1
        %1169 = vperm.xlu0 %1168, %v194
        %v1170 = vpop.permute.xlu0 %1169
        %1172 = vset.pattern.permute.xlu0 1
        %1173 = vperm.xlu0 %1172, %v195
        %v1174 = vpop.permute.xlu0 %1173
        %1176 = vset.pattern.permute.xlu0 1
        %1177 = vperm.xlu0 %1176, %v196
        %v1178 = vpop.permute.xlu0 %1177
        %1180 = vset.pattern.permute.xlu0 1
        %1181 = vperm.xlu0 %1180, %v197
        %v1182 = vpop.permute.xlu0 %1181
        %1184 = vset.pattern.permute.xlu0 1
        %1185 = vperm.xlu0 %1184, %v198
        %v1186 = vpop.permute.xlu0 %1185
        %1188 = vset.pattern.permute.xlu0 1
        %1189 = vperm.xlu0 %1188, %v199
        %v1190 = vpop.permute.xlu0 %1189
        %1192 = vset.pattern.permute.xlu0 1
        %1193 = vperm.xlu0 %1192, %v200
        %v1194 = vpop.permute.xlu0 %1193
        %1196 = vset.pattern.permute.xlu0 1
        %1197 = vperm.xlu0 %1196, %v201
        %v1198 = vpop.permute.xlu0 %1197
        %1200 = vset.pattern.permute.xlu0 1
        %1201 = vperm.xlu0 %1200, %v202
        %v1202 = vpop.permute.xlu0 %1201
        %1204 = vset.pattern.permute.xlu0 1
        %1205 = vperm.xlu0 %1204, %v203
        %v1206 = vpop.permute.xlu0 %1205
        %1208 = vset.pattern.permute.xlu0 1
        %1209 = vperm.xlu0 %1208, %v204
        %v1210 = vpop.permute.xlu0 %1209
        %1212 = vset.pattern.permute.xlu0 1
        %1213 = vperm.xlu0 %1212, %v205
        %v1214 = vpop.permute.xlu0 %1213
        %1216 = vset.pattern.permute.xlu0 1
        %1217 = vperm.xlu0 %1216, %v206
        %v1218 = vpop.permute.xlu0 %1217
        %1220 = vset.pattern.permute.xlu0 1
        %1221 = vperm.xlu0 %1220, %v207
        %v1222 = vpop.permute.xlu0 %1221
        %1224 = vset.pattern.permute.xlu0 1
        %1225 = vperm.xlu0 %1224, %v208
        %v1226 = vpop.permute.xlu0 %1225
        %1228 = vset.pattern.permute.xlu0 1
        %1229 = vperm.xlu0 %1228, %v209
        %v1230 = vpop.permute.xlu0 %1229
        %1232 = vset.pattern.permute.xlu0 1
        %1233 = vperm.xlu0 %1232, %v210
        %v1234 = vpop.permute.xlu0 %1233
        %1236 = vset.pattern.permute.xlu0 1
        %1237 = vperm.xlu0 %1236, %v211
        %v1238 = vpop.permute.xlu0 %1237
        %1240 = vset.pattern.permute.xlu0 1
        %1241 = vperm.xlu0 %1240, %v212
        %v1242 = vpop.permute.xlu0 %1241
        %1244 = vset.pattern.permute.xlu0 1
        %1245 = vperm.xlu0 %1244, %v213
        %v1246 = vpop.permute.xlu0 %1245
        %1248 = vset.pattern.permute.xlu0 1
        %1249 = vperm.xlu0 %1248, %v214
        %v1250 = vpop.permute.xlu0 %1249
        %1252 = vset.pattern.permute.xlu0 1
        %1253 = vperm.xlu0 %1252, %v215
        %v1254 = vpop.permute.xlu0 %1253
        %1256 = vset.pattern.permute.xlu0 1
        %1257 = vperm.xlu0 %1256, %v216
        %v1258 = vpop.permute.xlu0 %1257
        %1260 = vset.pattern.permute.xlu0 1
        %1261 = vperm.xlu0 %1260, %v217
        %v1262 = vpop.permute.xlu0 %1261
        %1264 = vset.pattern.permute.xlu0 1
        %1265 = vperm.xlu0 %1264, %v218
        %v1266 = vpop.permute.xlu0 %1265
        %1268 = vset.pattern.permute.xlu0 1
        %1269 = vperm.xlu0 %1268, %v219
        %v1270 = vpop.permute.xlu0 %1269
        %1272 = vset.pattern.permute.xlu0 1
        %1273 = vperm.xlu0 %1272, %v220
        %v1274 = vpop.permute.xlu0 %1273
        %1276 = vset.pattern.permute.xlu0 1
        %1277 = vperm.xlu0 %1276, %v221
        %v1278 = vpop.permute.xlu0 %1277
        %1280 = vset.pattern.permute.xlu0 1
        %1281 = vperm.xlu0 %1280, %v222
        %v1282 = vpop.permute.xlu0 %1281
        %1284 = vset.pattern.permute.xlu0 1
        %1285 = vperm.xlu0 %1284, %v223
        %v1286 = vpop.permute.xlu0 %1285
        %1288 = vset.pattern.permute.xlu0 1
        %1289 = vperm.xlu0 %1288, %v224
        %v1290 = vpop.permute.xlu0 %1289
        %v1292 = vlaneseq
        %v1293 = vshrl.u32 %v1292, 7
        %v1294 = vsub.s32 1, %v1293
        %v1295 = vrot.slane %v308, %v1294
        %v1296 = vmul.f32 %v1166, %v1295
        %v1297 = vmul.f32 %v1170, %v1295
        %v1298 = vmul.f32 %v1174, %v1295
        %v1299 = vmul.f32 %v1178, %v1295
        %v1300 = vmul.f32 %v1182, %v1295
        %v1301 = vmul.f32 %v1186, %v1295
        %v1302 = vmul.f32 %v1190, %v1295
        %v1303 = vmul.f32 %v1194, %v1295
        %v1304 = vmul.f32 %v1198, %v1295
        %v1305 = vmul.f32 %v1202, %v1295
        %v1306 = vmul.f32 %v1206, %v1295
        %v1307 = vmul.f32 %v1210, %v1295
        %v1308 = vmul.f32 %v1214, %v1295
        %v1309 = vmul.f32 %v1218, %v1295
        %v1310 = vmul.f32 %v1222, %v1295
        %v1311 = vmul.f32 %v1226, %v1295
        %v1312 = vmul.f32 %v1230, %v1295
        %v1313 = vmul.f32 %v1234, %v1295
        %v1314 = vmul.f32 %v1238, %v1295
        %v1315 = vmul.f32 %v1242, %v1295
        %v1316 = vmul.f32 %v1246, %v1295
        %v1317 = vmul.f32 %v1250, %v1295
        %v1318 = vmul.f32 %v1254, %v1295
        %v1319 = vmul.f32 %v1258, %v1295
        %v1320 = vmul.f32 %v1262, %v1295
        %v1321 = vmul.f32 %v1266, %v1295
        %v1322 = vmul.f32 %v1270, %v1295
        %v1323 = vmul.f32 %v1274, %v1295
        %v1324 = vmul.f32 %v1278, %v1295
        %v1325 = vmul.f32 %v1282, %v1295
        %v1326 = vmul.f32 %v1286, %v1295
        %v1327 = vmul.f32 %v1290, %v1295
        %v1328 = vadd.f32 %v1132, %v1296
        %v1329 = vadd.f32 %v1133, %v1297
        %v1330 = vadd.f32 %v1134, %v1298
        %v1331 = vadd.f32 %v1135, %v1299
        %v1332 = vadd.f32 %v1136, %v1300
        %v1333 = vadd.f32 %v1137, %v1301
        %v1334 = vadd.f32 %v1138, %v1302
        %v1335 = vadd.f32 %v1139, %v1303
        %v1336 = vadd.f32 %v1140, %v1304
        %v1337 = vadd.f32 %v1141, %v1305
        %v1338 = vadd.f32 %v1142, %v1306
        %v1339 = vadd.f32 %v1143, %v1307
        %v1340 = vadd.f32 %v1144, %v1308
        %v1341 = vadd.f32 %v1145, %v1309
        %v1342 = vadd.f32 %v1146, %v1310
        %v1343 = vadd.f32 %v1147, %v1311
        %v1344 = vadd.f32 %v1148, %v1312
        %v1345 = vadd.f32 %v1149, %v1313
        %v1346 = vadd.f32 %v1150, %v1314
        %v1347 = vadd.f32 %v1151, %v1315
        %v1348 = vadd.f32 %v1152, %v1316
        %v1349 = vadd.f32 %v1153, %v1317
        %v1350 = vadd.f32 %v1154, %v1318
        %v1351 = vadd.f32 %v1155, %v1319
        %v1352 = vadd.f32 %v1156, %v1320
        %v1353 = vadd.f32 %v1157, %v1321
        %v1354 = vadd.f32 %v1158, %v1322
        %v1355 = vadd.f32 %v1159, %v1323
        %v1356 = vadd.f32 %v1160, %v1324
        %v1357 = vadd.f32 %v1161, %v1325
        %v1358 = vadd.f32 %v1162, %v1326
        %v1359 = vadd.f32 %v1163, %v1327
        %1360 = vset.pattern.permute.xlu0 2
        %1361 = vperm.xlu0 %1360, %v193
        %v1362 = vpop.permute.xlu0 %1361
        %1364 = vset.pattern.permute.xlu0 2
        %1365 = vperm.xlu0 %1364, %v194
        %v1366 = vpop.permute.xlu0 %1365
        %1368 = vset.pattern.permute.xlu0 2
        %1369 = vperm.xlu0 %1368, %v195
        %v1370 = vpop.permute.xlu0 %1369
        %1372 = vset.pattern.permute.xlu0 2
        %1373 = vperm.xlu0 %1372, %v196
        %v1374 = vpop.permute.xlu0 %1373
        %1376 = vset.pattern.permute.xlu0 2
        %1377 = vperm.xlu0 %1376, %v197
        %v1378 = vpop.permute.xlu0 %1377
        %1380 = vset.pattern.permute.xlu0 2
        %1381 = vperm.xlu0 %1380, %v198
        %v1382 = vpop.permute.xlu0 %1381
        %1384 = vset.pattern.permute.xlu0 2
        %1385 = vperm.xlu0 %1384, %v199
        %v1386 = vpop.permute.xlu0 %1385
        %1388 = vset.pattern.permute.xlu0 2
        %1389 = vperm.xlu0 %1388, %v200
        %v1390 = vpop.permute.xlu0 %1389
        %1392 = vset.pattern.permute.xlu0 2
        %1393 = vperm.xlu0 %1392, %v201
        %v1394 = vpop.permute.xlu0 %1393
        %1396 = vset.pattern.permute.xlu0 2
        %1397 = vperm.xlu0 %1396, %v202
        %v1398 = vpop.permute.xlu0 %1397
        %1400 = vset.pattern.permute.xlu0 2
        %1401 = vperm.xlu0 %1400, %v203
        %v1402 = vpop.permute.xlu0 %1401
        %1404 = vset.pattern.permute.xlu0 2
        %1405 = vperm.xlu0 %1404, %v204
        %v1406 = vpop.permute.xlu0 %1405
        %1408 = vset.pattern.permute.xlu0 2
        %1409 = vperm.xlu0 %1408, %v205
        %v1410 = vpop.permute.xlu0 %1409
        %1412 = vset.pattern.permute.xlu0 2
        %1413 = vperm.xlu0 %1412, %v206
        %v1414 = vpop.permute.xlu0 %1413
        %1416 = vset.pattern.permute.xlu0 2
        %1417 = vperm.xlu0 %1416, %v207
        %v1418 = vpop.permute.xlu0 %1417
        %1420 = vset.pattern.permute.xlu0 2
        %1421 = vperm.xlu0 %1420, %v208
        %v1422 = vpop.permute.xlu0 %1421
        %1424 = vset.pattern.permute.xlu0 2
        %1425 = vperm.xlu0 %1424, %v209
        %v1426 = vpop.permute.xlu0 %1425
        %1428 = vset.pattern.permute.xlu0 2
        %1429 = vperm.xlu0 %1428, %v210
        %v1430 = vpop.permute.xlu0 %1429
        %1432 = vset.pattern.permute.xlu0 2
        %1433 = vperm.xlu0 %1432, %v211
        %v1434 = vpop.permute.xlu0 %1433
        %1436 = vset.pattern.permute.xlu0 2
        %1437 = vperm.xlu0 %1436, %v212
        %v1438 = vpop.permute.xlu0 %1437
        %1440 = vset.pattern.permute.xlu0 2
        %1441 = vperm.xlu0 %1440, %v213
        %v1442 = vpop.permute.xlu0 %1441
        %1444 = vset.pattern.permute.xlu0 2
        %1445 = vperm.xlu0 %1444, %v214
        %v1446 = vpop.permute.xlu0 %1445
        %1448 = vset.pattern.permute.xlu0 2
        %1449 = vperm.xlu0 %1448, %v215
        %v1450 = vpop.permute.xlu0 %1449
        %1452 = vset.pattern.permute.xlu0 2
        %1453 = vperm.xlu0 %1452, %v216
        %v1454 = vpop.permute.xlu0 %1453
        %1456 = vset.pattern.permute.xlu0 2
        %1457 = vperm.xlu0 %1456, %v217
        %v1458 = vpop.permute.xlu0 %1457
        %1460 = vset.pattern.permute.xlu0 2
        %1461 = vperm.xlu0 %1460, %v218
        %v1462 = vpop.permute.xlu0 %1461
        %1464 = vset.pattern.permute.xlu0 2
        %1465 = vperm.xlu0 %1464, %v219
        %v1466 = vpop.permute.xlu0 %1465
        %1468 = vset.pattern.permute.xlu0 2
        %1469 = vperm.xlu0 %1468, %v220
        %v1470 = vpop.permute.xlu0 %1469
        %1472 = vset.pattern.permute.xlu0 2
        %1473 = vperm.xlu0 %1472, %v221
        %v1474 = vpop.permute.xlu0 %1473
        %1476 = vset.pattern.permute.xlu0 2
        %1477 = vperm.xlu0 %1476, %v222
        %v1478 = vpop.permute.xlu0 %1477
        %1480 = vset.pattern.permute.xlu0 2
        %1481 = vperm.xlu0 %1480, %v223
        %v1482 = vpop.permute.xlu0 %1481
        %1484 = vset.pattern.permute.xlu0 2
        %1485 = vperm.xlu0 %1484, %v224
        %v1486 = vpop.permute.xlu0 %1485
        %v1488 = vlaneseq
        %v1489 = vshrl.u32 %v1488, 7
        %v1490 = vsub.s32 2, %v1489
        %v1491 = vrot.slane %v308, %v1490
        %v1492 = vmul.f32 %v1362, %v1491
        %v1493 = vmul.f32 %v1366, %v1491
        %v1494 = vmul.f32 %v1370, %v1491
        %v1495 = vmul.f32 %v1374, %v1491
        %v1496 = vmul.f32 %v1378, %v1491
        %v1497 = vmul.f32 %v1382, %v1491
        %v1498 = vmul.f32 %v1386, %v1491
        %v1499 = vmul.f32 %v1390, %v1491
        %v1500 = vmul.f32 %v1394, %v1491
        %v1501 = vmul.f32 %v1398, %v1491
        %v1502 = vmul.f32 %v1402, %v1491
        %v1503 = vmul.f32 %v1406, %v1491
        %v1504 = vmul.f32 %v1410, %v1491
        %v1505 = vmul.f32 %v1414, %v1491
        %v1506 = vmul.f32 %v1418, %v1491
        %v1507 = vmul.f32 %v1422, %v1491
        %v1508 = vmul.f32 %v1426, %v1491
        %v1509 = vmul.f32 %v1430, %v1491
        %v1510 = vmul.f32 %v1434, %v1491
        %v1511 = vmul.f32 %v1438, %v1491
        %v1512 = vmul.f32 %v1442, %v1491
        %v1513 = vmul.f32 %v1446, %v1491
        %v1514 = vmul.f32 %v1450, %v1491
        %v1515 = vmul.f32 %v1454, %v1491
        %v1516 = vmul.f32 %v1458, %v1491
        %v1517 = vmul.f32 %v1462, %v1491
        %v1518 = vmul.f32 %v1466, %v1491
        %v1519 = vmul.f32 %v1470, %v1491
        %v1520 = vmul.f32 %v1474, %v1491
        %v1521 = vmul.f32 %v1478, %v1491
        %v1522 = vmul.f32 %v1482, %v1491
        %v1523 = vmul.f32 %v1486, %v1491
        %v1524 = vadd.f32 %v1328, %v1492
        %v1525 = vadd.f32 %v1329, %v1493
        %v1526 = vadd.f32 %v1330, %v1494
        %v1527 = vadd.f32 %v1331, %v1495
        %v1528 = vadd.f32 %v1332, %v1496
        %v1529 = vadd.f32 %v1333, %v1497
        %v1530 = vadd.f32 %v1334, %v1498
        %v1531 = vadd.f32 %v1335, %v1499
        %v1532 = vadd.f32 %v1336, %v1500
        %v1533 = vadd.f32 %v1337, %v1501
        %v1534 = vadd.f32 %v1338, %v1502
        %v1535 = vadd.f32 %v1339, %v1503
        %v1536 = vadd.f32 %v1340, %v1504
        %v1537 = vadd.f32 %v1341, %v1505
        %v1538 = vadd.f32 %v1342, %v1506
        %v1539 = vadd.f32 %v1343, %v1507
        %v1540 = vadd.f32 %v1344, %v1508
        %v1541 = vadd.f32 %v1345, %v1509
        %v1542 = vadd.f32 %v1346, %v1510
        %v1543 = vadd.f32 %v1347, %v1511
        %v1544 = vadd.f32 %v1348, %v1512
        %v1545 = vadd.f32 %v1349, %v1513
        %v1546 = vadd.f32 %v1350, %v1514
        %v1547 = vadd.f32 %v1351, %v1515
        %v1548 = vadd.f32 %v1352, %v1516
        %v1549 = vadd.f32 %v1353, %v1517
        %v1550 = vadd.f32 %v1354, %v1518
        %v1551 = vadd.f32 %v1355, %v1519
        %v1552 = vadd.f32 %v1356, %v1520
        %v1553 = vadd.f32 %v1357, %v1521
        %v1554 = vadd.f32 %v1358, %v1522
        %v1555 = vadd.f32 %v1359, %v1523
        %1557 = vset.pattern.permute.xlu0 0
        %1558 = vperm.xlu0 %1557, %v144
        %v1559 = vpop.permute.xlu0 %1558
        %1562 = vset.pattern.permute.xlu0 0
        %1563 = vperm.xlu0 %1562, %v147
        %v1564 = vpop.permute.xlu0 %1563
        %1567 = vset.pattern.permute.xlu0 0
        %1568 = vperm.xlu0 %1567, %v150
        %v1569 = vpop.permute.xlu0 %1568
        %1572 = vset.pattern.permute.xlu0 0
        %1573 = vperm.xlu0 %1572, %v153
        %v1574 = vpop.permute.xlu0 %1573
        %1577 = vset.pattern.permute.xlu0 0
        %1578 = vperm.xlu0 %1577, %v156
        %v1579 = vpop.permute.xlu0 %1578
        %1582 = vset.pattern.permute.xlu0 0
        %1583 = vperm.xlu0 %1582, %v159
        %v1584 = vpop.permute.xlu0 %1583
        %1587 = vset.pattern.permute.xlu0 0
        %1588 = vperm.xlu0 %1587, %v162
        %v1589 = vpop.permute.xlu0 %1588
        %1592 = vset.pattern.permute.xlu0 0
        %1593 = vperm.xlu0 %1592, %v165
        %v1594 = vpop.permute.xlu0 %1593
        %1597 = vset.pattern.permute.xlu0 0
        %1598 = vperm.xlu0 %1597, %v168
        %v1599 = vpop.permute.xlu0 %1598
        %1602 = vset.pattern.permute.xlu0 0
        %1603 = vperm.xlu0 %1602, %v171
        %v1604 = vpop.permute.xlu0 %1603
        %1607 = vset.pattern.permute.xlu0 0
        %1608 = vperm.xlu0 %1607, %v174
        %v1609 = vpop.permute.xlu0 %1608
        %1612 = vset.pattern.permute.xlu0 0
        %1613 = vperm.xlu0 %1612, %v177
        %v1614 = vpop.permute.xlu0 %1613
        %1617 = vset.pattern.permute.xlu0 0
        %1618 = vperm.xlu0 %1617, %v180
        %v1619 = vpop.permute.xlu0 %1618
        %1622 = vset.pattern.permute.xlu0 0
        %1623 = vperm.xlu0 %1622, %v183
        %v1624 = vpop.permute.xlu0 %1623
        %1627 = vset.pattern.permute.xlu0 0
        %1628 = vperm.xlu0 %1627, %v186
        %v1629 = vpop.permute.xlu0 %1628
        %1632 = vset.pattern.permute.xlu0 0
        %1633 = vperm.xlu0 %1632, %v189
        %v1634 = vpop.permute.xlu0 %1633
        %v1636 = vlaneseq
        %v1637 = vshrl.u32 %v1636, 7
        %v1638 = vsub.s32 0, %v1637
        %v1639 = vrot.slane %v309, %v1638
        %v1640 = vmul.f32 %v319, %v1639
        %v1641 = vmul.f32 %v324, %v1639
        %v1642 = vmul.f32 %v1559, %v1639
        %v1643 = vmul.f32 %v329, %v1639
        %v1644 = vmul.f32 %v334, %v1639
        %v1645 = vmul.f32 %v1564, %v1639
        %v1646 = vmul.f32 %v339, %v1639
        %v1647 = vmul.f32 %v344, %v1639
        %v1648 = vmul.f32 %v1569, %v1639
        %v1649 = vmul.f32 %v349, %v1639
        %v1650 = vmul.f32 %v354, %v1639
        %v1651 = vmul.f32 %v1574, %v1639
        %v1652 = vmul.f32 %v359, %v1639
        %v1653 = vmul.f32 %v364, %v1639
        %v1654 = vmul.f32 %v1579, %v1639
        %v1655 = vmul.f32 %v369, %v1639
        %v1656 = vmul.f32 %v374, %v1639
        %v1657 = vmul.f32 %v1584, %v1639
        %v1658 = vmul.f32 %v379, %v1639
        %v1659 = vmul.f32 %v384, %v1639
        %v1660 = vmul.f32 %v1589, %v1639
        %v1661 = vmul.f32 %v389, %v1639
        %v1662 = vmul.f32 %v394, %v1639
        %v1663 = vmul.f32 %v1594, %v1639
        %v1664 = vmul.f32 %v399, %v1639
        %v1665 = vmul.f32 %v404, %v1639
        %v1666 = vmul.f32 %v1599, %v1639
        %v1667 = vmul.f32 %v409, %v1639
        %v1668 = vmul.f32 %v414, %v1639
        %v1669 = vmul.f32 %v1604, %v1639
        %v1670 = vmul.f32 %v419, %v1639
        %v1671 = vmul.f32 %v424, %v1639
        %v1672 = vmul.f32 %v1609, %v1639
        %v1673 = vmul.f32 %v429, %v1639
        %v1674 = vmul.f32 %v434, %v1639
        %v1675 = vmul.f32 %v1614, %v1639
        %v1676 = vmul.f32 %v439, %v1639
        %v1677 = vmul.f32 %v444, %v1639
        %v1678 = vmul.f32 %v1619, %v1639
        %v1679 = vmul.f32 %v449, %v1639
        %v1680 = vmul.f32 %v454, %v1639
        %v1681 = vmul.f32 %v1624, %v1639
        %v1682 = vmul.f32 %v459, %v1639
        %v1683 = vmul.f32 %v464, %v1639
        %v1684 = vmul.f32 %v1629, %v1639
        %v1685 = vmul.f32 %v469, %v1639
        %v1686 = vmul.f32 %v474, %v1639
        %v1687 = vmul.f32 %v1634, %v1639
        %vm1736 = vcmask 1046528
        %v1737 = vrot.slane %v1640, 1
        %v1738 = vrot.slane %v1641, 1
        %v1739 = vsel %vm1736, %v1737, %v1738
        %v1740 = vrot.slane %v1642, 1
        %v1741 = vsel %vm1736, %v1738, %v1740
        %v1742 = vrot.slane %v1643, 1
        %v1743 = vrot.slane %v1644, 1
        %v1744 = vsel %vm1736, %v1742, %v1743
        %v1745 = vrot.slane %v1645, 1
        %v1746 = vsel %vm1736, %v1743, %v1745
        %v1747 = vrot.slane %v1646, 1
        %v1748 = vrot.slane %v1647, 1
        %v1749 = vsel %vm1736, %v1747, %v1748
        %v1750 = vrot.slane %v1648, 1
        %v1751 = vsel %vm1736, %v1748, %v1750
        %v1752 = vrot.slane %v1649, 1
        %v1753 = vrot.slane %v1650, 1
        %v1754 = vsel %vm1736, %v1752, %v1753
        %v1755 = vrot.slane %v1651, 1
        %v1756 = vsel %vm1736, %v1753, %v1755
        %v1757 = vrot.slane %v1652, 1
        %v1758 = vrot.slane %v1653, 1
        %v1759 = vsel %vm1736, %v1757, %v1758
        %v1760 = vrot.slane %v1654, 1
        %v1761 = vsel %vm1736, %v1758, %v1760
        %v1762 = vrot.slane %v1655, 1
        %v1763 = vrot.slane %v1656, 1
        %v1764 = vsel %vm1736, %v1762, %v1763
        %v1765 = vrot.slane %v1657, 1
        %v1766 = vsel %vm1736, %v1763, %v1765
        %v1767 = vrot.slane %v1658, 1
        %v1768 = vrot.slane %v1659, 1
        %v1769 = vsel %vm1736, %v1767, %v1768
        %v1770 = vrot.slane %v1660, 1
        %v1771 = vsel %vm1736, %v1768, %v1770
        %v1772 = vrot.slane %v1661, 1
        %v1773 = vrot.slane %v1662, 1
        %v1774 = vsel %vm1736, %v1772, %v1773
        %v1775 = vrot.slane %v1663, 1
        %v1776 = vsel %vm1736, %v1773, %v1775
        %v1777 = vrot.slane %v1664, 1
        %v1778 = vrot.slane %v1665, 1
        %v1779 = vsel %vm1736, %v1777, %v1778
        %v1780 = vrot.slane %v1666, 1
        %v1781 = vsel %vm1736, %v1778, %v1780
        %v1782 = vrot.slane %v1667, 1
        %v1783 = vrot.slane %v1668, 1
        %v1784 = vsel %vm1736, %v1782, %v1783
        %v1785 = vrot.slane %v1669, 1
        %v1786 = vsel %vm1736, %v1783, %v1785
        %v1787 = vrot.slane %v1670, 1
        %v1788 = vrot.slane %v1671, 1
        %v1789 = vsel %vm1736, %v1787, %v1788
        %v1790 = vrot.slane %v1672, 1
        %v1791 = vsel %vm1736, %v1788, %v1790
        %v1792 = vrot.slane %v1673, 1
        %v1793 = vrot.slane %v1674, 1
        %v1794 = vsel %vm1736, %v1792, %v1793
        %v1795 = vrot.slane %v1675, 1
        %v1796 = vsel %vm1736, %v1793, %v1795
        %v1797 = vrot.slane %v1676, 1
        %v1798 = vrot.slane %v1677, 1
        %v1799 = vsel %vm1736, %v1797, %v1798
        %v1800 = vrot.slane %v1678, 1
        %v1801 = vsel %vm1736, %v1798, %v1800
        %v1802 = vrot.slane %v1679, 1
        %v1803 = vrot.slane %v1680, 1
        %v1804 = vsel %vm1736, %v1802, %v1803
        %v1805 = vrot.slane %v1681, 1
        %v1806 = vsel %vm1736, %v1803, %v1805
        %v1807 = vrot.slane %v1682, 1
        %v1808 = vrot.slane %v1683, 1
        %v1809 = vsel %vm1736, %v1807, %v1808
        %v1810 = vrot.slane %v1684, 1
        %v1811 = vsel %vm1736, %v1808, %v1810
        %v1812 = vrot.slane %v1685, 1
        %v1813 = vrot.slane %v1686, 1
        %v1814 = vsel %vm1736, %v1812, %v1813
        %v1815 = vrot.slane %v1687, 1
        %v1816 = vsel %vm1736, %v1813, %v1815
        %v1849 = vadd.f32 %v1524, %v1739
        %v1850 = vadd.f32 %v1525, %v1741
        %v1851 = vadd.f32 %v1526, %v1744
        %v1852 = vadd.f32 %v1527, %v1746
        %v1853 = vadd.f32 %v1528, %v1749
        %v1854 = vadd.f32 %v1529, %v1751
        %v1855 = vadd.f32 %v1530, %v1754
        %v1856 = vadd.f32 %v1531, %v1756
        %v1857 = vadd.f32 %v1532, %v1759
        %v1858 = vadd.f32 %v1533, %v1761
        %v1859 = vadd.f32 %v1534, %v1764
        %v1860 = vadd.f32 %v1535, %v1766
        %v1861 = vadd.f32 %v1536, %v1769
        %v1862 = vadd.f32 %v1537, %v1771
        %v1863 = vadd.f32 %v1538, %v1774
        %v1864 = vadd.f32 %v1539, %v1776
        %v1865 = vadd.f32 %v1540, %v1779
        %v1866 = vadd.f32 %v1541, %v1781
        %v1867 = vadd.f32 %v1542, %v1784
        %v1868 = vadd.f32 %v1543, %v1786
        %v1869 = vadd.f32 %v1544, %v1789
        %v1870 = vadd.f32 %v1545, %v1791
        %v1871 = vadd.f32 %v1546, %v1794
        %v1872 = vadd.f32 %v1547, %v1796
        %v1873 = vadd.f32 %v1548, %v1799
        %v1874 = vadd.f32 %v1549, %v1801
        %v1875 = vadd.f32 %v1550, %v1804
        %v1876 = vadd.f32 %v1551, %v1806
        %v1877 = vadd.f32 %v1552, %v1809
        %v1878 = vadd.f32 %v1553, %v1811
        %v1879 = vadd.f32 %v1554, %v1814
        %v1880 = vadd.f32 %v1555, %v1816
        %1881 = vset.pattern.permute.xlu0 1
        %1882 = vperm.xlu0 %1881, %v144
        %v1883 = vpop.permute.xlu0 %1882
        %1885 = vset.pattern.permute.xlu0 1
        %1886 = vperm.xlu0 %1885, %v147
        %v1887 = vpop.permute.xlu0 %1886
        %1889 = vset.pattern.permute.xlu0 1
        %1890 = vperm.xlu0 %1889, %v150
        %v1891 = vpop.permute.xlu0 %1890
        %1893 = vset.pattern.permute.xlu0 1
        %1894 = vperm.xlu0 %1893, %v153
        %v1895 = vpop.permute.xlu0 %1894
        %1897 = vset.pattern.permute.xlu0 1
        %1898 = vperm.xlu0 %1897, %v156
        %v1899 = vpop.permute.xlu0 %1898
        %1901 = vset.pattern.permute.xlu0 1
        %1902 = vperm.xlu0 %1901, %v159
        %v1903 = vpop.permute.xlu0 %1902
        %1905 = vset.pattern.permute.xlu0 1
        %1906 = vperm.xlu0 %1905, %v162
        %v1907 = vpop.permute.xlu0 %1906
        %1909 = vset.pattern.permute.xlu0 1
        %1910 = vperm.xlu0 %1909, %v165
        %v1911 = vpop.permute.xlu0 %1910
        %1913 = vset.pattern.permute.xlu0 1
        %1914 = vperm.xlu0 %1913, %v168
        %v1915 = vpop.permute.xlu0 %1914
        %1917 = vset.pattern.permute.xlu0 1
        %1918 = vperm.xlu0 %1917, %v171
        %v1919 = vpop.permute.xlu0 %1918
        %1921 = vset.pattern.permute.xlu0 1
        %1922 = vperm.xlu0 %1921, %v174
        %v1923 = vpop.permute.xlu0 %1922
        %1925 = vset.pattern.permute.xlu0 1
        %1926 = vperm.xlu0 %1925, %v177
        %v1927 = vpop.permute.xlu0 %1926
        %1929 = vset.pattern.permute.xlu0 1
        %1930 = vperm.xlu0 %1929, %v180
        %v1931 = vpop.permute.xlu0 %1930
        %1933 = vset.pattern.permute.xlu0 1
        %1934 = vperm.xlu0 %1933, %v183
        %v1935 = vpop.permute.xlu0 %1934
        %1937 = vset.pattern.permute.xlu0 1
        %1938 = vperm.xlu0 %1937, %v186
        %v1939 = vpop.permute.xlu0 %1938
        %1941 = vset.pattern.permute.xlu0 1
        %1942 = vperm.xlu0 %1941, %v189
        %v1943 = vpop.permute.xlu0 %1942
        %v1945 = vlaneseq
        %v1946 = vshrl.u32 %v1945, 7
        %v1947 = vsub.s32 1, %v1946
        %v1948 = vrot.slane %v309, %v1947
        %v1949 = vmul.f32 %v546, %v1948
        %v1950 = vmul.f32 %v550, %v1948
        %v1951 = vmul.f32 %v1883, %v1948
        %v1952 = vmul.f32 %v554, %v1948
        %v1953 = vmul.f32 %v558, %v1948
        %v1954 = vmul.f32 %v1887, %v1948
        %v1955 = vmul.f32 %v562, %v1948
        %v1956 = vmul.f32 %v566, %v1948
        %v1957 = vmul.f32 %v1891, %v1948
        %v1958 = vmul.f32 %v570, %v1948
        %v1959 = vmul.f32 %v574, %v1948
        %v1960 = vmul.f32 %v1895, %v1948
        %v1961 = vmul.f32 %v578, %v1948
        %v1962 = vmul.f32 %v582, %v1948
        %v1963 = vmul.f32 %v1899, %v1948
        %v1964 = vmul.f32 %v586, %v1948
        %v1965 = vmul.f32 %v590, %v1948
        %v1966 = vmul.f32 %v1903, %v1948
        %v1967 = vmul.f32 %v594, %v1948
        %v1968 = vmul.f32 %v598, %v1948
        %v1969 = vmul.f32 %v1907, %v1948
        %v1970 = vmul.f32 %v602, %v1948
        %v1971 = vmul.f32 %v606, %v1948
        %v1972 = vmul.f32 %v1911, %v1948
        %v1973 = vmul.f32 %v610, %v1948
        %v1974 = vmul.f32 %v614, %v1948
        %v1975 = vmul.f32 %v1915, %v1948
        %v1976 = vmul.f32 %v618, %v1948
        %v1977 = vmul.f32 %v622, %v1948
        %v1978 = vmul.f32 %v1919, %v1948
        %v1979 = vmul.f32 %v626, %v1948
        %v1980 = vmul.f32 %v630, %v1948
        %v1981 = vmul.f32 %v1923, %v1948
        %v1982 = vmul.f32 %v634, %v1948
        %v1983 = vmul.f32 %v638, %v1948
        %v1984 = vmul.f32 %v1927, %v1948
        %v1985 = vmul.f32 %v642, %v1948
        %v1986 = vmul.f32 %v646, %v1948
        %v1987 = vmul.f32 %v1931, %v1948
        %v1988 = vmul.f32 %v650, %v1948
        %v1989 = vmul.f32 %v654, %v1948
        %v1990 = vmul.f32 %v1935, %v1948
        %v1991 = vmul.f32 %v658, %v1948
        %v1992 = vmul.f32 %v662, %v1948
        %v1993 = vmul.f32 %v1939, %v1948
        %v1994 = vmul.f32 %v666, %v1948
        %v1995 = vmul.f32 %v670, %v1948
        %v1996 = vmul.f32 %v1943, %v1948
        %v2045 = vrot.slane %v1949, 1
        %v2046 = vrot.slane %v1950, 1
        %v2047 = vsel %vm1736, %v2045, %v2046
        %v2048 = vrot.slane %v1951, 1
        %v2049 = vsel %vm1736, %v2046, %v2048
        %v2050 = vrot.slane %v1952, 1
        %v2051 = vrot.slane %v1953, 1
        %v2052 = vsel %vm1736, %v2050, %v2051
        %v2053 = vrot.slane %v1954, 1
        %v2054 = vsel %vm1736, %v2051, %v2053
        %v2055 = vrot.slane %v1955, 1
        %v2056 = vrot.slane %v1956, 1
        %v2057 = vsel %vm1736, %v2055, %v2056
        %v2058 = vrot.slane %v1957, 1
        %v2059 = vsel %vm1736, %v2056, %v2058
        %v2060 = vrot.slane %v1958, 1
        %v2061 = vrot.slane %v1959, 1
        %v2062 = vsel %vm1736, %v2060, %v2061
        %v2063 = vrot.slane %v1960, 1
        %v2064 = vsel %vm1736, %v2061, %v2063
        %v2065 = vrot.slane %v1961, 1
        %v2066 = vrot.slane %v1962, 1
        %v2067 = vsel %vm1736, %v2065, %v2066
        %v2068 = vrot.slane %v1963, 1
        %v2069 = vsel %vm1736, %v2066, %v2068
        %v2070 = vrot.slane %v1964, 1
        %v2071 = vrot.slane %v1965, 1
        %v2072 = vsel %vm1736, %v2070, %v2071
        %v2073 = vrot.slane %v1966, 1
        %v2074 = vsel %vm1736, %v2071, %v2073
        %v2075 = vrot.slane %v1967, 1
        %v2076 = vrot.slane %v1968, 1
        %v2077 = vsel %vm1736, %v2075, %v2076
        %v2078 = vrot.slane %v1969, 1
        %v2079 = vsel %vm1736, %v2076, %v2078
        %v2080 = vrot.slane %v1970, 1
        %v2081 = vrot.slane %v1971, 1
        %v2082 = vsel %vm1736, %v2080, %v2081
        %v2083 = vrot.slane %v1972, 1
        %v2084 = vsel %vm1736, %v2081, %v2083
        %v2085 = vrot.slane %v1973, 1
        %v2086 = vrot.slane %v1974, 1
        %v2087 = vsel %vm1736, %v2085, %v2086
        %v2088 = vrot.slane %v1975, 1
        %v2089 = vsel %vm1736, %v2086, %v2088
        %v2090 = vrot.slane %v1976, 1
        %v2091 = vrot.slane %v1977, 1
        %v2092 = vsel %vm1736, %v2090, %v2091
        %v2093 = vrot.slane %v1978, 1
        %v2094 = vsel %vm1736, %v2091, %v2093
        %v2095 = vrot.slane %v1979, 1
        %v2096 = vrot.slane %v1980, 1
        %v2097 = vsel %vm1736, %v2095, %v2096
        %v2098 = vrot.slane %v1981, 1
        %v2099 = vsel %vm1736, %v2096, %v2098
        %v2100 = vrot.slane %v1982, 1
        %v2101 = vrot.slane %v1983, 1
        %v2102 = vsel %vm1736, %v2100, %v2101
        %v2103 = vrot.slane %v1984, 1
        %v2104 = vsel %vm1736, %v2101, %v2103
        %v2105 = vrot.slane %v1985, 1
        %v2106 = vrot.slane %v1986, 1
        %v2107 = vsel %vm1736, %v2105, %v2106
        %v2108 = vrot.slane %v1987, 1
        %v2109 = vsel %vm1736, %v2106, %v2108
        %v2110 = vrot.slane %v1988, 1
        %v2111 = vrot.slane %v1989, 1
        %v2112 = vsel %vm1736, %v2110, %v2111
        %v2113 = vrot.slane %v1990, 1
        %v2114 = vsel %vm1736, %v2111, %v2113
        %v2115 = vrot.slane %v1991, 1
        %v2116 = vrot.slane %v1992, 1
        %v2117 = vsel %vm1736, %v2115, %v2116
        %v2118 = vrot.slane %v1993, 1
        %v2119 = vsel %vm1736, %v2116, %v2118
        %v2120 = vrot.slane %v1994, 1
        %v2121 = vrot.slane %v1995, 1
        %v2122 = vsel %vm1736, %v2120, %v2121
        %v2123 = vrot.slane %v1996, 1
        %v2124 = vsel %vm1736, %v2121, %v2123
        %v2157 = vadd.f32 %v1849, %v2047
        %v2158 = vadd.f32 %v1850, %v2049
        %v2159 = vadd.f32 %v1851, %v2052
        %v2160 = vadd.f32 %v1852, %v2054
        %v2161 = vadd.f32 %v1853, %v2057
        %v2162 = vadd.f32 %v1854, %v2059
        %v2163 = vadd.f32 %v1855, %v2062
        %v2164 = vadd.f32 %v1856, %v2064
        %v2165 = vadd.f32 %v1857, %v2067
        %v2166 = vadd.f32 %v1858, %v2069
        %v2167 = vadd.f32 %v1859, %v2072
        %v2168 = vadd.f32 %v1860, %v2074
        %v2169 = vadd.f32 %v1861, %v2077
        %v2170 = vadd.f32 %v1862, %v2079
        %v2171 = vadd.f32 %v1863, %v2082
        %v2172 = vadd.f32 %v1864, %v2084
        %v2173 = vadd.f32 %v1865, %v2087
        %v2174 = vadd.f32 %v1866, %v2089
        %v2175 = vadd.f32 %v1867, %v2092
        %v2176 = vadd.f32 %v1868, %v2094
        %v2177 = vadd.f32 %v1869, %v2097
        %v2178 = vadd.f32 %v1870, %v2099
        %v2179 = vadd.f32 %v1871, %v2102
        %v2180 = vadd.f32 %v1872, %v2104
        %v2181 = vadd.f32 %v1873, %v2107
        %v2182 = vadd.f32 %v1874, %v2109
        %v2183 = vadd.f32 %v1875, %v2112
        %v2184 = vadd.f32 %v1876, %v2114
        %v2185 = vadd.f32 %v1877, %v2117
        %v2186 = vadd.f32 %v1878, %v2119
        %v2187 = vadd.f32 %v1879, %v2122
        %v2188 = vadd.f32 %v1880, %v2124
        %2189 = vset.pattern.permute.xlu0 2
        %2190 = vperm.xlu0 %2189, %v144
        %v2191 = vpop.permute.xlu0 %2190
        %2193 = vset.pattern.permute.xlu0 2
        %2194 = vperm.xlu0 %2193, %v147
        %v2195 = vpop.permute.xlu0 %2194
        %2197 = vset.pattern.permute.xlu0 2
        %2198 = vperm.xlu0 %2197, %v150
        %v2199 = vpop.permute.xlu0 %2198
        %2201 = vset.pattern.permute.xlu0 2
        %2202 = vperm.xlu0 %2201, %v153
        %v2203 = vpop.permute.xlu0 %2202
        %2205 = vset.pattern.permute.xlu0 2
        %2206 = vperm.xlu0 %2205, %v156
        %v2207 = vpop.permute.xlu0 %2206
        %2209 = vset.pattern.permute.xlu0 2
        %2210 = vperm.xlu0 %2209, %v159
        %v2211 = vpop.permute.xlu0 %2210
        %2213 = vset.pattern.permute.xlu0 2
        %2214 = vperm.xlu0 %2213, %v162
        %v2215 = vpop.permute.xlu0 %2214
        %2217 = vset.pattern.permute.xlu0 2
        %2218 = vperm.xlu0 %2217, %v165
        %v2219 = vpop.permute.xlu0 %2218
        %2221 = vset.pattern.permute.xlu0 2
        %2222 = vperm.xlu0 %2221, %v168
        %v2223 = vpop.permute.xlu0 %2222
        %2225 = vset.pattern.permute.xlu0 2
        %2226 = vperm.xlu0 %2225, %v171
        %v2227 = vpop.permute.xlu0 %2226
        %2229 = vset.pattern.permute.xlu0 2
        %2230 = vperm.xlu0 %2229, %v174
        %v2231 = vpop.permute.xlu0 %2230
        %2233 = vset.pattern.permute.xlu0 2
        %2234 = vperm.xlu0 %2233, %v177
        %v2235 = vpop.permute.xlu0 %2234
        %2237 = vset.pattern.permute.xlu0 2
        %2238 = vperm.xlu0 %2237, %v180
        %v2239 = vpop.permute.xlu0 %2238
        %2241 = vset.pattern.permute.xlu0 2
        %2242 = vperm.xlu0 %2241, %v183
        %v2243 = vpop.permute.xlu0 %2242
        %2245 = vset.pattern.permute.xlu0 2
        %2246 = vperm.xlu0 %2245, %v186
        %v2247 = vpop.permute.xlu0 %2246
        %2249 = vset.pattern.permute.xlu0 2
        %2250 = vperm.xlu0 %2249, %v189
        %v2251 = vpop.permute.xlu0 %2250
        %v2253 = vlaneseq
        %v2254 = vshrl.u32 %v2253, 7
        %v2255 = vsub.s32 2, %v2254
        %v2256 = vrot.slane %v309, %v2255
        %v2257 = vmul.f32 %v742, %v2256
        %v2258 = vmul.f32 %v746, %v2256
        %v2259 = vmul.f32 %v2191, %v2256
        %v2260 = vmul.f32 %v750, %v2256
        %v2261 = vmul.f32 %v754, %v2256
        %v2262 = vmul.f32 %v2195, %v2256
        %v2263 = vmul.f32 %v758, %v2256
        %v2264 = vmul.f32 %v762, %v2256
        %v2265 = vmul.f32 %v2199, %v2256
        %v2266 = vmul.f32 %v766, %v2256
        %v2267 = vmul.f32 %v770, %v2256
        %v2268 = vmul.f32 %v2203, %v2256
        %v2269 = vmul.f32 %v774, %v2256
        %v2270 = vmul.f32 %v778, %v2256
        %v2271 = vmul.f32 %v2207, %v2256
        %v2272 = vmul.f32 %v782, %v2256
        %v2273 = vmul.f32 %v786, %v2256
        %v2274 = vmul.f32 %v2211, %v2256
        %v2275 = vmul.f32 %v790, %v2256
        %v2276 = vmul.f32 %v794, %v2256
        %v2277 = vmul.f32 %v2215, %v2256
        %v2278 = vmul.f32 %v798, %v2256
        %v2279 = vmul.f32 %v802, %v2256
        %v2280 = vmul.f32 %v2219, %v2256
        %v2281 = vmul.f32 %v806, %v2256
        %v2282 = vmul.f32 %v810, %v2256
        %v2283 = vmul.f32 %v2223, %v2256
        %v2284 = vmul.f32 %v814, %v2256
        %v2285 = vmul.f32 %v818, %v2256
        %v2286 = vmul.f32 %v2227, %v2256
        %v2287 = vmul.f32 %v822, %v2256
        %v2288 = vmul.f32 %v826, %v2256
        %v2289 = vmul.f32 %v2231, %v2256
        %v2290 = vmul.f32 %v830, %v2256
        %v2291 = vmul.f32 %v834, %v2256
        %v2292 = vmul.f32 %v2235, %v2256
        %v2293 = vmul.f32 %v838, %v2256
        %v2294 = vmul.f32 %v842, %v2256
        %v2295 = vmul.f32 %v2239, %v2256
        %v2296 = vmul.f32 %v846, %v2256
        %v2297 = vmul.f32 %v850, %v2256
        %v2298 = vmul.f32 %v2243, %v2256
        %v2299 = vmul.f32 %v854, %v2256
        %v2300 = vmul.f32 %v858, %v2256
        %v2301 = vmul.f32 %v2247, %v2256
        %v2302 = vmul.f32 %v862, %v2256
        %v2303 = vmul.f32 %v866, %v2256
        %v2304 = vmul.f32 %v2251, %v2256
        %v2353 = vrot.slane %v2257, 1
        %v2354 = vrot.slane %v2258, 1
        %v2355 = vsel %vm1736, %v2353, %v2354
        %v2356 = vrot.slane %v2259, 1
        %v2357 = vsel %vm1736, %v2354, %v2356
        %v2358 = vrot.slane %v2260, 1
        %v2359 = vrot.slane %v2261, 1
        %v2360 = vsel %vm1736, %v2358, %v2359
        %v2361 = vrot.slane %v2262, 1
        %v2362 = vsel %vm1736, %v2359, %v2361
        %v2363 = vrot.slane %v2263, 1
        %v2364 = vrot.slane %v2264, 1
        %v2365 = vsel %vm1736, %v2363, %v2364
        %v2366 = vrot.slane %v2265, 1
        %v2367 = vsel %vm1736, %v2364, %v2366
        %v2368 = vrot.slane %v2266, 1
        %v2369 = vrot.slane %v2267, 1
        %v2370 = vsel %vm1736, %v2368, %v2369
        %v2371 = vrot.slane %v2268, 1
        %v2372 = vsel %vm1736, %v2369, %v2371
        %v2373 = vrot.slane %v2269, 1
        %v2374 = vrot.slane %v2270, 1
        %v2375 = vsel %vm1736, %v2373, %v2374
        %v2376 = vrot.slane %v2271, 1
        %v2377 = vsel %vm1736, %v2374, %v2376
        %v2378 = vrot.slane %v2272, 1
        %v2379 = vrot.slane %v2273, 1
        %v2380 = vsel %vm1736, %v2378, %v2379
        %v2381 = vrot.slane %v2274, 1
        %v2382 = vsel %vm1736, %v2379, %v2381
        %v2383 = vrot.slane %v2275, 1
        %v2384 = vrot.slane %v2276, 1
        %v2385 = vsel %vm1736, %v2383, %v2384
        %v2386 = vrot.slane %v2277, 1
        %v2387 = vsel %vm1736, %v2384, %v2386
        %v2388 = vrot.slane %v2278, 1
        %v2389 = vrot.slane %v2279, 1
        %v2390 = vsel %vm1736, %v2388, %v2389
        %v2391 = vrot.slane %v2280, 1
        %v2392 = vsel %vm1736, %v2389, %v2391
        %v2393 = vrot.slane %v2281, 1
        %v2394 = vrot.slane %v2282, 1
        %v2395 = vsel %vm1736, %v2393, %v2394
        %v2396 = vrot.slane %v2283, 1
        %v2397 = vsel %vm1736, %v2394, %v2396
        %v2398 = vrot.slane %v2284, 1
        %v2399 = vrot.slane %v2285, 1
        %v2400 = vsel %vm1736, %v2398, %v2399
        %v2401 = vrot.slane %v2286, 1
        %v2402 = vsel %vm1736, %v2399, %v2401
        %v2403 = vrot.slane %v2287, 1
        %v2404 = vrot.slane %v2288, 1
        %v2405 = vsel %vm1736, %v2403, %v2404
        %v2406 = vrot.slane %v2289, 1
        %v2407 = vsel %vm1736, %v2404, %v2406
        %v2408 = vrot.slane %v2290, 1
        %v2409 = vrot.slane %v2291, 1
        %v2410 = vsel %vm1736, %v2408, %v2409
        %v2411 = vrot.slane %v2292, 1
        %v2412 = vsel %vm1736, %v2409, %v2411
        %v2413 = vrot.slane %v2293, 1
        %v2414 = vrot.slane %v2294, 1
        %v2415 = vsel %vm1736, %v2413, %v2414
        %v2416 = vrot.slane %v2295, 1
        %v2417 = vsel %vm1736, %v2414, %v2416
        %v2418 = vrot.slane %v2296, 1
        %v2419 = vrot.slane %v2297, 1
        %v2420 = vsel %vm1736, %v2418, %v2419
        %v2421 = vrot.slane %v2298, 1
        %v2422 = vsel %vm1736, %v2419, %v2421
        %v2423 = vrot.slane %v2299, 1
        %v2424 = vrot.slane %v2300, 1
        %v2425 = vsel %vm1736, %v2423, %v2424
        %v2426 = vrot.slane %v2301, 1
        %v2427 = vsel %vm1736, %v2424, %v2426
        %v2428 = vrot.slane %v2302, 1
        %v2429 = vrot.slane %v2303, 1
        %v2430 = vsel %vm1736, %v2428, %v2429
        %v2431 = vrot.slane %v2304, 1
        %v2432 = vsel %vm1736, %v2429, %v2431
        %v2465 = vadd.f32 %v2157, %v2355
        %v2466 = vadd.f32 %v2158, %v2357
        %v2467 = vadd.f32 %v2159, %v2360
        %v2468 = vadd.f32 %v2160, %v2362
        %v2469 = vadd.f32 %v2161, %v2365
        %v2470 = vadd.f32 %v2162, %v2367
        %v2471 = vadd.f32 %v2163, %v2370
        %v2472 = vadd.f32 %v2164, %v2372
        %v2473 = vadd.f32 %v2165, %v2375
        %v2474 = vadd.f32 %v2166, %v2377
        %v2475 = vadd.f32 %v2167, %v2380
        %v2476 = vadd.f32 %v2168, %v2382
        %v2477 = vadd.f32 %v2169, %v2385
        %v2478 = vadd.f32 %v2170, %v2387
        %v2479 = vadd.f32 %v2171, %v2390
        %v2480 = vadd.f32 %v2172, %v2392
        %v2481 = vadd.f32 %v2173, %v2395
        %v2482 = vadd.f32 %v2174, %v2397
        %v2483 = vadd.f32 %v2175, %v2400
        %v2484 = vadd.f32 %v2176, %v2402
        %v2485 = vadd.f32 %v2177, %v2405
        %v2486 = vadd.f32 %v2178, %v2407
        %v2487 = vadd.f32 %v2179, %v2410
        %v2488 = vadd.f32 %v2180, %v2412
        %v2489 = vadd.f32 %v2181, %v2415
        %v2490 = vadd.f32 %v2182, %v2417
        %v2491 = vadd.f32 %v2183, %v2420
        %v2492 = vadd.f32 %v2184, %v2422
        %v2493 = vadd.f32 %v2185, %v2425
        %v2494 = vadd.f32 %v2186, %v2427
        %v2495 = vadd.f32 %v2187, %v2430
        %v2496 = vadd.f32 %v2188, %v2432
        %2498 = vset.pattern.permute.xlu0 0
        %2499 = vperm.xlu0 %2498, %v227
        %v2500 = vpop.permute.xlu0 %2499
        %2503 = vset.pattern.permute.xlu0 0
        %2504 = vperm.xlu0 %2503, %v228
        %v2505 = vpop.permute.xlu0 %2504
        %2508 = vset.pattern.permute.xlu0 0
        %2509 = vperm.xlu0 %2508, %v230
        %v2510 = vpop.permute.xlu0 %2509
        %2513 = vset.pattern.permute.xlu0 0
        %2514 = vperm.xlu0 %2513, %v231
        %v2515 = vpop.permute.xlu0 %2514
        %2518 = vset.pattern.permute.xlu0 0
        %2519 = vperm.xlu0 %2518, %v233
        %v2520 = vpop.permute.xlu0 %2519
        %2523 = vset.pattern.permute.xlu0 0
        %2524 = vperm.xlu0 %2523, %v234
        %v2525 = vpop.permute.xlu0 %2524
        %2528 = vset.pattern.permute.xlu0 0
        %2529 = vperm.xlu0 %2528, %v236
        %v2530 = vpop.permute.xlu0 %2529
        %2533 = vset.pattern.permute.xlu0 0
        %2534 = vperm.xlu0 %2533, %v237
        %v2535 = vpop.permute.xlu0 %2534
        %2538 = vset.pattern.permute.xlu0 0
        %2539 = vperm.xlu0 %2538, %v239
        %v2540 = vpop.permute.xlu0 %2539
        %2543 = vset.pattern.permute.xlu0 0
        %2544 = vperm.xlu0 %2543, %v240
        %v2545 = vpop.permute.xlu0 %2544
        %2548 = vset.pattern.permute.xlu0 0
        %2549 = vperm.xlu0 %2548, %v242
        %v2550 = vpop.permute.xlu0 %2549
        %2553 = vset.pattern.permute.xlu0 0
        %2554 = vperm.xlu0 %2553, %v243
        %v2555 = vpop.permute.xlu0 %2554
        %2558 = vset.pattern.permute.xlu0 0
        %2559 = vperm.xlu0 %2558, %v245
        %v2560 = vpop.permute.xlu0 %2559
        %2563 = vset.pattern.permute.xlu0 0
        %2564 = vperm.xlu0 %2563, %v246
        %v2565 = vpop.permute.xlu0 %2564
        %2568 = vset.pattern.permute.xlu0 0
        %2569 = vperm.xlu0 %2568, %v248
        %v2570 = vpop.permute.xlu0 %2569
        %2573 = vset.pattern.permute.xlu0 0
        %2574 = vperm.xlu0 %2573, %v249
        %v2575 = vpop.permute.xlu0 %2574
        %2578 = vset.pattern.permute.xlu0 0
        %2579 = vperm.xlu0 %2578, %v251
        %v2580 = vpop.permute.xlu0 %2579
        %2583 = vset.pattern.permute.xlu0 0
        %2584 = vperm.xlu0 %2583, %v252
        %v2585 = vpop.permute.xlu0 %2584
        %2588 = vset.pattern.permute.xlu0 0
        %2589 = vperm.xlu0 %2588, %v254
        %v2590 = vpop.permute.xlu0 %2589
        %2593 = vset.pattern.permute.xlu0 0
        %2594 = vperm.xlu0 %2593, %v255
        %v2595 = vpop.permute.xlu0 %2594
        %2598 = vset.pattern.permute.xlu0 0
        %2599 = vperm.xlu0 %2598, %v257
        %v2600 = vpop.permute.xlu0 %2599
        %2603 = vset.pattern.permute.xlu0 0
        %2604 = vperm.xlu0 %2603, %v258
        %v2605 = vpop.permute.xlu0 %2604
        %2608 = vset.pattern.permute.xlu0 0
        %2609 = vperm.xlu0 %2608, %v260
        %v2610 = vpop.permute.xlu0 %2609
        %2613 = vset.pattern.permute.xlu0 0
        %2614 = vperm.xlu0 %2613, %v261
        %v2615 = vpop.permute.xlu0 %2614
        %2618 = vset.pattern.permute.xlu0 0
        %2619 = vperm.xlu0 %2618, %v263
        %v2620 = vpop.permute.xlu0 %2619
        %2623 = vset.pattern.permute.xlu0 0
        %2624 = vperm.xlu0 %2623, %v264
        %v2625 = vpop.permute.xlu0 %2624
        %2628 = vset.pattern.permute.xlu0 0
        %2629 = vperm.xlu0 %2628, %v266
        %v2630 = vpop.permute.xlu0 %2629
        %2633 = vset.pattern.permute.xlu0 0
        %2634 = vperm.xlu0 %2633, %v267
        %v2635 = vpop.permute.xlu0 %2634
        %2638 = vset.pattern.permute.xlu0 0
        %2639 = vperm.xlu0 %2638, %v269
        %v2640 = vpop.permute.xlu0 %2639
        %2643 = vset.pattern.permute.xlu0 0
        %2644 = vperm.xlu0 %2643, %v270
        %v2645 = vpop.permute.xlu0 %2644
        %2648 = vset.pattern.permute.xlu0 0
        %2649 = vperm.xlu0 %2648, %v272
        %v2650 = vpop.permute.xlu0 %2649
        %2653 = vset.pattern.permute.xlu0 0
        %2654 = vperm.xlu0 %2653, %v273
        %v2655 = vpop.permute.xlu0 %2654
        %v2657 = vlaneseq
        %v2658 = vshrl.u32 %v2657, 7
        %v2659 = vsub.s32 0, %v2658
        %v2660 = vrot.slane %v310, %v2659
        %v2661 = vmul.f32 %v2500, %v2660
        %v2662 = vmul.f32 %v2505, %v2660
        %v2663 = vmul.f32 %v2510, %v2660
        %v2664 = vmul.f32 %v2515, %v2660
        %v2665 = vmul.f32 %v2520, %v2660
        %v2666 = vmul.f32 %v2525, %v2660
        %v2667 = vmul.f32 %v2530, %v2660
        %v2668 = vmul.f32 %v2535, %v2660
        %v2669 = vmul.f32 %v2540, %v2660
        %v2670 = vmul.f32 %v2545, %v2660
        %v2671 = vmul.f32 %v2550, %v2660
        %v2672 = vmul.f32 %v2555, %v2660
        %v2673 = vmul.f32 %v2560, %v2660
        %v2674 = vmul.f32 %v2565, %v2660
        %v2675 = vmul.f32 %v2570, %v2660
        %v2676 = vmul.f32 %v2575, %v2660
        %v2677 = vmul.f32 %v2580, %v2660
        %v2678 = vmul.f32 %v2585, %v2660
        %v2679 = vmul.f32 %v2590, %v2660
        %v2680 = vmul.f32 %v2595, %v2660
        %v2681 = vmul.f32 %v2600, %v2660
        %v2682 = vmul.f32 %v2605, %v2660
        %v2683 = vmul.f32 %v2610, %v2660
        %v2684 = vmul.f32 %v2615, %v2660
        %v2685 = vmul.f32 %v2620, %v2660
        %v2686 = vmul.f32 %v2625, %v2660
        %v2687 = vmul.f32 %v2630, %v2660
        %v2688 = vmul.f32 %v2635, %v2660
        %v2689 = vmul.f32 %v2640, %v2660
        %v2690 = vmul.f32 %v2645, %v2660
        %v2691 = vmul.f32 %v2650, %v2660
        %v2692 = vmul.f32 %v2655, %v2660
        %v2693 = vadd.f32 %v2465, %v2661
        %v2694 = vadd.f32 %v2466, %v2662
        %v2695 = vadd.f32 %v2467, %v2663
        %v2696 = vadd.f32 %v2468, %v2664
        %v2697 = vadd.f32 %v2469, %v2665
        %v2698 = vadd.f32 %v2470, %v2666
        %v2699 = vadd.f32 %v2471, %v2667
        %v2700 = vadd.f32 %v2472, %v2668
        %v2701 = vadd.f32 %v2473, %v2669
        %v2702 = vadd.f32 %v2474, %v2670
        %v2703 = vadd.f32 %v2475, %v2671
        %v2704 = vadd.f32 %v2476, %v2672
        %v2705 = vadd.f32 %v2477, %v2673
        %v2706 = vadd.f32 %v2478, %v2674
        %v2707 = vadd.f32 %v2479, %v2675
        %v2708 = vadd.f32 %v2480, %v2676
        %v2709 = vadd.f32 %v2481, %v2677
        %v2710 = vadd.f32 %v2482, %v2678
        %v2711 = vadd.f32 %v2483, %v2679
        %v2712 = vadd.f32 %v2484, %v2680
        %v2713 = vadd.f32 %v2485, %v2681
        %v2714 = vadd.f32 %v2486, %v2682
        %v2715 = vadd.f32 %v2487, %v2683
        %v2716 = vadd.f32 %v2488, %v2684
        %v2717 = vadd.f32 %v2489, %v2685
        %v2718 = vadd.f32 %v2490, %v2686
        %v2719 = vadd.f32 %v2491, %v2687
        %v2720 = vadd.f32 %v2492, %v2688
        %v2721 = vadd.f32 %v2493, %v2689
        %v2722 = vadd.f32 %v2494, %v2690
        %v2723 = vadd.f32 %v2495, %v2691
        %v2724 = vadd.f32 %v2496, %v2692
        %2725 = vset.pattern.permute.xlu0 1
        %2726 = vperm.xlu0 %2725, %v227
        %v2727 = vpop.permute.xlu0 %2726
        %2729 = vset.pattern.permute.xlu0 1
        %2730 = vperm.xlu0 %2729, %v228
        %v2731 = vpop.permute.xlu0 %2730
        %2733 = vset.pattern.permute.xlu0 1
        %2734 = vperm.xlu0 %2733, %v230
        %v2735 = vpop.permute.xlu0 %2734
        %2737 = vset.pattern.permute.xlu0 1
        %2738 = vperm.xlu0 %2737, %v231
        %v2739 = vpop.permute.xlu0 %2738
        %2741 = vset.pattern.permute.xlu0 1
        %2742 = vperm.xlu0 %2741, %v233
        %v2743 = vpop.permute.xlu0 %2742
        %2745 = vset.pattern.permute.xlu0 1
        %2746 = vperm.xlu0 %2745, %v234
        %v2747 = vpop.permute.xlu0 %2746
        %2749 = vset.pattern.permute.xlu0 1
        %2750 = vperm.xlu0 %2749, %v236
        %v2751 = vpop.permute.xlu0 %2750
        %2753 = vset.pattern.permute.xlu0 1
        %2754 = vperm.xlu0 %2753, %v237
        %v2755 = vpop.permute.xlu0 %2754
        %2757 = vset.pattern.permute.xlu0 1
        %2758 = vperm.xlu0 %2757, %v239
        %v2759 = vpop.permute.xlu0 %2758
        %2761 = vset.pattern.permute.xlu0 1
        %2762 = vperm.xlu0 %2761, %v240
        %v2763 = vpop.permute.xlu0 %2762
        %2765 = vset.pattern.permute.xlu0 1
        %2766 = vperm.xlu0 %2765, %v242
        %v2767 = vpop.permute.xlu0 %2766
        %2769 = vset.pattern.permute.xlu0 1
        %2770 = vperm.xlu0 %2769, %v243
        %v2771 = vpop.permute.xlu0 %2770
        %2773 = vset.pattern.permute.xlu0 1
        %2774 = vperm.xlu0 %2773, %v245
        %v2775 = vpop.permute.xlu0 %2774
        %2777 = vset.pattern.permute.xlu0 1
        %2778 = vperm.xlu0 %2777, %v246
        %v2779 = vpop.permute.xlu0 %2778
        %2781 = vset.pattern.permute.xlu0 1
        %2782 = vperm.xlu0 %2781, %v248
        %v2783 = vpop.permute.xlu0 %2782
        %2785 = vset.pattern.permute.xlu0 1
        %2786 = vperm.xlu0 %2785, %v249
        %v2787 = vpop.permute.xlu0 %2786
        %2789 = vset.pattern.permute.xlu0 1
        %2790 = vperm.xlu0 %2789, %v251
        %v2791 = vpop.permute.xlu0 %2790
        %2793 = vset.pattern.permute.xlu0 1
        %2794 = vperm.xlu0 %2793, %v252
        %v2795 = vpop.permute.xlu0 %2794
        %2797 = vset.pattern.permute.xlu0 1
        %2798 = vperm.xlu0 %2797, %v254
        %v2799 = vpop.permute.xlu0 %2798
        %2801 = vset.pattern.permute.xlu0 1
        %2802 = vperm.xlu0 %2801, %v255
        %v2803 = vpop.permute.xlu0 %2802
        %2805 = vset.pattern.permute.xlu0 1
        %2806 = vperm.xlu0 %2805, %v257
        %v2807 = vpop.permute.xlu0 %2806
        %2809 = vset.pattern.permute.xlu0 1
        %2810 = vperm.xlu0 %2809, %v258
        %v2811 = vpop.permute.xlu0 %2810
        %2813 = vset.pattern.permute.xlu0 1
        %2814 = vperm.xlu0 %2813, %v260
        %v2815 = vpop.permute.xlu0 %2814
        %2817 = vset.pattern.permute.xlu0 1
        %2818 = vperm.xlu0 %2817, %v261
        %v2819 = vpop.permute.xlu0 %2818
        %2821 = vset.pattern.permute.xlu0 1
        %2822 = vperm.xlu0 %2821, %v263
        %v2823 = vpop.permute.xlu0 %2822
        %2825 = vset.pattern.permute.xlu0 1
        %2826 = vperm.xlu0 %2825, %v264
        %v2827 = vpop.permute.xlu0 %2826
        %2829 = vset.pattern.permute.xlu0 1
        %2830 = vperm.xlu0 %2829, %v266
        %v2831 = vpop.permute.xlu0 %2830
        %2833 = vset.pattern.permute.xlu0 1
        %2834 = vperm.xlu0 %2833, %v267
        %v2835 = vpop.permute.xlu0 %2834
        %2837 = vset.pattern.permute.xlu0 1
        %2838 = vperm.xlu0 %2837, %v269
        %v2839 = vpop.permute.xlu0 %2838
        %2841 = vset.pattern.permute.xlu0 1
        %2842 = vperm.xlu0 %2841, %v270
        %v2843 = vpop.permute.xlu0 %2842
        %2845 = vset.pattern.permute.xlu0 1
        %2846 = vperm.xlu0 %2845, %v272
        %v2847 = vpop.permute.xlu0 %2846
        %2849 = vset.pattern.permute.xlu0 1
        %2850 = vperm.xlu0 %2849, %v273
        %v2851 = vpop.permute.xlu0 %2850
        %v2853 = vlaneseq
        %v2854 = vshrl.u32 %v2853, 7
        %v2855 = vsub.s32 1, %v2854
        %v2856 = vrot.slane %v310, %v2855
        %v2857 = vmul.f32 %v2727, %v2856
        %v2858 = vmul.f32 %v2731, %v2856
        %v2859 = vmul.f32 %v2735, %v2856
        %v2860 = vmul.f32 %v2739, %v2856
        %v2861 = vmul.f32 %v2743, %v2856
        %v2862 = vmul.f32 %v2747, %v2856
        %v2863 = vmul.f32 %v2751, %v2856
        %v2864 = vmul.f32 %v2755, %v2856
        %v2865 = vmul.f32 %v2759, %v2856
        %v2866 = vmul.f32 %v2763, %v2856
        %v2867 = vmul.f32 %v2767, %v2856
        %v2868 = vmul.f32 %v2771, %v2856
        %v2869 = vmul.f32 %v2775, %v2856
        %v2870 = vmul.f32 %v2779, %v2856
        %v2871 = vmul.f32 %v2783, %v2856
        %v2872 = vmul.f32 %v2787, %v2856
        %v2873 = vmul.f32 %v2791, %v2856
        %v2874 = vmul.f32 %v2795, %v2856
        %v2875 = vmul.f32 %v2799, %v2856
        %v2876 = vmul.f32 %v2803, %v2856
        %v2877 = vmul.f32 %v2807, %v2856
        %v2878 = vmul.f32 %v2811, %v2856
        %v2879 = vmul.f32 %v2815, %v2856
        %v2880 = vmul.f32 %v2819, %v2856
        %v2881 = vmul.f32 %v2823, %v2856
        %v2882 = vmul.f32 %v2827, %v2856
        %v2883 = vmul.f32 %v2831, %v2856
        %v2884 = vmul.f32 %v2835, %v2856
        %v2885 = vmul.f32 %v2839, %v2856
        %v2886 = vmul.f32 %v2843, %v2856
        %v2887 = vmul.f32 %v2847, %v2856
        %v2888 = vmul.f32 %v2851, %v2856
        %v2889 = vadd.f32 %v2693, %v2857
        %v2890 = vadd.f32 %v2694, %v2858
        %v2891 = vadd.f32 %v2695, %v2859
        %v2892 = vadd.f32 %v2696, %v2860
        %v2893 = vadd.f32 %v2697, %v2861
        %v2894 = vadd.f32 %v2698, %v2862
        %v2895 = vadd.f32 %v2699, %v2863
        %v2896 = vadd.f32 %v2700, %v2864
        %v2897 = vadd.f32 %v2701, %v2865
        %v2898 = vadd.f32 %v2702, %v2866
        %v2899 = vadd.f32 %v2703, %v2867
        %v2900 = vadd.f32 %v2704, %v2868
        %v2901 = vadd.f32 %v2705, %v2869
        %v2902 = vadd.f32 %v2706, %v2870
        %v2903 = vadd.f32 %v2707, %v2871
        %v2904 = vadd.f32 %v2708, %v2872
        %v2905 = vadd.f32 %v2709, %v2873
        %v2906 = vadd.f32 %v2710, %v2874
        %v2907 = vadd.f32 %v2711, %v2875
        %v2908 = vadd.f32 %v2712, %v2876
        %v2909 = vadd.f32 %v2713, %v2877
        %v2910 = vadd.f32 %v2714, %v2878
        %v2911 = vadd.f32 %v2715, %v2879
        %v2912 = vadd.f32 %v2716, %v2880
        %v2913 = vadd.f32 %v2717, %v2881
        %v2914 = vadd.f32 %v2718, %v2882
        %v2915 = vadd.f32 %v2719, %v2883
        %v2916 = vadd.f32 %v2720, %v2884
        %v2917 = vadd.f32 %v2721, %v2885
        %v2918 = vadd.f32 %v2722, %v2886
        %v2919 = vadd.f32 %v2723, %v2887
        %v2920 = vadd.f32 %v2724, %v2888
        %2921 = vset.pattern.permute.xlu0 2
        %2922 = vperm.xlu0 %2921, %v227
        %v2923 = vpop.permute.xlu0 %2922
        %2925 = vset.pattern.permute.xlu0 2
        %2926 = vperm.xlu0 %2925, %v228
        %v2927 = vpop.permute.xlu0 %2926
        %2929 = vset.pattern.permute.xlu0 2
        %2930 = vperm.xlu0 %2929, %v230
        %v2931 = vpop.permute.xlu0 %2930
        %2933 = vset.pattern.permute.xlu0 2
        %2934 = vperm.xlu0 %2933, %v231
        %v2935 = vpop.permute.xlu0 %2934
        %2937 = vset.pattern.permute.xlu0 2
        %2938 = vperm.xlu0 %2937, %v233
        %v2939 = vpop.permute.xlu0 %2938
        %2941 = vset.pattern.permute.xlu0 2
        %2942 = vperm.xlu0 %2941, %v234
        %v2943 = vpop.permute.xlu0 %2942
        %2945 = vset.pattern.permute.xlu0 2
        %2946 = vperm.xlu0 %2945, %v236
        %v2947 = vpop.permute.xlu0 %2946
        %2949 = vset.pattern.permute.xlu0 2
        %2950 = vperm.xlu0 %2949, %v237
        %v2951 = vpop.permute.xlu0 %2950
        %2953 = vset.pattern.permute.xlu0 2
        %2954 = vperm.xlu0 %2953, %v239
        %v2955 = vpop.permute.xlu0 %2954
        %2957 = vset.pattern.permute.xlu0 2
        %2958 = vperm.xlu0 %2957, %v240
        %v2959 = vpop.permute.xlu0 %2958
        %2961 = vset.pattern.permute.xlu0 2
        %2962 = vperm.xlu0 %2961, %v242
        %v2963 = vpop.permute.xlu0 %2962
        %2965 = vset.pattern.permute.xlu0 2
        %2966 = vperm.xlu0 %2965, %v243
        %v2967 = vpop.permute.xlu0 %2966
        %2969 = vset.pattern.permute.xlu0 2
        %2970 = vperm.xlu0 %2969, %v245
        %v2971 = vpop.permute.xlu0 %2970
        %2973 = vset.pattern.permute.xlu0 2
        %2974 = vperm.xlu0 %2973, %v246
        %v2975 = vpop.permute.xlu0 %2974
        %2977 = vset.pattern.permute.xlu0 2
        %2978 = vperm.xlu0 %2977, %v248
        %v2979 = vpop.permute.xlu0 %2978
        %2981 = vset.pattern.permute.xlu0 2
        %2982 = vperm.xlu0 %2981, %v249
        %v2983 = vpop.permute.xlu0 %2982
        %2985 = vset.pattern.permute.xlu0 2
        %2986 = vperm.xlu0 %2985, %v251
        %v2987 = vpop.permute.xlu0 %2986
        %2989 = vset.pattern.permute.xlu0 2
        %2990 = vperm.xlu0 %2989, %v252
        %v2991 = vpop.permute.xlu0 %2990
        %2993 = vset.pattern.permute.xlu0 2
        %2994 = vperm.xlu0 %2993, %v254
        %v2995 = vpop.permute.xlu0 %2994
        %2997 = vset.pattern.permute.xlu0 2
        %2998 = vperm.xlu0 %2997, %v255
        %v2999 = vpop.permute.xlu0 %2998
        %3001 = vset.pattern.permute.xlu0 2
        %3002 = vperm.xlu0 %3001, %v257
        %v3003 = vpop.permute.xlu0 %3002
        %3005 = vset.pattern.permute.xlu0 2
        %3006 = vperm.xlu0 %3005, %v258
        %v3007 = vpop.permute.xlu0 %3006
        %3009 = vset.pattern.permute.xlu0 2
        %3010 = vperm.xlu0 %3009, %v260
        %v3011 = vpop.permute.xlu0 %3010
        %3013 = vset.pattern.permute.xlu0 2
        %3014 = vperm.xlu0 %3013, %v261
        %v3015 = vpop.permute.xlu0 %3014
        %3017 = vset.pattern.permute.xlu0 2
        %3018 = vperm.xlu0 %3017, %v263
        %v3019 = vpop.permute.xlu0 %3018
        %3021 = vset.pattern.permute.xlu0 2
        %3022 = vperm.xlu0 %3021, %v264
        %v3023 = vpop.permute.xlu0 %3022
        %3025 = vset.pattern.permute.xlu0 2
        %3026 = vperm.xlu0 %3025, %v266
        %v3027 = vpop.permute.xlu0 %3026
        %3029 = vset.pattern.permute.xlu0 2
        %3030 = vperm.xlu0 %3029, %v267
        %v3031 = vpop.permute.xlu0 %3030
        %3033 = vset.pattern.permute.xlu0 2
        %3034 = vperm.xlu0 %3033, %v269
        %v3035 = vpop.permute.xlu0 %3034
        %3037 = vset.pattern.permute.xlu0 2
        %3038 = vperm.xlu0 %3037, %v270
        %v3039 = vpop.permute.xlu0 %3038
        %3041 = vset.pattern.permute.xlu0 2
        %3042 = vperm.xlu0 %3041, %v272
        %v3043 = vpop.permute.xlu0 %3042
        %3045 = vset.pattern.permute.xlu0 2
        %3046 = vperm.xlu0 %3045, %v273
        %v3047 = vpop.permute.xlu0 %3046
        %v3049 = vlaneseq
        %v3050 = vshrl.u32 %v3049, 7
        %v3051 = vsub.s32 2, %v3050
        %v3052 = vrot.slane %v310, %v3051
        %v3053 = vmul.f32 %v2923, %v3052
        %v3054 = vmul.f32 %v2927, %v3052
        %v3055 = vmul.f32 %v2931, %v3052
        %v3056 = vmul.f32 %v2935, %v3052
        %v3057 = vmul.f32 %v2939, %v3052
        %v3058 = vmul.f32 %v2943, %v3052
        %v3059 = vmul.f32 %v2947, %v3052
        %v3060 = vmul.f32 %v2951, %v3052
        %v3061 = vmul.f32 %v2955, %v3052
        %v3062 = vmul.f32 %v2959, %v3052
        %v3063 = vmul.f32 %v2963, %v3052
        %v3064 = vmul.f32 %v2967, %v3052
        %v3065 = vmul.f32 %v2971, %v3052
        %v3066 = vmul.f32 %v2975, %v3052
        %v3067 = vmul.f32 %v2979, %v3052
        %v3068 = vmul.f32 %v2983, %v3052
        %v3069 = vmul.f32 %v2987, %v3052
        %v3070 = vmul.f32 %v2991, %v3052
        %v3071 = vmul.f32 %v2995, %v3052
        %v3072 = vmul.f32 %v2999, %v3052
        %v3073 = vmul.f32 %v3003, %v3052
        %v3074 = vmul.f32 %v3007, %v3052
        %v3075 = vmul.f32 %v3011, %v3052
        %v3076 = vmul.f32 %v3015, %v3052
        %v3077 = vmul.f32 %v3019, %v3052
        %v3078 = vmul.f32 %v3023, %v3052
        %v3079 = vmul.f32 %v3027, %v3052
        %v3080 = vmul.f32 %v3031, %v3052
        %v3081 = vmul.f32 %v3035, %v3052
        %v3082 = vmul.f32 %v3039, %v3052
        %v3083 = vmul.f32 %v3043, %v3052
        %v3084 = vmul.f32 %v3047, %v3052
        %v3085 = vadd.f32 %v2889, %v3053
        %v3086 = vadd.f32 %v2890, %v3054
        %v3087 = vadd.f32 %v2891, %v3055
        %v3088 = vadd.f32 %v2892, %v3056
        %v3089 = vadd.f32 %v2893, %v3057
        %v3090 = vadd.f32 %v2894, %v3058
        %v3091 = vadd.f32 %v2895, %v3059
        %v3092 = vadd.f32 %v2896, %v3060
        %v3093 = vadd.f32 %v2897, %v3061
        %v3094 = vadd.f32 %v2898, %v3062
        %v3095 = vadd.f32 %v2899, %v3063
        %v3096 = vadd.f32 %v2900, %v3064
        %v3097 = vadd.f32 %v2901, %v3065
        %v3098 = vadd.f32 %v2902, %v3066
        %v3099 = vadd.f32 %v2903, %v3067
        %v3100 = vadd.f32 %v2904, %v3068
        %v3101 = vadd.f32 %v2905, %v3069
        %v3102 = vadd.f32 %v2906, %v3070
        %v3103 = vadd.f32 %v2907, %v3071
        %v3104 = vadd.f32 %v2908, %v3072
        %v3105 = vadd.f32 %v2909, %v3073
        %v3106 = vadd.f32 %v2910, %v3074
        %v3107 = vadd.f32 %v2911, %v3075
        %v3108 = vadd.f32 %v2912, %v3076
        %v3109 = vadd.f32 %v2913, %v3077
        %v3110 = vadd.f32 %v2914, %v3078
        %v3111 = vadd.f32 %v2915, %v3079
        %v3112 = vadd.f32 %v2916, %v3080
        %v3113 = vadd.f32 %v2917, %v3081
        %v3114 = vadd.f32 %v2918, %v3082
        %v3115 = vadd.f32 %v2919, %v3083
        %v3116 = vadd.f32 %v2920, %v3084
        %3118 = vset.pattern.permute.xlu0 0
        %3119 = vperm.xlu0 %3118, %v275
        %v3120 = vpop.permute.xlu0 %3119
        %3123 = vset.pattern.permute.xlu0 0
        %3124 = vperm.xlu0 %3123, %v276
        %v3125 = vpop.permute.xlu0 %3124
        %3128 = vset.pattern.permute.xlu0 0
        %3129 = vperm.xlu0 %3128, %v277
        %v3130 = vpop.permute.xlu0 %3129
        %3133 = vset.pattern.permute.xlu0 0
        %3134 = vperm.xlu0 %3133, %v278
        %v3135 = vpop.permute.xlu0 %3134
        %3138 = vset.pattern.permute.xlu0 0
        %3139 = vperm.xlu0 %3138, %v279
        %v3140 = vpop.permute.xlu0 %3139
        %3143 = vset.pattern.permute.xlu0 0
        %3144 = vperm.xlu0 %3143, %v280
        %v3145 = vpop.permute.xlu0 %3144
        %3148 = vset.pattern.permute.xlu0 0
        %3149 = vperm.xlu0 %3148, %v281
        %v3150 = vpop.permute.xlu0 %3149
        %3153 = vset.pattern.permute.xlu0 0
        %3154 = vperm.xlu0 %3153, %v282
        %v3155 = vpop.permute.xlu0 %3154
        %3158 = vset.pattern.permute.xlu0 0
        %3159 = vperm.xlu0 %3158, %v283
        %v3160 = vpop.permute.xlu0 %3159
        %3163 = vset.pattern.permute.xlu0 0
        %3164 = vperm.xlu0 %3163, %v284
        %v3165 = vpop.permute.xlu0 %3164
        %3168 = vset.pattern.permute.xlu0 0
        %3169 = vperm.xlu0 %3168, %v285
        %v3170 = vpop.permute.xlu0 %3169
        %3173 = vset.pattern.permute.xlu0 0
        %3174 = vperm.xlu0 %3173, %v286
        %v3175 = vpop.permute.xlu0 %3174
        %3178 = vset.pattern.permute.xlu0 0
        %3179 = vperm.xlu0 %3178, %v287
        %v3180 = vpop.permute.xlu0 %3179
        %3183 = vset.pattern.permute.xlu0 0
        %3184 = vperm.xlu0 %3183, %v288
        %v3185 = vpop.permute.xlu0 %3184
        %3188 = vset.pattern.permute.xlu0 0
        %3189 = vperm.xlu0 %3188, %v289
        %v3190 = vpop.permute.xlu0 %3189
        %3193 = vset.pattern.permute.xlu0 0
        %3194 = vperm.xlu0 %3193, %v290
        %v3195 = vpop.permute.xlu0 %3194
        %3198 = vset.pattern.permute.xlu0 0
        %3199 = vperm.xlu0 %3198, %v291
        %v3200 = vpop.permute.xlu0 %3199
        %3203 = vset.pattern.permute.xlu0 0
        %3204 = vperm.xlu0 %3203, %v292
        %v3205 = vpop.permute.xlu0 %3204
        %3208 = vset.pattern.permute.xlu0 0
        %3209 = vperm.xlu0 %3208, %v293
        %v3210 = vpop.permute.xlu0 %3209
        %3213 = vset.pattern.permute.xlu0 0
        %3214 = vperm.xlu0 %3213, %v294
        %v3215 = vpop.permute.xlu0 %3214
        %3218 = vset.pattern.permute.xlu0 0
        %3219 = vperm.xlu0 %3218, %v295
        %v3220 = vpop.permute.xlu0 %3219
        %3223 = vset.pattern.permute.xlu0 0
        %3224 = vperm.xlu0 %3223, %v296
        %v3225 = vpop.permute.xlu0 %3224
        %3228 = vset.pattern.permute.xlu0 0
        %3229 = vperm.xlu0 %3228, %v297
        %v3230 = vpop.permute.xlu0 %3229
        %3233 = vset.pattern.permute.xlu0 0
        %3234 = vperm.xlu0 %3233, %v298
        %v3235 = vpop.permute.xlu0 %3234
        %3238 = vset.pattern.permute.xlu0 0
        %3239 = vperm.xlu0 %3238, %v299
        %v3240 = vpop.permute.xlu0 %3239
        %3243 = vset.pattern.permute.xlu0 0
        %3244 = vperm.xlu0 %3243, %v300
        %v3245 = vpop.permute.xlu0 %3244
        %3248 = vset.pattern.permute.xlu0 0
        %3249 = vperm.xlu0 %3248, %v301
        %v3250 = vpop.permute.xlu0 %3249
        %3253 = vset.pattern.permute.xlu0 0
        %3254 = vperm.xlu0 %3253, %v302
        %v3255 = vpop.permute.xlu0 %3254
        %3258 = vset.pattern.permute.xlu0 0
        %3259 = vperm.xlu0 %3258, %v303
        %v3260 = vpop.permute.xlu0 %3259
        %3263 = vset.pattern.permute.xlu0 0
        %3264 = vperm.xlu0 %3263, %v304
        %v3265 = vpop.permute.xlu0 %3264
        %3268 = vset.pattern.permute.xlu0 0
        %3269 = vperm.xlu0 %3268, %v305
        %v3270 = vpop.permute.xlu0 %3269
        %3273 = vset.pattern.permute.xlu0 0
        %3274 = vperm.xlu0 %3273, %v306
        %v3275 = vpop.permute.xlu0 %3274
        %v3277 = vlaneseq
        %v3278 = vshrl.u32 %v3277, 7
        %v3279 = vsub.s32 0, %v3278
        %v3280 = vrot.slane %v311, %v3279
        %v3281 = vmul.f32 %v3120, %v3280
        %v3282 = vmul.f32 %v3125, %v3280
        %v3283 = vmul.f32 %v3130, %v3280
        %v3284 = vmul.f32 %v3135, %v3280
        %v3285 = vmul.f32 %v3140, %v3280
        %v3286 = vmul.f32 %v3145, %v3280
        %v3287 = vmul.f32 %v3150, %v3280
        %v3288 = vmul.f32 %v3155, %v3280
        %v3289 = vmul.f32 %v3160, %v3280
        %v3290 = vmul.f32 %v3165, %v3280
        %v3291 = vmul.f32 %v3170, %v3280
        %v3292 = vmul.f32 %v3175, %v3280
        %v3293 = vmul.f32 %v3180, %v3280
        %v3294 = vmul.f32 %v3185, %v3280
        %v3295 = vmul.f32 %v3190, %v3280
        %v3296 = vmul.f32 %v3195, %v3280
        %v3297 = vmul.f32 %v3200, %v3280
        %v3298 = vmul.f32 %v3205, %v3280
        %v3299 = vmul.f32 %v3210, %v3280
        %v3300 = vmul.f32 %v3215, %v3280
        %v3301 = vmul.f32 %v3220, %v3280
        %v3302 = vmul.f32 %v3225, %v3280
        %v3303 = vmul.f32 %v3230, %v3280
        %v3304 = vmul.f32 %v3235, %v3280
        %v3305 = vmul.f32 %v3240, %v3280
        %v3306 = vmul.f32 %v3245, %v3280
        %v3307 = vmul.f32 %v3250, %v3280
        %v3308 = vmul.f32 %v3255, %v3280
        %v3309 = vmul.f32 %v3260, %v3280
        %v3310 = vmul.f32 %v3265, %v3280
        %v3311 = vmul.f32 %v3270, %v3280
        %v3312 = vmul.f32 %v3275, %v3280
        %v3313 = vadd.f32 %v3085, %v3281
        %v3314 = vadd.f32 %v3086, %v3282
        %v3315 = vadd.f32 %v3087, %v3283
        %v3316 = vadd.f32 %v3088, %v3284
        %v3317 = vadd.f32 %v3089, %v3285
        %v3318 = vadd.f32 %v3090, %v3286
        %v3319 = vadd.f32 %v3091, %v3287
        %v3320 = vadd.f32 %v3092, %v3288
        %v3321 = vadd.f32 %v3093, %v3289
        %v3322 = vadd.f32 %v3094, %v3290
        %v3323 = vadd.f32 %v3095, %v3291
        %v3324 = vadd.f32 %v3096, %v3292
        %v3325 = vadd.f32 %v3097, %v3293
        %v3326 = vadd.f32 %v3098, %v3294
        %v3327 = vadd.f32 %v3099, %v3295
        %v3328 = vadd.f32 %v3100, %v3296
        %v3329 = vadd.f32 %v3101, %v3297
        %v3330 = vadd.f32 %v3102, %v3298
        %v3331 = vadd.f32 %v3103, %v3299
        %v3332 = vadd.f32 %v3104, %v3300
        %v3333 = vadd.f32 %v3105, %v3301
        %v3334 = vadd.f32 %v3106, %v3302
        %v3335 = vadd.f32 %v3107, %v3303
        %v3336 = vadd.f32 %v3108, %v3304
        %v3337 = vadd.f32 %v3109, %v3305
        %v3338 = vadd.f32 %v3110, %v3306
        %v3339 = vadd.f32 %v3111, %v3307
        %v3340 = vadd.f32 %v3112, %v3308
        %v3341 = vadd.f32 %v3113, %v3309
        %v3342 = vadd.f32 %v3114, %v3310
        %v3343 = vadd.f32 %v3115, %v3311
        %v3344 = vadd.f32 %v3116, %v3312
        %3345 = vset.pattern.permute.xlu0 1
        %3346 = vperm.xlu0 %3345, %v275
        %v3347 = vpop.permute.xlu0 %3346
        %3349 = vset.pattern.permute.xlu0 1
        %3350 = vperm.xlu0 %3349, %v276
        %v3351 = vpop.permute.xlu0 %3350
        %3353 = vset.pattern.permute.xlu0 1
        %3354 = vperm.xlu0 %3353, %v277
        %v3355 = vpop.permute.xlu0 %3354
        %3357 = vset.pattern.permute.xlu0 1
        %3358 = vperm.xlu0 %3357, %v278
        %v3359 = vpop.permute.xlu0 %3358
        %3361 = vset.pattern.permute.xlu0 1
        %3362 = vperm.xlu0 %3361, %v279
        %v3363 = vpop.permute.xlu0 %3362
        %3365 = vset.pattern.permute.xlu0 1
        %3366 = vperm.xlu0 %3365, %v280
        %v3367 = vpop.permute.xlu0 %3366
        %3369 = vset.pattern.permute.xlu0 1
        %3370 = vperm.xlu0 %3369, %v281
        %v3371 = vpop.permute.xlu0 %3370
        %3373 = vset.pattern.permute.xlu0 1
        %3374 = vperm.xlu0 %3373, %v282
        %v3375 = vpop.permute.xlu0 %3374
        %3377 = vset.pattern.permute.xlu0 1
        %3378 = vperm.xlu0 %3377, %v283
        %v3379 = vpop.permute.xlu0 %3378
        %3381 = vset.pattern.permute.xlu0 1
        %3382 = vperm.xlu0 %3381, %v284
        %v3383 = vpop.permute.xlu0 %3382
        %3385 = vset.pattern.permute.xlu0 1
        %3386 = vperm.xlu0 %3385, %v285
        %v3387 = vpop.permute.xlu0 %3386
        %3389 = vset.pattern.permute.xlu0 1
        %3390 = vperm.xlu0 %3389, %v286
        %v3391 = vpop.permute.xlu0 %3390
        %3393 = vset.pattern.permute.xlu0 1
        %3394 = vperm.xlu0 %3393, %v287
        %v3395 = vpop.permute.xlu0 %3394
        %3397 = vset.pattern.permute.xlu0 1
        %3398 = vperm.xlu0 %3397, %v288
        %v3399 = vpop.permute.xlu0 %3398
        %3401 = vset.pattern.permute.xlu0 1
        %3402 = vperm.xlu0 %3401, %v289
        %v3403 = vpop.permute.xlu0 %3402
        %3405 = vset.pattern.permute.xlu0 1
        %3406 = vperm.xlu0 %3405, %v290
        %v3407 = vpop.permute.xlu0 %3406
        %3409 = vset.pattern.permute.xlu0 1
        %3410 = vperm.xlu0 %3409, %v291
        %v3411 = vpop.permute.xlu0 %3410
        %3413 = vset.pattern.permute.xlu0 1
        %3414 = vperm.xlu0 %3413, %v292
        %v3415 = vpop.permute.xlu0 %3414
        %3417 = vset.pattern.permute.xlu0 1
        %3418 = vperm.xlu0 %3417, %v293
        %v3419 = vpop.permute.xlu0 %3418
        %3421 = vset.pattern.permute.xlu0 1
        %3422 = vperm.xlu0 %3421, %v294
        %v3423 = vpop.permute.xlu0 %3422
        %3425 = vset.pattern.permute.xlu0 1
        %3426 = vperm.xlu0 %3425, %v295
        %v3427 = vpop.permute.xlu0 %3426
        %3429 = vset.pattern.permute.xlu0 1
        %3430 = vperm.xlu0 %3429, %v296
        %v3431 = vpop.permute.xlu0 %3430
        %3433 = vset.pattern.permute.xlu0 1
        %3434 = vperm.xlu0 %3433, %v297
        %v3435 = vpop.permute.xlu0 %3434
        %3437 = vset.pattern.permute.xlu0 1
        %3438 = vperm.xlu0 %3437, %v298
        %v3439 = vpop.permute.xlu0 %3438
        %3441 = vset.pattern.permute.xlu0 1
        %3442 = vperm.xlu0 %3441, %v299
        %v3443 = vpop.permute.xlu0 %3442
        %3445 = vset.pattern.permute.xlu0 1
        %3446 = vperm.xlu0 %3445, %v300
        %v3447 = vpop.permute.xlu0 %3446
        %3449 = vset.pattern.permute.xlu0 1
        %3450 = vperm.xlu0 %3449, %v301
        %v3451 = vpop.permute.xlu0 %3450
        %3453 = vset.pattern.permute.xlu0 1
        %3454 = vperm.xlu0 %3453, %v302
        %v3455 = vpop.permute.xlu0 %3454
        %3457 = vset.pattern.permute.xlu0 1
        %3458 = vperm.xlu0 %3457, %v303
        %v3459 = vpop.permute.xlu0 %3458
        %3461 = vset.pattern.permute.xlu0 1
        %3462 = vperm.xlu0 %3461, %v304
        %v3463 = vpop.permute.xlu0 %3462
        %3465 = vset.pattern.permute.xlu0 1
        %3466 = vperm.xlu0 %3465, %v305
        %v3467 = vpop.permute.xlu0 %3466
        %3469 = vset.pattern.permute.xlu0 1
        %3470 = vperm.xlu0 %3469, %v306
        %v3471 = vpop.permute.xlu0 %3470
        %v3473 = vlaneseq
        %v3474 = vshrl.u32 %v3473, 7
        %v3475 = vsub.s32 1, %v3474
        %v3476 = vrot.slane %v311, %v3475
        %v3477 = vmul.f32 %v3347, %v3476
        %v3478 = vmul.f32 %v3351, %v3476
        %v3479 = vmul.f32 %v3355, %v3476
        %v3480 = vmul.f32 %v3359, %v3476
        %v3481 = vmul.f32 %v3363, %v3476
        %v3482 = vmul.f32 %v3367, %v3476
        %v3483 = vmul.f32 %v3371, %v3476
        %v3484 = vmul.f32 %v3375, %v3476
        %v3485 = vmul.f32 %v3379, %v3476
        %v3486 = vmul.f32 %v3383, %v3476
        %v3487 = vmul.f32 %v3387, %v3476
        %v3488 = vmul.f32 %v3391, %v3476
        %v3489 = vmul.f32 %v3395, %v3476
        %v3490 = vmul.f32 %v3399, %v3476
        %v3491 = vmul.f32 %v3403, %v3476
        %v3492 = vmul.f32 %v3407, %v3476
        %v3493 = vmul.f32 %v3411, %v3476
        %v3494 = vmul.f32 %v3415, %v3476
        %v3495 = vmul.f32 %v3419, %v3476
        %v3496 = vmul.f32 %v3423, %v3476
        %v3497 = vmul.f32 %v3427, %v3476
        %v3498 = vmul.f32 %v3431, %v3476
        %v3499 = vmul.f32 %v3435, %v3476
        %v3500 = vmul.f32 %v3439, %v3476
        %v3501 = vmul.f32 %v3443, %v3476
        %v3502 = vmul.f32 %v3447, %v3476
        %v3503 = vmul.f32 %v3451, %v3476
        %v3504 = vmul.f32 %v3455, %v3476
        %v3505 = vmul.f32 %v3459, %v3476
        %v3506 = vmul.f32 %v3463, %v3476
        %v3507 = vmul.f32 %v3467, %v3476
        %v3508 = vmul.f32 %v3471, %v3476
        %v3509 = vadd.f32 %v3313, %v3477
        %v3510 = vadd.f32 %v3314, %v3478
        %v3511 = vadd.f32 %v3315, %v3479
        %v3512 = vadd.f32 %v3316, %v3480
        %v3513 = vadd.f32 %v3317, %v3481
        %v3514 = vadd.f32 %v3318, %v3482
        %v3515 = vadd.f32 %v3319, %v3483
        %v3516 = vadd.f32 %v3320, %v3484
        %v3517 = vadd.f32 %v3321, %v3485
        %v3518 = vadd.f32 %v3322, %v3486
        %v3519 = vadd.f32 %v3323, %v3487
        %v3520 = vadd.f32 %v3324, %v3488
        %v3521 = vadd.f32 %v3325, %v3489
        %v3522 = vadd.f32 %v3326, %v3490
        %v3523 = vadd.f32 %v3327, %v3491
        %v3524 = vadd.f32 %v3328, %v3492
        %v3525 = vadd.f32 %v3329, %v3493
        %v3526 = vadd.f32 %v3330, %v3494
        %v3527 = vadd.f32 %v3331, %v3495
        %v3528 = vadd.f32 %v3332, %v3496
        %v3529 = vadd.f32 %v3333, %v3497
        %v3530 = vadd.f32 %v3334, %v3498
        %v3531 = vadd.f32 %v3335, %v3499
        %v3532 = vadd.f32 %v3336, %v3500
        %v3533 = vadd.f32 %v3337, %v3501
        %v3534 = vadd.f32 %v3338, %v3502
        %v3535 = vadd.f32 %v3339, %v3503
        %v3536 = vadd.f32 %v3340, %v3504
        %v3537 = vadd.f32 %v3341, %v3505
        %v3538 = vadd.f32 %v3342, %v3506
        %v3539 = vadd.f32 %v3343, %v3507
        %v3540 = vadd.f32 %v3344, %v3508
        %3541 = vset.pattern.permute.xlu0 2
        %3542 = vperm.xlu0 %3541, %v275
        %v3543 = vpop.permute.xlu0 %3542
        %3545 = vset.pattern.permute.xlu0 2
        %3546 = vperm.xlu0 %3545, %v276
        %v3547 = vpop.permute.xlu0 %3546
        %3549 = vset.pattern.permute.xlu0 2
        %3550 = vperm.xlu0 %3549, %v277
        %v3551 = vpop.permute.xlu0 %3550
        %3553 = vset.pattern.permute.xlu0 2
        %3554 = vperm.xlu0 %3553, %v278
        %v3555 = vpop.permute.xlu0 %3554
        %3557 = vset.pattern.permute.xlu0 2
        %3558 = vperm.xlu0 %3557, %v279
        %v3559 = vpop.permute.xlu0 %3558
        %3561 = vset.pattern.permute.xlu0 2
        %3562 = vperm.xlu0 %3561, %v280
        %v3563 = vpop.permute.xlu0 %3562
        %3565 = vset.pattern.permute.xlu0 2
        %3566 = vperm.xlu0 %3565, %v281
        %v3567 = vpop.permute.xlu0 %3566
        %3569 = vset.pattern.permute.xlu0 2
        %3570 = vperm.xlu0 %3569, %v282
        %v3571 = vpop.permute.xlu0 %3570
        %3573 = vset.pattern.permute.xlu0 2
        %3574 = vperm.xlu0 %3573, %v283
        %v3575 = vpop.permute.xlu0 %3574
        %3577 = vset.pattern.permute.xlu0 2
        %3578 = vperm.xlu0 %3577, %v284
        %v3579 = vpop.permute.xlu0 %3578
        %3581 = vset.pattern.permute.xlu0 2
        %3582 = vperm.xlu0 %3581, %v285
        %v3583 = vpop.permute.xlu0 %3582
        %3585 = vset.pattern.permute.xlu0 2
        %3586 = vperm.xlu0 %3585, %v286
        %v3587 = vpop.permute.xlu0 %3586
        %3589 = vset.pattern.permute.xlu0 2
        %3590 = vperm.xlu0 %3589, %v287
        %v3591 = vpop.permute.xlu0 %3590
        %3593 = vset.pattern.permute.xlu0 2
        %3594 = vperm.xlu0 %3593, %v288
        %v3595 = vpop.permute.xlu0 %3594
        %3597 = vset.pattern.permute.xlu0 2
        %3598 = vperm.xlu0 %3597, %v289
        %v3599 = vpop.permute.xlu0 %3598
        %3601 = vset.pattern.permute.xlu0 2
        %3602 = vperm.xlu0 %3601, %v290
        %v3603 = vpop.permute.xlu0 %3602
        %3605 = vset.pattern.permute.xlu0 2
        %3606 = vperm.xlu0 %3605, %v291
        %v3607 = vpop.permute.xlu0 %3606
        %3609 = vset.pattern.permute.xlu0 2
        %3610 = vperm.xlu0 %3609, %v292
        %v3611 = vpop.permute.xlu0 %3610
        %3613 = vset.pattern.permute.xlu0 2
        %3614 = vperm.xlu0 %3613, %v293
        %v3615 = vpop.permute.xlu0 %3614
        %3617 = vset.pattern.permute.xlu0 2
        %3618 = vperm.xlu0 %3617, %v294
        %v3619 = vpop.permute.xlu0 %3618
        %3621 = vset.pattern.permute.xlu0 2
        %3622 = vperm.xlu0 %3621, %v295
        %v3623 = vpop.permute.xlu0 %3622
        %3625 = vset.pattern.permute.xlu0 2
        %3626 = vperm.xlu0 %3625, %v296
        %v3627 = vpop.permute.xlu0 %3626
        %3629 = vset.pattern.permute.xlu0 2
        %3630 = vperm.xlu0 %3629, %v297
        %v3631 = vpop.permute.xlu0 %3630
        %3633 = vset.pattern.permute.xlu0 2
        %3634 = vperm.xlu0 %3633, %v298
        %v3635 = vpop.permute.xlu0 %3634
        %3637 = vset.pattern.permute.xlu0 2
        %3638 = vperm.xlu0 %3637, %v299
        %v3639 = vpop.permute.xlu0 %3638
        %3641 = vset.pattern.permute.xlu0 2
        %3642 = vperm.xlu0 %3641, %v300
        %v3643 = vpop.permute.xlu0 %3642
        %3645 = vset.pattern.permute.xlu0 2
        %3646 = vperm.xlu0 %3645, %v301
        %v3647 = vpop.permute.xlu0 %3646
        %3649 = vset.pattern.permute.xlu0 2
        %3650 = vperm.xlu0 %3649, %v302
        %v3651 = vpop.permute.xlu0 %3650
        %3653 = vset.pattern.permute.xlu0 2
        %3654 = vperm.xlu0 %3653, %v303
        %v3655 = vpop.permute.xlu0 %3654
        %3657 = vset.pattern.permute.xlu0 2
        %3658 = vperm.xlu0 %3657, %v304
        %v3659 = vpop.permute.xlu0 %3658
        %3661 = vset.pattern.permute.xlu0 2
        %3662 = vperm.xlu0 %3661, %v305
        %v3663 = vpop.permute.xlu0 %3662
        %3665 = vset.pattern.permute.xlu0 2
        %3666 = vperm.xlu0 %3665, %v306
        %v3667 = vpop.permute.xlu0 %3666
        %v3669 = vlaneseq
        %v3670 = vshrl.u32 %v3669, 7
        %v3671 = vsub.s32 2, %v3670
        %v3672 = vrot.slane %v311, %v3671
        %v3673 = vmul.f32 %v3543, %v3672
        %v3674 = vmul.f32 %v3547, %v3672
        %v3675 = vmul.f32 %v3551, %v3672
        %v3676 = vmul.f32 %v3555, %v3672
        %v3677 = vmul.f32 %v3559, %v3672
        %v3678 = vmul.f32 %v3563, %v3672
        %v3679 = vmul.f32 %v3567, %v3672
        %v3680 = vmul.f32 %v3571, %v3672
        %v3681 = vmul.f32 %v3575, %v3672
        %v3682 = vmul.f32 %v3579, %v3672
        %v3683 = vmul.f32 %v3583, %v3672
        %v3684 = vmul.f32 %v3587, %v3672
        %v3685 = vmul.f32 %v3591, %v3672
        %v3686 = vmul.f32 %v3595, %v3672
        %v3687 = vmul.f32 %v3599, %v3672
        %v3688 = vmul.f32 %v3603, %v3672
        %v3689 = vmul.f32 %v3607, %v3672
        %v3690 = vmul.f32 %v3611, %v3672
        %v3691 = vmul.f32 %v3615, %v3672
        %v3692 = vmul.f32 %v3619, %v3672
        %v3693 = vmul.f32 %v3623, %v3672
        %v3694 = vmul.f32 %v3627, %v3672
        %v3695 = vmul.f32 %v3631, %v3672
        %v3696 = vmul.f32 %v3635, %v3672
        %v3697 = vmul.f32 %v3639, %v3672
        %v3698 = vmul.f32 %v3643, %v3672
        %v3699 = vmul.f32 %v3647, %v3672
        %v3700 = vmul.f32 %v3651, %v3672
        %v3701 = vmul.f32 %v3655, %v3672
        %v3702 = vmul.f32 %v3659, %v3672
        %v3703 = vmul.f32 %v3663, %v3672
        %v3704 = vmul.f32 %v3667, %v3672
        %v3705 = vadd.f32 %v3509, %v3673
        %v3706 = vadd.f32 %v3510, %v3674
        %v3707 = vadd.f32 %v3511, %v3675
        %v3708 = vadd.f32 %v3512, %v3676
        %v3709 = vadd.f32 %v3513, %v3677
        %v3710 = vadd.f32 %v3514, %v3678
        %v3711 = vadd.f32 %v3515, %v3679
        %v3712 = vadd.f32 %v3516, %v3680
        %v3713 = vadd.f32 %v3517, %v3681
        %v3714 = vadd.f32 %v3518, %v3682
        %v3715 = vadd.f32 %v3519, %v3683
        %v3716 = vadd.f32 %v3520, %v3684
        %v3717 = vadd.f32 %v3521, %v3685
        %v3718 = vadd.f32 %v3522, %v3686
        %v3719 = vadd.f32 %v3523, %v3687
        %v3720 = vadd.f32 %v3524, %v3688
        %v3721 = vadd.f32 %v3525, %v3689
        %v3722 = vadd.f32 %v3526, %v3690
        %v3723 = vadd.f32 %v3527, %v3691
        %v3724 = vadd.f32 %v3528, %v3692
        %v3725 = vadd.f32 %v3529, %v3693
        %v3726 = vadd.f32 %v3530, %v3694
        %v3727 = vadd.f32 %v3531, %v3695
        %v3728 = vadd.f32 %v3532, %v3696
        %v3729 = vadd.f32 %v3533, %v3697
        %v3730 = vadd.f32 %v3534, %v3698
        %v3731 = vadd.f32 %v3535, %v3699
        %v3732 = vadd.f32 %v3536, %v3700
        %v3733 = vadd.f32 %v3537, %v3701
        %v3734 = vadd.f32 %v3538, %v3702
        %v3735 = vadd.f32 %v3539, %v3703
        %v3736 = vadd.f32 %v3540, %v3704
        %3738 = vset.pattern.permute.xlu0 0
        %3739 = vperm.xlu0 %3738, %v229
        %v3740 = vpop.permute.xlu0 %3739
        %3743 = vset.pattern.permute.xlu0 0
        %3744 = vperm.xlu0 %3743, %v232
        %v3745 = vpop.permute.xlu0 %3744
        %3748 = vset.pattern.permute.xlu0 0
        %3749 = vperm.xlu0 %3748, %v235
        %v3750 = vpop.permute.xlu0 %3749
        %3753 = vset.pattern.permute.xlu0 0
        %3754 = vperm.xlu0 %3753, %v238
        %v3755 = vpop.permute.xlu0 %3754
        %3758 = vset.pattern.permute.xlu0 0
        %3759 = vperm.xlu0 %3758, %v241
        %v3760 = vpop.permute.xlu0 %3759
        %3763 = vset.pattern.permute.xlu0 0
        %3764 = vperm.xlu0 %3763, %v244
        %v3765 = vpop.permute.xlu0 %3764
        %3768 = vset.pattern.permute.xlu0 0
        %3769 = vperm.xlu0 %3768, %v247
        %v3770 = vpop.permute.xlu0 %3769
        %3773 = vset.pattern.permute.xlu0 0
        %3774 = vperm.xlu0 %3773, %v250
        %v3775 = vpop.permute.xlu0 %3774
        %3778 = vset.pattern.permute.xlu0 0
        %3779 = vperm.xlu0 %3778, %v253
        %v3780 = vpop.permute.xlu0 %3779
        %3783 = vset.pattern.permute.xlu0 0
        %3784 = vperm.xlu0 %3783, %v256
        %v3785 = vpop.permute.xlu0 %3784
        %3788 = vset.pattern.permute.xlu0 0
        %3789 = vperm.xlu0 %3788, %v259
        %v3790 = vpop.permute.xlu0 %3789
        %3793 = vset.pattern.permute.xlu0 0
        %3794 = vperm.xlu0 %3793, %v262
        %v3795 = vpop.permute.xlu0 %3794
        %3798 = vset.pattern.permute.xlu0 0
        %3799 = vperm.xlu0 %3798, %v265
        %v3800 = vpop.permute.xlu0 %3799
        %3803 = vset.pattern.permute.xlu0 0
        %3804 = vperm.xlu0 %3803, %v268
        %v3805 = vpop.permute.xlu0 %3804
        %3808 = vset.pattern.permute.xlu0 0
        %3809 = vperm.xlu0 %3808, %v271
        %v3810 = vpop.permute.xlu0 %3809
        %3813 = vset.pattern.permute.xlu0 0
        %3814 = vperm.xlu0 %3813, %v274
        %v3815 = vpop.permute.xlu0 %3814
        %v3817 = vlaneseq
        %v3818 = vshrl.u32 %v3817, 7
        %v3819 = vsub.s32 0, %v3818
        %v3820 = vrot.slane %v312, %v3819
        %v3821 = vmul.f32 %v2500, %v3820
        %v3822 = vmul.f32 %v2505, %v3820
        %v3823 = vmul.f32 %v3740, %v3820
        %v3824 = vmul.f32 %v2510, %v3820
        %v3825 = vmul.f32 %v2515, %v3820
        %v3826 = vmul.f32 %v3745, %v3820
        %v3827 = vmul.f32 %v2520, %v3820
        %v3828 = vmul.f32 %v2525, %v3820
        %v3829 = vmul.f32 %v3750, %v3820
        %v3830 = vmul.f32 %v2530, %v3820
        %v3831 = vmul.f32 %v2535, %v3820
        %v3832 = vmul.f32 %v3755, %v3820
        %v3833 = vmul.f32 %v2540, %v3820
        %v3834 = vmul.f32 %v2545, %v3820
        %v3835 = vmul.f32 %v3760, %v3820
        %v3836 = vmul.f32 %v2550, %v3820
        %v3837 = vmul.f32 %v2555, %v3820
        %v3838 = vmul.f32 %v3765, %v3820
        %v3839 = vmul.f32 %v2560, %v3820
        %v3840 = vmul.f32 %v2565, %v3820
        %v3841 = vmul.f32 %v3770, %v3820
        %v3842 = vmul.f32 %v2570, %v3820
        %v3843 = vmul.f32 %v2575, %v3820
        %v3844 = vmul.f32 %v3775, %v3820
        %v3845 = vmul.f32 %v2580, %v3820
        %v3846 = vmul.f32 %v2585, %v3820
        %v3847 = vmul.f32 %v3780, %v3820
        %v3848 = vmul.f32 %v2590, %v3820
        %v3849 = vmul.f32 %v2595, %v3820
        %v3850 = vmul.f32 %v3785, %v3820
        %v3851 = vmul.f32 %v2600, %v3820
        %v3852 = vmul.f32 %v2605, %v3820
        %v3853 = vmul.f32 %v3790, %v3820
        %v3854 = vmul.f32 %v2610, %v3820
        %v3855 = vmul.f32 %v2615, %v3820
        %v3856 = vmul.f32 %v3795, %v3820
        %v3857 = vmul.f32 %v2620, %v3820
        %v3858 = vmul.f32 %v2625, %v3820
        %v3859 = vmul.f32 %v3800, %v3820
        %v3860 = vmul.f32 %v2630, %v3820
        %v3861 = vmul.f32 %v2635, %v3820
        %v3862 = vmul.f32 %v3805, %v3820
        %v3863 = vmul.f32 %v2640, %v3820
        %v3864 = vmul.f32 %v2645, %v3820
        %v3865 = vmul.f32 %v3810, %v3820
        %v3866 = vmul.f32 %v2650, %v3820
        %v3867 = vmul.f32 %v2655, %v3820
        %v3868 = vmul.f32 %v3815, %v3820
        %v3917 = vrot.slane %v3821, 1
        %v3918 = vrot.slane %v3822, 1
        %v3919 = vsel %vm1736, %v3917, %v3918
        %v3920 = vrot.slane %v3823, 1
        %v3921 = vsel %vm1736, %v3918, %v3920
        %v3922 = vrot.slane %v3824, 1
        %v3923 = vrot.slane %v3825, 1
        %v3924 = vsel %vm1736, %v3922, %v3923
        %v3925 = vrot.slane %v3826, 1
        %v3926 = vsel %vm1736, %v3923, %v3925
        %v3927 = vrot.slane %v3827, 1
        %v3928 = vrot.slane %v3828, 1
        %v3929 = vsel %vm1736, %v3927, %v3928
        %v3930 = vrot.slane %v3829, 1
        %v3931 = vsel %vm1736, %v3928, %v3930
        %v3932 = vrot.slane %v3830, 1
        %v3933 = vrot.slane %v3831, 1
        %v3934 = vsel %vm1736, %v3932, %v3933
        %v3935 = vrot.slane %v3832, 1
        %v3936 = vsel %vm1736, %v3933, %v3935
        %v3937 = vrot.slane %v3833, 1
        %v3938 = vrot.slane %v3834, 1
        %v3939 = vsel %vm1736, %v3937, %v3938
        %v3940 = vrot.slane %v3835, 1
        %v3941 = vsel %vm1736, %v3938, %v3940
        %v3942 = vrot.slane %v3836, 1
        %v3943 = vrot.slane %v3837, 1
        %v3944 = vsel %vm1736, %v3942, %v3943
        %v3945 = vrot.slane %v3838, 1
        %v3946 = vsel %vm1736, %v3943, %v3945
        %v3947 = vrot.slane %v3839, 1
        %v3948 = vrot.slane %v3840, 1
        %v3949 = vsel %vm1736, %v3947, %v3948
        %v3950 = vrot.slane %v3841, 1
        %v3951 = vsel %vm1736, %v3948, %v3950
        %v3952 = vrot.slane %v3842, 1
        %v3953 = vrot.slane %v3843, 1
        %v3954 = vsel %vm1736, %v3952, %v3953
        %v3955 = vrot.slane %v3844, 1
        %v3956 = vsel %vm1736, %v3953, %v3955
        %v3957 = vrot.slane %v3845, 1
        %v3958 = vrot.slane %v3846, 1
        %v3959 = vsel %vm1736, %v3957, %v3958
        %v3960 = vrot.slane %v3847, 1
        %v3961 = vsel %vm1736, %v3958, %v3960
        %v3962 = vrot.slane %v3848, 1
        %v3963 = vrot.slane %v3849, 1
        %v3964 = vsel %vm1736, %v3962, %v3963
        %v3965 = vrot.slane %v3850, 1
        %v3966 = vsel %vm1736, %v3963, %v3965
        %v3967 = vrot.slane %v3851, 1
        %v3968 = vrot.slane %v3852, 1
        %v3969 = vsel %vm1736, %v3967, %v3968
        %v3970 = vrot.slane %v3853, 1
        %v3971 = vsel %vm1736, %v3968, %v3970
        %v3972 = vrot.slane %v3854, 1
        %v3973 = vrot.slane %v3855, 1
        %v3974 = vsel %vm1736, %v3972, %v3973
        %v3975 = vrot.slane %v3856, 1
        %v3976 = vsel %vm1736, %v3973, %v3975
        %v3977 = vrot.slane %v3857, 1
        %v3978 = vrot.slane %v3858, 1
        %v3979 = vsel %vm1736, %v3977, %v3978
        %v3980 = vrot.slane %v3859, 1
        %v3981 = vsel %vm1736, %v3978, %v3980
        %v3982 = vrot.slane %v3860, 1
        %v3983 = vrot.slane %v3861, 1
        %v3984 = vsel %vm1736, %v3982, %v3983
        %v3985 = vrot.slane %v3862, 1
        %v3986 = vsel %vm1736, %v3983, %v3985
        %v3987 = vrot.slane %v3863, 1
        %v3988 = vrot.slane %v3864, 1
        %v3989 = vsel %vm1736, %v3987, %v3988
        %v3990 = vrot.slane %v3865, 1
        %v3991 = vsel %vm1736, %v3988, %v3990
        %v3992 = vrot.slane %v3866, 1
        %v3993 = vrot.slane %v3867, 1
        %v3994 = vsel %vm1736, %v3992, %v3993
        %v3995 = vrot.slane %v3868, 1
        %v3996 = vsel %vm1736, %v3993, %v3995
        %v4029 = vadd.f32 %v3705, %v3919
        %v4030 = vadd.f32 %v3706, %v3921
        %v4031 = vadd.f32 %v3707, %v3924
        %v4032 = vadd.f32 %v3708, %v3926
        %v4033 = vadd.f32 %v3709, %v3929
        %v4034 = vadd.f32 %v3710, %v3931
        %v4035 = vadd.f32 %v3711, %v3934
        %v4036 = vadd.f32 %v3712, %v3936
        %v4037 = vadd.f32 %v3713, %v3939
        %v4038 = vadd.f32 %v3714, %v3941
        %v4039 = vadd.f32 %v3715, %v3944
        %v4040 = vadd.f32 %v3716, %v3946
        %v4041 = vadd.f32 %v3717, %v3949
        %v4042 = vadd.f32 %v3718, %v3951
        %v4043 = vadd.f32 %v3719, %v3954
        %v4044 = vadd.f32 %v3720, %v3956
        %v4045 = vadd.f32 %v3721, %v3959
        %v4046 = vadd.f32 %v3722, %v3961
        %v4047 = vadd.f32 %v3723, %v3964
        %v4048 = vadd.f32 %v3724, %v3966
        %v4049 = vadd.f32 %v3725, %v3969
        %v4050 = vadd.f32 %v3726, %v3971
        %v4051 = vadd.f32 %v3727, %v3974
        %v4052 = vadd.f32 %v3728, %v3976
        %v4053 = vadd.f32 %v3729, %v3979
        %v4054 = vadd.f32 %v3730, %v3981
        %v4055 = vadd.f32 %v3731, %v3984
        %v4056 = vadd.f32 %v3732, %v3986
        %v4057 = vadd.f32 %v3733, %v3989
        %v4058 = vadd.f32 %v3734, %v3991
        %v4059 = vadd.f32 %v3735, %v3994
        %v4060 = vadd.f32 %v3736, %v3996
        %4061 = vset.pattern.permute.xlu0 1
        %4062 = vperm.xlu0 %4061, %v229
        %v4063 = vpop.permute.xlu0 %4062
        %4065 = vset.pattern.permute.xlu0 1
        %4066 = vperm.xlu0 %4065, %v232
        %v4067 = vpop.permute.xlu0 %4066
        %4069 = vset.pattern.permute.xlu0 1
        %4070 = vperm.xlu0 %4069, %v235
        %v4071 = vpop.permute.xlu0 %4070
        %4073 = vset.pattern.permute.xlu0 1
        %4074 = vperm.xlu0 %4073, %v238
        %v4075 = vpop.permute.xlu0 %4074
        %4077 = vset.pattern.permute.xlu0 1
        %4078 = vperm.xlu0 %4077, %v241
        %v4079 = vpop.permute.xlu0 %4078
        %4081 = vset.pattern.permute.xlu0 1
        %4082 = vperm.xlu0 %4081, %v244
        %v4083 = vpop.permute.xlu0 %4082
        %4085 = vset.pattern.permute.xlu0 1
        %4086 = vperm.xlu0 %4085, %v247
        %v4087 = vpop.permute.xlu0 %4086
        %4089 = vset.pattern.permute.xlu0 1
        %4090 = vperm.xlu0 %4089, %v250
        %v4091 = vpop.permute.xlu0 %4090
        %4093 = vset.pattern.permute.xlu0 1
        %4094 = vperm.xlu0 %4093, %v253
        %v4095 = vpop.permute.xlu0 %4094
        %4097 = vset.pattern.permute.xlu0 1
        %4098 = vperm.xlu0 %4097, %v256
        %v4099 = vpop.permute.xlu0 %4098
        %4101 = vset.pattern.permute.xlu0 1
        %4102 = vperm.xlu0 %4101, %v259
        %v4103 = vpop.permute.xlu0 %4102
        %4105 = vset.pattern.permute.xlu0 1
        %4106 = vperm.xlu0 %4105, %v262
        %v4107 = vpop.permute.xlu0 %4106
        %4109 = vset.pattern.permute.xlu0 1
        %4110 = vperm.xlu0 %4109, %v265
        %v4111 = vpop.permute.xlu0 %4110
        %4113 = vset.pattern.permute.xlu0 1
        %4114 = vperm.xlu0 %4113, %v268
        %v4115 = vpop.permute.xlu0 %4114
        %4117 = vset.pattern.permute.xlu0 1
        %4118 = vperm.xlu0 %4117, %v271
        %v4119 = vpop.permute.xlu0 %4118
        %4121 = vset.pattern.permute.xlu0 1
        %4122 = vperm.xlu0 %4121, %v274
        %v4123 = vpop.permute.xlu0 %4122
        %v4125 = vlaneseq
        %v4126 = vshrl.u32 %v4125, 7
        %v4127 = vsub.s32 1, %v4126
        %v4128 = vrot.slane %v312, %v4127
        %v4129 = vmul.f32 %v2727, %v4128
        %v4130 = vmul.f32 %v2731, %v4128
        %v4131 = vmul.f32 %v4063, %v4128
        %v4132 = vmul.f32 %v2735, %v4128
        %v4133 = vmul.f32 %v2739, %v4128
        %v4134 = vmul.f32 %v4067, %v4128
        %v4135 = vmul.f32 %v2743, %v4128
        %v4136 = vmul.f32 %v2747, %v4128
        %v4137 = vmul.f32 %v4071, %v4128
        %v4138 = vmul.f32 %v2751, %v4128
        %v4139 = vmul.f32 %v2755, %v4128
        %v4140 = vmul.f32 %v4075, %v4128
        %v4141 = vmul.f32 %v2759, %v4128
        %v4142 = vmul.f32 %v2763, %v4128
        %v4143 = vmul.f32 %v4079, %v4128
        %v4144 = vmul.f32 %v2767, %v4128
        %v4145 = vmul.f32 %v2771, %v4128
        %v4146 = vmul.f32 %v4083, %v4128
        %v4147 = vmul.f32 %v2775, %v4128
        %v4148 = vmul.f32 %v2779, %v4128
        %v4149 = vmul.f32 %v4087, %v4128
        %v4150 = vmul.f32 %v2783, %v4128
        %v4151 = vmul.f32 %v2787, %v4128
        %v4152 = vmul.f32 %v4091, %v4128
        %v4153 = vmul.f32 %v2791, %v4128
        %v4154 = vmul.f32 %v2795, %v4128
        %v4155 = vmul.f32 %v4095, %v4128
        %v4156 = vmul.f32 %v2799, %v4128
        %v4157 = vmul.f32 %v2803, %v4128
        %v4158 = vmul.f32 %v4099, %v4128
        %v4159 = vmul.f32 %v2807, %v4128
        %v4160 = vmul.f32 %v2811, %v4128
        %v4161 = vmul.f32 %v4103, %v4128
        %v4162 = vmul.f32 %v2815, %v4128
        %v4163 = vmul.f32 %v2819, %v4128
        %v4164 = vmul.f32 %v4107, %v4128
        %v4165 = vmul.f32 %v2823, %v4128
        %v4166 = vmul.f32 %v2827, %v4128
        %v4167 = vmul.f32 %v4111, %v4128
        %v4168 = vmul.f32 %v2831, %v4128
        %v4169 = vmul.f32 %v2835, %v4128
        %v4170 = vmul.f32 %v4115, %v4128
        %v4171 = vmul.f32 %v2839, %v4128
        %v4172 = vmul.f32 %v2843, %v4128
        %v4173 = vmul.f32 %v4119, %v4128
        %v4174 = vmul.f32 %v2847, %v4128
        %v4175 = vmul.f32 %v2851, %v4128
        %v4176 = vmul.f32 %v4123, %v4128
        %v4225 = vrot.slane %v4129, 1
        %v4226 = vrot.slane %v4130, 1
        %v4227 = vsel %vm1736, %v4225, %v4226
        %v4228 = vrot.slane %v4131, 1
        %v4229 = vsel %vm1736, %v4226, %v4228
        %v4230 = vrot.slane %v4132, 1
        %v4231 = vrot.slane %v4133, 1
        %v4232 = vsel %vm1736, %v4230, %v4231
        %v4233 = vrot.slane %v4134, 1
        %v4234 = vsel %vm1736, %v4231, %v4233
        %v4235 = vrot.slane %v4135, 1
        %v4236 = vrot.slane %v4136, 1
        %v4237 = vsel %vm1736, %v4235, %v4236
        %v4238 = vrot.slane %v4137, 1
        %v4239 = vsel %vm1736, %v4236, %v4238
        %v4240 = vrot.slane %v4138, 1
        %v4241 = vrot.slane %v4139, 1
        %v4242 = vsel %vm1736, %v4240, %v4241
        %v4243 = vrot.slane %v4140, 1
        %v4244 = vsel %vm1736, %v4241, %v4243
        %v4245 = vrot.slane %v4141, 1
        %v4246 = vrot.slane %v4142, 1
        %v4247 = vsel %vm1736, %v4245, %v4246
        %v4248 = vrot.slane %v4143, 1
        %v4249 = vsel %vm1736, %v4246, %v4248
        %v4250 = vrot.slane %v4144, 1
        %v4251 = vrot.slane %v4145, 1
        %v4252 = vsel %vm1736, %v4250, %v4251
        %v4253 = vrot.slane %v4146, 1
        %v4254 = vsel %vm1736, %v4251, %v4253
        %v4255 = vrot.slane %v4147, 1
        %v4256 = vrot.slane %v4148, 1
        %v4257 = vsel %vm1736, %v4255, %v4256
        %v4258 = vrot.slane %v4149, 1
        %v4259 = vsel %vm1736, %v4256, %v4258
        %v4260 = vrot.slane %v4150, 1
        %v4261 = vrot.slane %v4151, 1
        %v4262 = vsel %vm1736, %v4260, %v4261
        %v4263 = vrot.slane %v4152, 1
        %v4264 = vsel %vm1736, %v4261, %v4263
        %v4265 = vrot.slane %v4153, 1
        %v4266 = vrot.slane %v4154, 1
        %v4267 = vsel %vm1736, %v4265, %v4266
        %v4268 = vrot.slane %v4155, 1
        %v4269 = vsel %vm1736, %v4266, %v4268
        %v4270 = vrot.slane %v4156, 1
        %v4271 = vrot.slane %v4157, 1
        %v4272 = vsel %vm1736, %v4270, %v4271
        %v4273 = vrot.slane %v4158, 1
        %v4274 = vsel %vm1736, %v4271, %v4273
        %v4275 = vrot.slane %v4159, 1
        %v4276 = vrot.slane %v4160, 1
        %v4277 = vsel %vm1736, %v4275, %v4276
        %v4278 = vrot.slane %v4161, 1
        %v4279 = vsel %vm1736, %v4276, %v4278
        %v4280 = vrot.slane %v4162, 1
        %v4281 = vrot.slane %v4163, 1
        %v4282 = vsel %vm1736, %v4280, %v4281
        %v4283 = vrot.slane %v4164, 1
        %v4284 = vsel %vm1736, %v4281, %v4283
        %v4285 = vrot.slane %v4165, 1
        %v4286 = vrot.slane %v4166, 1
        %v4287 = vsel %vm1736, %v4285, %v4286
        %v4288 = vrot.slane %v4167, 1
        %v4289 = vsel %vm1736, %v4286, %v4288
        %v4290 = vrot.slane %v4168, 1
        %v4291 = vrot.slane %v4169, 1
        %v4292 = vsel %vm1736, %v4290, %v4291
        %v4293 = vrot.slane %v4170, 1
        %v4294 = vsel %vm1736, %v4291, %v4293
        %v4295 = vrot.slane %v4171, 1
        %v4296 = vrot.slane %v4172, 1
        %v4297 = vsel %vm1736, %v4295, %v4296
        %v4298 = vrot.slane %v4173, 1
        %v4299 = vsel %vm1736, %v4296, %v4298
        %v4300 = vrot.slane %v4174, 1
        %v4301 = vrot.slane %v4175, 1
        %v4302 = vsel %vm1736, %v4300, %v4301
        %v4303 = vrot.slane %v4176, 1
        %v4304 = vsel %vm1736, %v4301, %v4303
        %v4337 = vadd.f32 %v4029, %v4227
        %v4338 = vadd.f32 %v4030, %v4229
        %v4339 = vadd.f32 %v4031, %v4232
        %v4340 = vadd.f32 %v4032, %v4234
        %v4341 = vadd.f32 %v4033, %v4237
        %v4342 = vadd.f32 %v4034, %v4239
        %v4343 = vadd.f32 %v4035, %v4242
        %v4344 = vadd.f32 %v4036, %v4244
        %v4345 = vadd.f32 %v4037, %v4247
        %v4346 = vadd.f32 %v4038, %v4249
        %v4347 = vadd.f32 %v4039, %v4252
        %v4348 = vadd.f32 %v4040, %v4254
        %v4349 = vadd.f32 %v4041, %v4257
        %v4350 = vadd.f32 %v4042, %v4259
        %v4351 = vadd.f32 %v4043, %v4262
        %v4352 = vadd.f32 %v4044, %v4264
        %v4353 = vadd.f32 %v4045, %v4267
        %v4354 = vadd.f32 %v4046, %v4269
        %v4355 = vadd.f32 %v4047, %v4272
        %v4356 = vadd.f32 %v4048, %v4274
        %v4357 = vadd.f32 %v4049, %v4277
        %v4358 = vadd.f32 %v4050, %v4279
        %v4359 = vadd.f32 %v4051, %v4282
        %v4360 = vadd.f32 %v4052, %v4284
        %v4361 = vadd.f32 %v4053, %v4287
        %v4362 = vadd.f32 %v4054, %v4289
        %v4363 = vadd.f32 %v4055, %v4292
        %v4364 = vadd.f32 %v4056, %v4294
        %v4365 = vadd.f32 %v4057, %v4297
        %v4366 = vadd.f32 %v4058, %v4299
        %v4367 = vadd.f32 %v4059, %v4302
        %v4368 = vadd.f32 %v4060, %v4304
        %4369 = vset.pattern.permute.xlu0 2
        %4370 = vperm.xlu0 %4369, %v229
        %v4371 = vpop.permute.xlu0 %4370
        %4373 = vset.pattern.permute.xlu0 2
        %4374 = vperm.xlu0 %4373, %v232
        %v4375 = vpop.permute.xlu0 %4374
        %4377 = vset.pattern.permute.xlu0 2
        %4378 = vperm.xlu0 %4377, %v235
        %v4379 = vpop.permute.xlu0 %4378
        %4381 = vset.pattern.permute.xlu0 2
        %4382 = vperm.xlu0 %4381, %v238
        %v4383 = vpop.permute.xlu0 %4382
        %4385 = vset.pattern.permute.xlu0 2
        %4386 = vperm.xlu0 %4385, %v241
        %v4387 = vpop.permute.xlu0 %4386
        %4389 = vset.pattern.permute.xlu0 2
        %4390 = vperm.xlu0 %4389, %v244
        %v4391 = vpop.permute.xlu0 %4390
        %4393 = vset.pattern.permute.xlu0 2
        %4394 = vperm.xlu0 %4393, %v247
        %v4395 = vpop.permute.xlu0 %4394
        %4397 = vset.pattern.permute.xlu0 2
        %4398 = vperm.xlu0 %4397, %v250
        %v4399 = vpop.permute.xlu0 %4398
        %4401 = vset.pattern.permute.xlu0 2
        %4402 = vperm.xlu0 %4401, %v253
        %v4403 = vpop.permute.xlu0 %4402
        %4405 = vset.pattern.permute.xlu0 2
        %4406 = vperm.xlu0 %4405, %v256
        %v4407 = vpop.permute.xlu0 %4406
        %4409 = vset.pattern.permute.xlu0 2
        %4410 = vperm.xlu0 %4409, %v259
        %v4411 = vpop.permute.xlu0 %4410
        %4413 = vset.pattern.permute.xlu0 2
        %4414 = vperm.xlu0 %4413, %v262
        %v4415 = vpop.permute.xlu0 %4414
        %4417 = vset.pattern.permute.xlu0 2
        %4418 = vperm.xlu0 %4417, %v265
        %v4419 = vpop.permute.xlu0 %4418
        %4421 = vset.pattern.permute.xlu0 2
        %4422 = vperm.xlu0 %4421, %v268
        %v4423 = vpop.permute.xlu0 %4422
        %4425 = vset.pattern.permute.xlu0 2
        %4426 = vperm.xlu0 %4425, %v271
        %v4427 = vpop.permute.xlu0 %4426
        %4429 = vset.pattern.permute.xlu0 2
        %4430 = vperm.xlu0 %4429, %v274
        %v4431 = vpop.permute.xlu0 %4430
        %v4433 = vlaneseq
        %v4434 = vshrl.u32 %v4433, 7
        %v4435 = vsub.s32 2, %v4434
        %v4436 = vrot.slane %v312, %v4435
        %v4437 = vmul.f32 %v2923, %v4436
        %v4438 = vmul.f32 %v2927, %v4436
        %v4439 = vmul.f32 %v4371, %v4436
        %v4440 = vmul.f32 %v2931, %v4436
        %v4441 = vmul.f32 %v2935, %v4436
        %v4442 = vmul.f32 %v4375, %v4436
        %v4443 = vmul.f32 %v2939, %v4436
        %v4444 = vmul.f32 %v2943, %v4436
        %v4445 = vmul.f32 %v4379, %v4436
        %v4446 = vmul.f32 %v2947, %v4436
        %v4447 = vmul.f32 %v2951, %v4436
        %v4448 = vmul.f32 %v4383, %v4436
        %v4449 = vmul.f32 %v2955, %v4436
        %v4450 = vmul.f32 %v2959, %v4436
        %v4451 = vmul.f32 %v4387, %v4436
        %v4452 = vmul.f32 %v2963, %v4436
        %v4453 = vmul.f32 %v2967, %v4436
        %v4454 = vmul.f32 %v4391, %v4436
        %v4455 = vmul.f32 %v2971, %v4436
        %v4456 = vmul.f32 %v2975, %v4436
        %v4457 = vmul.f32 %v4395, %v4436
        %v4458 = vmul.f32 %v2979, %v4436
        %v4459 = vmul.f32 %v2983, %v4436
        %v4460 = vmul.f32 %v4399, %v4436
        %v4461 = vmul.f32 %v2987, %v4436
        %v4462 = vmul.f32 %v2991, %v4436
        %v4463 = vmul.f32 %v4403, %v4436
        %v4464 = vmul.f32 %v2995, %v4436
        %v4465 = vmul.f32 %v2999, %v4436
        %v4466 = vmul.f32 %v4407, %v4436
        %v4467 = vmul.f32 %v3003, %v4436
        %v4468 = vmul.f32 %v3007, %v4436
        %v4469 = vmul.f32 %v4411, %v4436
        %v4470 = vmul.f32 %v3011, %v4436
        %v4471 = vmul.f32 %v3015, %v4436
        %v4472 = vmul.f32 %v4415, %v4436
        %v4473 = vmul.f32 %v3019, %v4436
        %v4474 = vmul.f32 %v3023, %v4436
        %v4475 = vmul.f32 %v4419, %v4436
        %v4476 = vmul.f32 %v3027, %v4436
        %v4477 = vmul.f32 %v3031, %v4436
        %v4478 = vmul.f32 %v4423, %v4436
        %v4479 = vmul.f32 %v3035, %v4436
        %v4480 = vmul.f32 %v3039, %v4436
        %v4481 = vmul.f32 %v4427, %v4436
        %v4482 = vmul.f32 %v3043, %v4436
        %v4483 = vmul.f32 %v3047, %v4436
        %v4484 = vmul.f32 %v4431, %v4436
        %v4533 = vrot.slane %v4437, 1
        %v4534 = vrot.slane %v4438, 1
        %v4535 = vsel %vm1736, %v4533, %v4534
        %v4536 = vrot.slane %v4439, 1
        %v4537 = vsel %vm1736, %v4534, %v4536
        %v4538 = vrot.slane %v4440, 1
        %v4539 = vrot.slane %v4441, 1
        %v4540 = vsel %vm1736, %v4538, %v4539
        %v4541 = vrot.slane %v4442, 1
        %v4542 = vsel %vm1736, %v4539, %v4541
        %v4543 = vrot.slane %v4443, 1
        %v4544 = vrot.slane %v4444, 1
        %v4545 = vsel %vm1736, %v4543, %v4544
        %v4546 = vrot.slane %v4445, 1
        %v4547 = vsel %vm1736, %v4544, %v4546
        %v4548 = vrot.slane %v4446, 1
        %v4549 = vrot.slane %v4447, 1
        %v4550 = vsel %vm1736, %v4548, %v4549
        %v4551 = vrot.slane %v4448, 1
        %v4552 = vsel %vm1736, %v4549, %v4551
        %v4553 = vrot.slane %v4449, 1
        %v4554 = vrot.slane %v4450, 1
        %v4555 = vsel %vm1736, %v4553, %v4554
        %v4556 = vrot.slane %v4451, 1
        %v4557 = vsel %vm1736, %v4554, %v4556
        %v4558 = vrot.slane %v4452, 1
        %v4559 = vrot.slane %v4453, 1
        %v4560 = vsel %vm1736, %v4558, %v4559
        %v4561 = vrot.slane %v4454, 1
        %v4562 = vsel %vm1736, %v4559, %v4561
        %v4563 = vrot.slane %v4455, 1
        %v4564 = vrot.slane %v4456, 1
        %v4565 = vsel %vm1736, %v4563, %v4564
        %v4566 = vrot.slane %v4457, 1
        %v4567 = vsel %vm1736, %v4564, %v4566
        %v4568 = vrot.slane %v4458, 1
        %v4569 = vrot.slane %v4459, 1
        %v4570 = vsel %vm1736, %v4568, %v4569
        %v4571 = vrot.slane %v4460, 1
        %v4572 = vsel %vm1736, %v4569, %v4571
        %v4573 = vrot.slane %v4461, 1
        %v4574 = vrot.slane %v4462, 1
        %v4575 = vsel %vm1736, %v4573, %v4574
        %v4576 = vrot.slane %v4463, 1
        %v4577 = vsel %vm1736, %v4574, %v4576
        %v4578 = vrot.slane %v4464, 1
        %v4579 = vrot.slane %v4465, 1
        %v4580 = vsel %vm1736, %v4578, %v4579
        %v4581 = vrot.slane %v4466, 1
        %v4582 = vsel %vm1736, %v4579, %v4581
        %v4583 = vrot.slane %v4467, 1
        %v4584 = vrot.slane %v4468, 1
        %v4585 = vsel %vm1736, %v4583, %v4584
        %v4586 = vrot.slane %v4469, 1
        %v4587 = vsel %vm1736, %v4584, %v4586
        %v4588 = vrot.slane %v4470, 1
        %v4589 = vrot.slane %v4471, 1
        %v4590 = vsel %vm1736, %v4588, %v4589
        %v4591 = vrot.slane %v4472, 1
        %v4592 = vsel %vm1736, %v4589, %v4591
        %v4593 = vrot.slane %v4473, 1
        %v4594 = vrot.slane %v4474, 1
        %v4595 = vsel %vm1736, %v4593, %v4594
        %v4596 = vrot.slane %v4475, 1
        %v4597 = vsel %vm1736, %v4594, %v4596
        %v4598 = vrot.slane %v4476, 1
        %v4599 = vrot.slane %v4477, 1
        %v4600 = vsel %vm1736, %v4598, %v4599
        %v4601 = vrot.slane %v4478, 1
        %v4602 = vsel %vm1736, %v4599, %v4601
        %v4603 = vrot.slane %v4479, 1
        %v4604 = vrot.slane %v4480, 1
        %v4605 = vsel %vm1736, %v4603, %v4604
        %v4606 = vrot.slane %v4481, 1
        %v4607 = vsel %vm1736, %v4604, %v4606
        %v4608 = vrot.slane %v4482, 1
        %v4609 = vrot.slane %v4483, 1
        %v4610 = vsel %vm1736, %v4608, %v4609
        %v4611 = vrot.slane %v4484, 1
        %v4612 = vsel %vm1736, %v4609, %v4611
        %v4645 = vadd.f32 %v4337, %v4535
        %v4646 = vadd.f32 %v4338, %v4537
        %v4647 = vadd.f32 %v4339, %v4540
        %v4648 = vadd.f32 %v4340, %v4542
        %v4649 = vadd.f32 %v4341, %v4545
        %v4650 = vadd.f32 %v4342, %v4547
        %v4651 = vadd.f32 %v4343, %v4550
        %v4652 = vadd.f32 %v4344, %v4552
        %v4653 = vadd.f32 %v4345, %v4555
        %v4654 = vadd.f32 %v4346, %v4557
        %v4655 = vadd.f32 %v4347, %v4560
        %v4656 = vadd.f32 %v4348, %v4562
        %v4657 = vadd.f32 %v4349, %v4565
        %v4658 = vadd.f32 %v4350, %v4567
        %v4659 = vadd.f32 %v4351, %v4570
        %v4660 = vadd.f32 %v4352, %v4572
        %v4661 = vadd.f32 %v4353, %v4575
        %v4662 = vadd.f32 %v4354, %v4577
        %v4663 = vadd.f32 %v4355, %v4580
        %v4664 = vadd.f32 %v4356, %v4582
        %v4665 = vadd.f32 %v4357, %v4585
        %v4666 = vadd.f32 %v4358, %v4587
        %v4667 = vadd.f32 %v4359, %v4590
        %v4668 = vadd.f32 %v4360, %v4592
        %v4669 = vadd.f32 %v4361, %v4595
        %v4670 = vadd.f32 %v4362, %v4597
        %v4671 = vadd.f32 %v4363, %v4600
        %v4672 = vadd.f32 %v4364, %v4602
        %v4673 = vadd.f32 %v4365, %v4605
        %v4674 = vadd.f32 %v4366, %v4607
        %v4675 = vadd.f32 %v4367, %v4610
        %v4676 = vadd.f32 %v4368, %v4612
        %4678 = vset.pattern.permute.xlu0 0
        %4679 = vperm.xlu0 %4678, %v190
        %v4680 = vpop.permute.xlu0 %4679
        %4683 = vset.pattern.permute.xlu0 0
        %4684 = vperm.xlu0 %4683, %v191
        %v4685 = vpop.permute.xlu0 %4684
        %v4687 = vlaneseq
        %v4688 = vshrl.u32 %v4687, 7
        %v4689 = vsub.s32 0, %v4688
        %v4690 = vrot.slane %v313, %v4689
        %v4691 = vmul.f32 %v329, %v4690
        %v4692 = vmul.f32 %v334, %v4690
        %v4693 = vmul.f32 %v339, %v4690
        %v4694 = vmul.f32 %v344, %v4690
        %v4695 = vmul.f32 %v349, %v4690
        %v4696 = vmul.f32 %v354, %v4690
        %v4697 = vmul.f32 %v359, %v4690
        %v4698 = vmul.f32 %v364, %v4690
        %v4699 = vmul.f32 %v369, %v4690
        %v4700 = vmul.f32 %v374, %v4690
        %v4701 = vmul.f32 %v379, %v4690
        %v4702 = vmul.f32 %v384, %v4690
        %v4703 = vmul.f32 %v389, %v4690
        %v4704 = vmul.f32 %v394, %v4690
        %v4705 = vmul.f32 %v399, %v4690
        %v4706 = vmul.f32 %v404, %v4690
        %v4707 = vmul.f32 %v409, %v4690
        %v4708 = vmul.f32 %v414, %v4690
        %v4709 = vmul.f32 %v419, %v4690
        %v4710 = vmul.f32 %v424, %v4690
        %v4711 = vmul.f32 %v429, %v4690
        %v4712 = vmul.f32 %v434, %v4690
        %v4713 = vmul.f32 %v439, %v4690
        %v4714 = vmul.f32 %v444, %v4690
        %v4715 = vmul.f32 %v449, %v4690
        %v4716 = vmul.f32 %v454, %v4690
        %v4717 = vmul.f32 %v459, %v4690
        %v4718 = vmul.f32 %v464, %v4690
        %v4719 = vmul.f32 %v469, %v4690
        %v4720 = vmul.f32 %v474, %v4690
        %v4721 = vmul.f32 %v4680, %v4690
        %v4722 = vmul.f32 %v4685, %v4690
        %v4723 = vadd.f32 %v4645, %v4691
        %v4724 = vadd.f32 %v4646, %v4692
        %v4725 = vadd.f32 %v4647, %v4693
        %v4726 = vadd.f32 %v4648, %v4694
        %v4727 = vadd.f32 %v4649, %v4695
        %v4728 = vadd.f32 %v4650, %v4696
        %v4729 = vadd.f32 %v4651, %v4697
        %v4730 = vadd.f32 %v4652, %v4698
        %v4731 = vadd.f32 %v4653, %v4699
        %v4732 = vadd.f32 %v4654, %v4700
        %v4733 = vadd.f32 %v4655, %v4701
        %v4734 = vadd.f32 %v4656, %v4702
        %v4735 = vadd.f32 %v4657, %v4703
        %v4736 = vadd.f32 %v4658, %v4704
        %v4737 = vadd.f32 %v4659, %v4705
        %v4738 = vadd.f32 %v4660, %v4706
        %v4739 = vadd.f32 %v4661, %v4707
        %v4740 = vadd.f32 %v4662, %v4708
        %v4741 = vadd.f32 %v4663, %v4709
        %v4742 = vadd.f32 %v4664, %v4710
        %v4743 = vadd.f32 %v4665, %v4711
        %v4744 = vadd.f32 %v4666, %v4712
        %v4745 = vadd.f32 %v4667, %v4713
        %v4746 = vadd.f32 %v4668, %v4714
        %v4747 = vadd.f32 %v4669, %v4715
        %v4748 = vadd.f32 %v4670, %v4716
        %v4749 = vadd.f32 %v4671, %v4717
        %v4750 = vadd.f32 %v4672, %v4718
        %v4751 = vadd.f32 %v4673, %v4719
        %v4752 = vadd.f32 %v4674, %v4720
        %v4753 = vadd.f32 %v4675, %v4721
        %v4754 = vadd.f32 %v4676, %v4722
        %4755 = vset.pattern.permute.xlu0 1
        %4756 = vperm.xlu0 %4755, %v190
        %v4757 = vpop.permute.xlu0 %4756
        %4759 = vset.pattern.permute.xlu0 1
        %4760 = vperm.xlu0 %4759, %v191
        %v4761 = vpop.permute.xlu0 %4760
        %v4763 = vlaneseq
        %v4764 = vshrl.u32 %v4763, 7
        %v4765 = vsub.s32 1, %v4764
        %v4766 = vrot.slane %v313, %v4765
        %v4767 = vmul.f32 %v554, %v4766
        %v4768 = vmul.f32 %v558, %v4766
        %v4769 = vmul.f32 %v562, %v4766
        %v4770 = vmul.f32 %v566, %v4766
        %v4771 = vmul.f32 %v570, %v4766
        %v4772 = vmul.f32 %v574, %v4766
        %v4773 = vmul.f32 %v578, %v4766
        %v4774 = vmul.f32 %v582, %v4766
        %v4775 = vmul.f32 %v586, %v4766
        %v4776 = vmul.f32 %v590, %v4766
        %v4777 = vmul.f32 %v594, %v4766
        %v4778 = vmul.f32 %v598, %v4766
        %v4779 = vmul.f32 %v602, %v4766
        %v4780 = vmul.f32 %v606, %v4766
        %v4781 = vmul.f32 %v610, %v4766
        %v4782 = vmul.f32 %v614, %v4766
        %v4783 = vmul.f32 %v618, %v4766
        %v4784 = vmul.f32 %v622, %v4766
        %v4785 = vmul.f32 %v626, %v4766
        %v4786 = vmul.f32 %v630, %v4766
        %v4787 = vmul.f32 %v634, %v4766
        %v4788 = vmul.f32 %v638, %v4766
        %v4789 = vmul.f32 %v642, %v4766
        %v4790 = vmul.f32 %v646, %v4766
        %v4791 = vmul.f32 %v650, %v4766
        %v4792 = vmul.f32 %v654, %v4766
        %v4793 = vmul.f32 %v658, %v4766
        %v4794 = vmul.f32 %v662, %v4766
        %v4795 = vmul.f32 %v666, %v4766
        %v4796 = vmul.f32 %v670, %v4766
        %v4797 = vmul.f32 %v4757, %v4766
        %v4798 = vmul.f32 %v4761, %v4766
        %v4799 = vadd.f32 %v4723, %v4767
        %v4800 = vadd.f32 %v4724, %v4768
        %v4801 = vadd.f32 %v4725, %v4769
        %v4802 = vadd.f32 %v4726, %v4770
        %v4803 = vadd.f32 %v4727, %v4771
        %v4804 = vadd.f32 %v4728, %v4772
        %v4805 = vadd.f32 %v4729, %v4773
        %v4806 = vadd.f32 %v4730, %v4774
        %v4807 = vadd.f32 %v4731, %v4775
        %v4808 = vadd.f32 %v4732, %v4776
        %v4809 = vadd.f32 %v4733, %v4777
        %v4810 = vadd.f32 %v4734, %v4778
        %v4811 = vadd.f32 %v4735, %v4779
        %v4812 = vadd.f32 %v4736, %v4780
        %v4813 = vadd.f32 %v4737, %v4781
        %v4814 = vadd.f32 %v4738, %v4782
        %v4815 = vadd.f32 %v4739, %v4783
        %v4816 = vadd.f32 %v4740, %v4784
        %v4817 = vadd.f32 %v4741, %v4785
        %v4818 = vadd.f32 %v4742, %v4786
        %v4819 = vadd.f32 %v4743, %v4787
        %v4820 = vadd.f32 %v4744, %v4788
        %v4821 = vadd.f32 %v4745, %v4789
        %v4822 = vadd.f32 %v4746, %v4790
        %v4823 = vadd.f32 %v4747, %v4791
        %v4824 = vadd.f32 %v4748, %v4792
        %v4825 = vadd.f32 %v4749, %v4793
        %v4826 = vadd.f32 %v4750, %v4794
        %v4827 = vadd.f32 %v4751, %v4795
        %v4828 = vadd.f32 %v4752, %v4796
        %v4829 = vadd.f32 %v4753, %v4797
        %v4830 = vadd.f32 %v4754, %v4798
        %4831 = vset.pattern.permute.xlu0 2
        %4832 = vperm.xlu0 %4831, %v190
        %v4833 = vpop.permute.xlu0 %4832
        %4835 = vset.pattern.permute.xlu0 2
        %4836 = vperm.xlu0 %4835, %v191
        %v4837 = vpop.permute.xlu0 %4836
        %v4839 = vlaneseq
        %v4840 = vshrl.u32 %v4839, 7
        %v4841 = vsub.s32 2, %v4840
        %v4842 = vrot.slane %v313, %v4841
        %v4843 = vmul.f32 %v750, %v4842
        %v4844 = vmul.f32 %v754, %v4842
        %v4845 = vmul.f32 %v758, %v4842
        %v4846 = vmul.f32 %v762, %v4842
        %v4847 = vmul.f32 %v766, %v4842
        %v4848 = vmul.f32 %v770, %v4842
        %v4849 = vmul.f32 %v774, %v4842
        %v4850 = vmul.f32 %v778, %v4842
        %v4851 = vmul.f32 %v782, %v4842
        %v4852 = vmul.f32 %v786, %v4842
        %v4853 = vmul.f32 %v790, %v4842
        %v4854 = vmul.f32 %v794, %v4842
        %v4855 = vmul.f32 %v798, %v4842
        %v4856 = vmul.f32 %v802, %v4842
        %v4857 = vmul.f32 %v806, %v4842
        %v4858 = vmul.f32 %v810, %v4842
        %v4859 = vmul.f32 %v814, %v4842
        %v4860 = vmul.f32 %v818, %v4842
        %v4861 = vmul.f32 %v822, %v4842
        %v4862 = vmul.f32 %v826, %v4842
        %v4863 = vmul.f32 %v830, %v4842
        %v4864 = vmul.f32 %v834, %v4842
        %v4865 = vmul.f32 %v838, %v4842
        %v4866 = vmul.f32 %v842, %v4842
        %v4867 = vmul.f32 %v846, %v4842
        %v4868 = vmul.f32 %v850, %v4842
        %v4869 = vmul.f32 %v854, %v4842
        %v4870 = vmul.f32 %v858, %v4842
        %v4871 = vmul.f32 %v862, %v4842
        %v4872 = vmul.f32 %v866, %v4842
        %v4873 = vmul.f32 %v4833, %v4842
        %v4874 = vmul.f32 %v4837, %v4842
        %v4875 = vadd.f32 %v4799, %v4843
        %v4876 = vadd.f32 %v4800, %v4844
        %v4877 = vadd.f32 %v4801, %v4845
        %v4878 = vadd.f32 %v4802, %v4846
        %v4879 = vadd.f32 %v4803, %v4847
        %v4880 = vadd.f32 %v4804, %v4848
        %v4881 = vadd.f32 %v4805, %v4849
        %v4882 = vadd.f32 %v4806, %v4850
        %v4883 = vadd.f32 %v4807, %v4851
        %v4884 = vadd.f32 %v4808, %v4852
        %v4885 = vadd.f32 %v4809, %v4853
        %v4886 = vadd.f32 %v4810, %v4854
        %v4887 = vadd.f32 %v4811, %v4855
        %v4888 = vadd.f32 %v4812, %v4856
        %v4889 = vadd.f32 %v4813, %v4857
        %v4890 = vadd.f32 %v4814, %v4858
        %v4891 = vadd.f32 %v4815, %v4859
        %v4892 = vadd.f32 %v4816, %v4860
        %v4893 = vadd.f32 %v4817, %v4861
        %v4894 = vadd.f32 %v4818, %v4862
        %v4895 = vadd.f32 %v4819, %v4863
        %v4896 = vadd.f32 %v4820, %v4864
        %v4897 = vadd.f32 %v4821, %v4865
        %v4898 = vadd.f32 %v4822, %v4866
        %v4899 = vadd.f32 %v4823, %v4867
        %v4900 = vadd.f32 %v4824, %v4868
        %v4901 = vadd.f32 %v4825, %v4869
        %v4902 = vadd.f32 %v4826, %v4870
        %v4903 = vadd.f32 %v4827, %v4871
        %v4904 = vadd.f32 %v4828, %v4872
        %v4905 = vadd.f32 %v4829, %v4873
        %v4906 = vadd.f32 %v4830, %v4874
        %4908 = vset.pattern.permute.xlu0 0
        %4909 = vperm.xlu0 %4908, %v225
        %v4910 = vpop.permute.xlu0 %4909
        %4913 = vset.pattern.permute.xlu0 0
        %4914 = vperm.xlu0 %4913, %v226
        %v4915 = vpop.permute.xlu0 %4914
        %v4917 = vlaneseq
        %v4918 = vshrl.u32 %v4917, 7
        %v4919 = vsub.s32 0, %v4918
        %v4920 = vrot.slane %v314, %v4919
        %v4921 = vmul.f32 %v949, %v4920
        %v4922 = vmul.f32 %v954, %v4920
        %v4923 = vmul.f32 %v959, %v4920
        %v4924 = vmul.f32 %v964, %v4920
        %v4925 = vmul.f32 %v969, %v4920
        %v4926 = vmul.f32 %v974, %v4920
        %v4927 = vmul.f32 %v979, %v4920
        %v4928 = vmul.f32 %v984, %v4920
        %v4929 = vmul.f32 %v989, %v4920
        %v4930 = vmul.f32 %v994, %v4920
        %v4931 = vmul.f32 %v999, %v4920
        %v4932 = vmul.f32 %v1004, %v4920
        %v4933 = vmul.f32 %v1009, %v4920
        %v4934 = vmul.f32 %v1014, %v4920
        %v4935 = vmul.f32 %v1019, %v4920
        %v4936 = vmul.f32 %v1024, %v4920
        %v4937 = vmul.f32 %v1029, %v4920
        %v4938 = vmul.f32 %v1034, %v4920
        %v4939 = vmul.f32 %v1039, %v4920
        %v4940 = vmul.f32 %v1044, %v4920
        %v4941 = vmul.f32 %v1049, %v4920
        %v4942 = vmul.f32 %v1054, %v4920
        %v4943 = vmul.f32 %v1059, %v4920
        %v4944 = vmul.f32 %v1064, %v4920
        %v4945 = vmul.f32 %v1069, %v4920
        %v4946 = vmul.f32 %v1074, %v4920
        %v4947 = vmul.f32 %v1079, %v4920
        %v4948 = vmul.f32 %v1084, %v4920
        %v4949 = vmul.f32 %v1089, %v4920
        %v4950 = vmul.f32 %v1094, %v4920
        %v4951 = vmul.f32 %v4910, %v4920
        %v4952 = vmul.f32 %v4915, %v4920
        %v4953 = vadd.f32 %v4875, %v4921
        %v4954 = vadd.f32 %v4876, %v4922
        %v4955 = vadd.f32 %v4877, %v4923
        %v4956 = vadd.f32 %v4878, %v4924
        %v4957 = vadd.f32 %v4879, %v4925
        %v4958 = vadd.f32 %v4880, %v4926
        %v4959 = vadd.f32 %v4881, %v4927
        %v4960 = vadd.f32 %v4882, %v4928
        %v4961 = vadd.f32 %v4883, %v4929
        %v4962 = vadd.f32 %v4884, %v4930
        %v4963 = vadd.f32 %v4885, %v4931
        %v4964 = vadd.f32 %v4886, %v4932
        %v4965 = vadd.f32 %v4887, %v4933
        %v4966 = vadd.f32 %v4888, %v4934
        %v4967 = vadd.f32 %v4889, %v4935
        %v4968 = vadd.f32 %v4890, %v4936
        %v4969 = vadd.f32 %v4891, %v4937
        %v4970 = vadd.f32 %v4892, %v4938
        %v4971 = vadd.f32 %v4893, %v4939
        %v4972 = vadd.f32 %v4894, %v4940
        %v4973 = vadd.f32 %v4895, %v4941
        %v4974 = vadd.f32 %v4896, %v4942
        %v4975 = vadd.f32 %v4897, %v4943
        %v4976 = vadd.f32 %v4898, %v4944
        %v4977 = vadd.f32 %v4899, %v4945
        %v4978 = vadd.f32 %v4900, %v4946
        %v4979 = vadd.f32 %v4901, %v4947
        %v4980 = vadd.f32 %v4902, %v4948
        %v4981 = vadd.f32 %v4903, %v4949
        %v4982 = vadd.f32 %v4904, %v4950
        %v4983 = vadd.f32 %v4905, %v4951
        %v4984 = vadd.f32 %v4906, %v4952
        %4985 = vset.pattern.permute.xlu0 1
        %4986 = vperm.xlu0 %4985, %v225
        %v4987 = vpop.permute.xlu0 %4986
        %4989 = vset.pattern.permute.xlu0 1
        %4990 = vperm.xlu0 %4989, %v226
        %v4991 = vpop.permute.xlu0 %4990
        %v4993 = vlaneseq
        %v4994 = vshrl.u32 %v4993, 7
        %v4995 = vsub.s32 1, %v4994
        %v4996 = vrot.slane %v314, %v4995
        %v4997 = vmul.f32 %v1174, %v4996
        %v4998 = vmul.f32 %v1178, %v4996
        %v4999 = vmul.f32 %v1182, %v4996
        %v5000 = vmul.f32 %v1186, %v4996
        %v5001 = vmul.f32 %v1190, %v4996
        %v5002 = vmul.f32 %v1194, %v4996
        %v5003 = vmul.f32 %v1198, %v4996
        %v5004 = vmul.f32 %v1202, %v4996
        %v5005 = vmul.f32 %v1206, %v4996
        %v5006 = vmul.f32 %v1210, %v4996
        %v5007 = vmul.f32 %v1214, %v4996
        %v5008 = vmul.f32 %v1218, %v4996
        %v5009 = vmul.f32 %v1222, %v4996
        %v5010 = vmul.f32 %v1226, %v4996
        %v5011 = vmul.f32 %v1230, %v4996
        %v5012 = vmul.f32 %v1234, %v4996
        %v5013 = vmul.f32 %v1238, %v4996
        %v5014 = vmul.f32 %v1242, %v4996
        %v5015 = vmul.f32 %v1246, %v4996
        %v5016 = vmul.f32 %v1250, %v4996
        %v5017 = vmul.f32 %v1254, %v4996
        %v5018 = vmul.f32 %v1258, %v4996
        %v5019 = vmul.f32 %v1262, %v4996
        %v5020 = vmul.f32 %v1266, %v4996
        %v5021 = vmul.f32 %v1270, %v4996
        %v5022 = vmul.f32 %v1274, %v4996
        %v5023 = vmul.f32 %v1278, %v4996
        %v5024 = vmul.f32 %v1282, %v4996
        %v5025 = vmul.f32 %v1286, %v4996
        %v5026 = vmul.f32 %v1290, %v4996
        %v5027 = vmul.f32 %v4987, %v4996
        %v5028 = vmul.f32 %v4991, %v4996
        %v5029 = vadd.f32 %v4953, %v4997
        %v5030 = vadd.f32 %v4954, %v4998
        %v5031 = vadd.f32 %v4955, %v4999
        %v5032 = vadd.f32 %v4956, %v5000
        %v5033 = vadd.f32 %v4957, %v5001
        %v5034 = vadd.f32 %v4958, %v5002
        %v5035 = vadd.f32 %v4959, %v5003
        %v5036 = vadd.f32 %v4960, %v5004
        %v5037 = vadd.f32 %v4961, %v5005
        %v5038 = vadd.f32 %v4962, %v5006
        %v5039 = vadd.f32 %v4963, %v5007
        %v5040 = vadd.f32 %v4964, %v5008
        %v5041 = vadd.f32 %v4965, %v5009
        %v5042 = vadd.f32 %v4966, %v5010
        %v5043 = vadd.f32 %v4967, %v5011
        %v5044 = vadd.f32 %v4968, %v5012
        %v5045 = vadd.f32 %v4969, %v5013
        %v5046 = vadd.f32 %v4970, %v5014
        %v5047 = vadd.f32 %v4971, %v5015
        %v5048 = vadd.f32 %v4972, %v5016
        %v5049 = vadd.f32 %v4973, %v5017
        %v5050 = vadd.f32 %v4974, %v5018
        %v5051 = vadd.f32 %v4975, %v5019
        %v5052 = vadd.f32 %v4976, %v5020
        %v5053 = vadd.f32 %v4977, %v5021
        %v5054 = vadd.f32 %v4978, %v5022
        %v5055 = vadd.f32 %v4979, %v5023
        %v5056 = vadd.f32 %v4980, %v5024
        %v5057 = vadd.f32 %v4981, %v5025
        %v5058 = vadd.f32 %v4982, %v5026
        %v5059 = vadd.f32 %v4983, %v5027
        %v5060 = vadd.f32 %v4984, %v5028
        %5061 = vset.pattern.permute.xlu0 2
        %5062 = vperm.xlu0 %5061, %v225
        %v5063 = vpop.permute.xlu0 %5062
        %5065 = vset.pattern.permute.xlu0 2
        %5066 = vperm.xlu0 %5065, %v226
        %v5067 = vpop.permute.xlu0 %5066
        %v5069 = vlaneseq
        %v5070 = vshrl.u32 %v5069, 7
        %v5071 = vsub.s32 2, %v5070
        %v5072 = vrot.slane %v314, %v5071
        %v5073 = vmul.f32 %v1370, %v5072
        %v5074 = vmul.f32 %v1374, %v5072
        %v5075 = vmul.f32 %v1378, %v5072
        %v5076 = vmul.f32 %v1382, %v5072
        %v5077 = vmul.f32 %v1386, %v5072
        %v5078 = vmul.f32 %v1390, %v5072
        %v5079 = vmul.f32 %v1394, %v5072
        %v5080 = vmul.f32 %v1398, %v5072
        %v5081 = vmul.f32 %v1402, %v5072
        %v5082 = vmul.f32 %v1406, %v5072
        %v5083 = vmul.f32 %v1410, %v5072
        %v5084 = vmul.f32 %v1414, %v5072
        %v5085 = vmul.f32 %v1418, %v5072
        %v5086 = vmul.f32 %v1422, %v5072
        %v5087 = vmul.f32 %v1426, %v5072
        %v5088 = vmul.f32 %v1430, %v5072
        %v5089 = vmul.f32 %v1434, %v5072
        %v5090 = vmul.f32 %v1438, %v5072
        %v5091 = vmul.f32 %v1442, %v5072
        %v5092 = vmul.f32 %v1446, %v5072
        %v5093 = vmul.f32 %v1450, %v5072
        %v5094 = vmul.f32 %v1454, %v5072
        %v5095 = vmul.f32 %v1458, %v5072
        %v5096 = vmul.f32 %v1462, %v5072
        %v5097 = vmul.f32 %v1466, %v5072
        %v5098 = vmul.f32 %v1470, %v5072
        %v5099 = vmul.f32 %v1474, %v5072
        %v5100 = vmul.f32 %v1478, %v5072
        %v5101 = vmul.f32 %v1482, %v5072
        %v5102 = vmul.f32 %v1486, %v5072
        %v5103 = vmul.f32 %v5063, %v5072
        %v5104 = vmul.f32 %v5067, %v5072
        %v5105 = vadd.f32 %v5029, %v5073
        %v5106 = vadd.f32 %v5030, %v5074
        %v5107 = vadd.f32 %v5031, %v5075
        %v5108 = vadd.f32 %v5032, %v5076
        %v5109 = vadd.f32 %v5033, %v5077
        %v5110 = vadd.f32 %v5034, %v5078
        %v5111 = vadd.f32 %v5035, %v5079
        %v5112 = vadd.f32 %v5036, %v5080
        %v5113 = vadd.f32 %v5037, %v5081
        %v5114 = vadd.f32 %v5038, %v5082
        %v5115 = vadd.f32 %v5039, %v5083
        %v5116 = vadd.f32 %v5040, %v5084
        %v5117 = vadd.f32 %v5041, %v5085
        %v5118 = vadd.f32 %v5042, %v5086
        %v5119 = vadd.f32 %v5043, %v5087
        %v5120 = vadd.f32 %v5044, %v5088
        %v5121 = vadd.f32 %v5045, %v5089
        %v5122 = vadd.f32 %v5046, %v5090
        %v5123 = vadd.f32 %v5047, %v5091
        %v5124 = vadd.f32 %v5048, %v5092
        %v5125 = vadd.f32 %v5049, %v5093
        %v5126 = vadd.f32 %v5050, %v5094
        %v5127 = vadd.f32 %v5051, %v5095
        %v5128 = vadd.f32 %v5052, %v5096
        %v5129 = vadd.f32 %v5053, %v5097
        %v5130 = vadd.f32 %v5054, %v5098
        %v5131 = vadd.f32 %v5055, %v5099
        %v5132 = vadd.f32 %v5056, %v5100
        %v5133 = vadd.f32 %v5057, %v5101
        %v5134 = vadd.f32 %v5058, %v5102
        %v5135 = vadd.f32 %v5059, %v5103
        %v5136 = vadd.f32 %v5060, %v5104
        %5138 = vset.pattern.permute.xlu0 0
        %5139 = vperm.xlu0 %5138, %v192
        %v5140 = vpop.permute.xlu0 %5139
        %v5142 = vlaneseq
        %v5143 = vshrl.u32 %v5142, 7
        %v5144 = vsub.s32 0, %v5143
        %v5145 = vrot.slane %v315, %v5144
        %v5146 = vmul.f32 %v329, %v5145
        %v5147 = vmul.f32 %v334, %v5145
        %v5148 = vmul.f32 %v1564, %v5145
        %v5149 = vmul.f32 %v339, %v5145
        %v5150 = vmul.f32 %v344, %v5145
        %v5151 = vmul.f32 %v1569, %v5145
        %v5152 = vmul.f32 %v349, %v5145
        %v5153 = vmul.f32 %v354, %v5145
        %v5154 = vmul.f32 %v1574, %v5145
        %v5155 = vmul.f32 %v359, %v5145
        %v5156 = vmul.f32 %v364, %v5145
        %v5157 = vmul.f32 %v1579, %v5145
        %v5158 = vmul.f32 %v369, %v5145
        %v5159 = vmul.f32 %v374, %v5145
        %v5160 = vmul.f32 %v1584, %v5145
        %v5161 = vmul.f32 %v379, %v5145
        %v5162 = vmul.f32 %v384, %v5145
        %v5163 = vmul.f32 %v1589, %v5145
        %v5164 = vmul.f32 %v389, %v5145
        %v5165 = vmul.f32 %v394, %v5145
        %v5166 = vmul.f32 %v1594, %v5145
        %v5167 = vmul.f32 %v399, %v5145
        %v5168 = vmul.f32 %v404, %v5145
        %v5169 = vmul.f32 %v1599, %v5145
        %v5170 = vmul.f32 %v409, %v5145
        %v5171 = vmul.f32 %v414, %v5145
        %v5172 = vmul.f32 %v1604, %v5145
        %v5173 = vmul.f32 %v419, %v5145
        %v5174 = vmul.f32 %v424, %v5145
        %v5175 = vmul.f32 %v1609, %v5145
        %v5176 = vmul.f32 %v429, %v5145
        %v5177 = vmul.f32 %v434, %v5145
        %v5178 = vmul.f32 %v1614, %v5145
        %v5179 = vmul.f32 %v439, %v5145
        %v5180 = vmul.f32 %v444, %v5145
        %v5181 = vmul.f32 %v1619, %v5145
        %v5182 = vmul.f32 %v449, %v5145
        %v5183 = vmul.f32 %v454, %v5145
        %v5184 = vmul.f32 %v1624, %v5145
        %v5185 = vmul.f32 %v459, %v5145
        %v5186 = vmul.f32 %v464, %v5145
        %v5187 = vmul.f32 %v1629, %v5145
        %v5188 = vmul.f32 %v469, %v5145
        %v5189 = vmul.f32 %v474, %v5145
        %v5190 = vmul.f32 %v1634, %v5145
        %v5191 = vmul.f32 %v4680, %v5145
        %v5192 = vmul.f32 %v4685, %v5145
        %v5193 = vmul.f32 %v5140, %v5145
        %v5242 = vrot.slane %v5146, 1
        %v5243 = vrot.slane %v5147, 1
        %v5244 = vsel %vm1736, %v5242, %v5243
        %v5245 = vrot.slane %v5148, 1
        %v5246 = vsel %vm1736, %v5243, %v5245
        %v5247 = vrot.slane %v5149, 1
        %v5248 = vrot.slane %v5150, 1
        %v5249 = vsel %vm1736, %v5247, %v5248
        %v5250 = vrot.slane %v5151, 1
        %v5251 = vsel %vm1736, %v5248, %v5250
        %v5252 = vrot.slane %v5152, 1
        %v5253 = vrot.slane %v5153, 1
        %v5254 = vsel %vm1736, %v5252, %v5253
        %v5255 = vrot.slane %v5154, 1
        %v5256 = vsel %vm1736, %v5253, %v5255
        %v5257 = vrot.slane %v5155, 1
        %v5258 = vrot.slane %v5156, 1
        %v5259 = vsel %vm1736, %v5257, %v5258
        %v5260 = vrot.slane %v5157, 1
        %v5261 = vsel %vm1736, %v5258, %v5260
        %v5262 = vrot.slane %v5158, 1
        %v5263 = vrot.slane %v5159, 1
        %v5264 = vsel %vm1736, %v5262, %v5263
        %v5265 = vrot.slane %v5160, 1
        %v5266 = vsel %vm1736, %v5263, %v5265
        %v5267 = vrot.slane %v5161, 1
        %v5268 = vrot.slane %v5162, 1
        %v5269 = vsel %vm1736, %v5267, %v5268
        %v5270 = vrot.slane %v5163, 1
        %v5271 = vsel %vm1736, %v5268, %v5270
        %v5272 = vrot.slane %v5164, 1
        %v5273 = vrot.slane %v5165, 1
        %v5274 = vsel %vm1736, %v5272, %v5273
        %v5275 = vrot.slane %v5166, 1
        %v5276 = vsel %vm1736, %v5273, %v5275
        %v5277 = vrot.slane %v5167, 1
        %v5278 = vrot.slane %v5168, 1
        %v5279 = vsel %vm1736, %v5277, %v5278
        %v5280 = vrot.slane %v5169, 1
        %v5281 = vsel %vm1736, %v5278, %v5280
        %v5282 = vrot.slane %v5170, 1
        %v5283 = vrot.slane %v5171, 1
        %v5284 = vsel %vm1736, %v5282, %v5283
        %v5285 = vrot.slane %v5172, 1
        %v5286 = vsel %vm1736, %v5283, %v5285
        %v5287 = vrot.slane %v5173, 1
        %v5288 = vrot.slane %v5174, 1
        %v5289 = vsel %vm1736, %v5287, %v5288
        %v5290 = vrot.slane %v5175, 1
        %v5291 = vsel %vm1736, %v5288, %v5290
        %v5292 = vrot.slane %v5176, 1
        %v5293 = vrot.slane %v5177, 1
        %v5294 = vsel %vm1736, %v5292, %v5293
        %v5295 = vrot.slane %v5178, 1
        %v5296 = vsel %vm1736, %v5293, %v5295
        %v5297 = vrot.slane %v5179, 1
        %v5298 = vrot.slane %v5180, 1
        %v5299 = vsel %vm1736, %v5297, %v5298
        %v5300 = vrot.slane %v5181, 1
        %v5301 = vsel %vm1736, %v5298, %v5300
        %v5302 = vrot.slane %v5182, 1
        %v5303 = vrot.slane %v5183, 1
        %v5304 = vsel %vm1736, %v5302, %v5303
        %v5305 = vrot.slane %v5184, 1
        %v5306 = vsel %vm1736, %v5303, %v5305
        %v5307 = vrot.slane %v5185, 1
        %v5308 = vrot.slane %v5186, 1
        %v5309 = vsel %vm1736, %v5307, %v5308
        %v5310 = vrot.slane %v5187, 1
        %v5311 = vsel %vm1736, %v5308, %v5310
        %v5312 = vrot.slane %v5188, 1
        %v5313 = vrot.slane %v5189, 1
        %v5314 = vsel %vm1736, %v5312, %v5313
        %v5315 = vrot.slane %v5190, 1
        %v5316 = vsel %vm1736, %v5313, %v5315
        %v5317 = vrot.slane %v5191, 1
        %v5318 = vrot.slane %v5192, 1
        %v5319 = vsel %vm1736, %v5317, %v5318
        %v5320 = vrot.slane %v5193, 1
        %v5321 = vsel %vm1736, %v5318, %v5320
        %v5354 = vadd.f32 %v5105, %v5244
        %v5355 = vadd.f32 %v5106, %v5246
        %v5356 = vadd.f32 %v5107, %v5249
        %v5357 = vadd.f32 %v5108, %v5251
        %v5358 = vadd.f32 %v5109, %v5254
        %v5359 = vadd.f32 %v5110, %v5256
        %v5360 = vadd.f32 %v5111, %v5259
        %v5361 = vadd.f32 %v5112, %v5261
        %v5362 = vadd.f32 %v5113, %v5264
        %v5363 = vadd.f32 %v5114, %v5266
        %v5364 = vadd.f32 %v5115, %v5269
        %v5365 = vadd.f32 %v5116, %v5271
        %v5366 = vadd.f32 %v5117, %v5274
        %v5367 = vadd.f32 %v5118, %v5276
        %v5368 = vadd.f32 %v5119, %v5279
        %v5369 = vadd.f32 %v5120, %v5281
        %v5370 = vadd.f32 %v5121, %v5284
        %v5371 = vadd.f32 %v5122, %v5286
        %v5372 = vadd.f32 %v5123, %v5289
        %v5373 = vadd.f32 %v5124, %v5291
        %v5374 = vadd.f32 %v5125, %v5294
        %v5375 = vadd.f32 %v5126, %v5296
        %v5376 = vadd.f32 %v5127, %v5299
        %v5377 = vadd.f32 %v5128, %v5301
        %v5378 = vadd.f32 %v5129, %v5304
        %v5379 = vadd.f32 %v5130, %v5306
        %v5380 = vadd.f32 %v5131, %v5309
        %v5381 = vadd.f32 %v5132, %v5311
        %v5382 = vadd.f32 %v5133, %v5314
        %v5383 = vadd.f32 %v5134, %v5316
        %v5384 = vadd.f32 %v5135, %v5319
        %v5385 = vadd.f32 %v5136, %v5321
        %5386 = vset.pattern.permute.xlu0 1
        %5387 = vperm.xlu0 %5386, %v192
        %v5388 = vpop.permute.xlu0 %5387
        %v5390 = vlaneseq
        %v5391 = vshrl.u32 %v5390, 7
        %v5392 = vsub.s32 1, %v5391
        %v5393 = vrot.slane %v315, %v5392
        %v5394 = vmul.f32 %v554, %v5393
        %v5395 = vmul.f32 %v558, %v5393
        %v5396 = vmul.f32 %v1887, %v5393
        %v5397 = vmul.f32 %v562, %v5393
        %v5398 = vmul.f32 %v566, %v5393
        %v5399 = vmul.f32 %v1891, %v5393
        %v5400 = vmul.f32 %v570, %v5393
        %v5401 = vmul.f32 %v574, %v5393
        %v5402 = vmul.f32 %v1895, %v5393
        %v5403 = vmul.f32 %v578, %v5393
        %v5404 = vmul.f32 %v582, %v5393
        %v5405 = vmul.f32 %v1899, %v5393
        %v5406 = vmul.f32 %v586, %v5393
        %v5407 = vmul.f32 %v590, %v5393
        %v5408 = vmul.f32 %v1903, %v5393
        %v5409 = vmul.f32 %v594, %v5393
        %v5410 = vmul.f32 %v598, %v5393
        %v5411 = vmul.f32 %v1907, %v5393
        %v5412 = vmul.f32 %v602, %v5393
        %v5413 = vmul.f32 %v606, %v5393
        %v5414 = vmul.f32 %v1911, %v5393
        %v5415 = vmul.f32 %v610, %v5393
        %v5416 = vmul.f32 %v614, %v5393
        %v5417 = vmul.f32 %v1915, %v5393
        %v5418 = vmul.f32 %v618, %v5393
        %v5419 = vmul.f32 %v622, %v5393
        %v5420 = vmul.f32 %v1919, %v5393
        %v5421 = vmul.f32 %v626, %v5393
        %v5422 = vmul.f32 %v630, %v5393
        %v5423 = vmul.f32 %v1923, %v5393
        %v5424 = vmul.f32 %v634, %v5393
        %v5425 = vmul.f32 %v638, %v5393
        %v5426 = vmul.f32 %v1927, %v5393
        %v5427 = vmul.f32 %v642, %v5393
        %v5428 = vmul.f32 %v646, %v5393
        %v5429 = vmul.f32 %v1931, %v5393
        %v5430 = vmul.f32 %v650, %v5393
        %v5431 = vmul.f32 %v654, %v5393
        %v5432 = vmul.f32 %v1935, %v5393
        %v5433 = vmul.f32 %v658, %v5393
        %v5434 = vmul.f32 %v662, %v5393
        %v5435 = vmul.f32 %v1939, %v5393
        %v5436 = vmul.f32 %v666, %v5393
        %v5437 = vmul.f32 %v670, %v5393
        %v5438 = vmul.f32 %v1943, %v5393
        %v5439 = vmul.f32 %v4757, %v5393
        %v5440 = vmul.f32 %v4761, %v5393
        %v5441 = vmul.f32 %v5388, %v5393
        %v5490 = vrot.slane %v5394, 1
        %v5491 = vrot.slane %v5395, 1
        %v5492 = vsel %vm1736, %v5490, %v5491
        %v5493 = vrot.slane %v5396, 1
        %v5494 = vsel %vm1736, %v5491, %v5493
        %v5495 = vrot.slane %v5397, 1
        %v5496 = vrot.slane %v5398, 1
        %v5497 = vsel %vm1736, %v5495, %v5496
        %v5498 = vrot.slane %v5399, 1
        %v5499 = vsel %vm1736, %v5496, %v5498
        %v5500 = vrot.slane %v5400, 1
        %v5501 = vrot.slane %v5401, 1
        %v5502 = vsel %vm1736, %v5500, %v5501
        %v5503 = vrot.slane %v5402, 1
        %v5504 = vsel %vm1736, %v5501, %v5503
        %v5505 = vrot.slane %v5403, 1
        %v5506 = vrot.slane %v5404, 1
        %v5507 = vsel %vm1736, %v5505, %v5506
        %v5508 = vrot.slane %v5405, 1
        %v5509 = vsel %vm1736, %v5506, %v5508
        %v5510 = vrot.slane %v5406, 1
        %v5511 = vrot.slane %v5407, 1
        %v5512 = vsel %vm1736, %v5510, %v5511
        %v5513 = vrot.slane %v5408, 1
        %v5514 = vsel %vm1736, %v5511, %v5513
        %v5515 = vrot.slane %v5409, 1
        %v5516 = vrot.slane %v5410, 1
        %v5517 = vsel %vm1736, %v5515, %v5516
        %v5518 = vrot.slane %v5411, 1
        %v5519 = vsel %vm1736, %v5516, %v5518
        %v5520 = vrot.slane %v5412, 1
        %v5521 = vrot.slane %v5413, 1
        %v5522 = vsel %vm1736, %v5520, %v5521
        %v5523 = vrot.slane %v5414, 1
        %v5524 = vsel %vm1736, %v5521, %v5523
        %v5525 = vrot.slane %v5415, 1
        %v5526 = vrot.slane %v5416, 1
        %v5527 = vsel %vm1736, %v5525, %v5526
        %v5528 = vrot.slane %v5417, 1
        %v5529 = vsel %vm1736, %v5526, %v5528
        %v5530 = vrot.slane %v5418, 1
        %v5531 = vrot.slane %v5419, 1
        %v5532 = vsel %vm1736, %v5530, %v5531
        %v5533 = vrot.slane %v5420, 1
        %v5534 = vsel %vm1736, %v5531, %v5533
        %v5535 = vrot.slane %v5421, 1
        %v5536 = vrot.slane %v5422, 1
        %v5537 = vsel %vm1736, %v5535, %v5536
        %v5538 = vrot.slane %v5423, 1
        %v5539 = vsel %vm1736, %v5536, %v5538
        %v5540 = vrot.slane %v5424, 1
        %v5541 = vrot.slane %v5425, 1
        %v5542 = vsel %vm1736, %v5540, %v5541
        %v5543 = vrot.slane %v5426, 1
        %v5544 = vsel %vm1736, %v5541, %v5543
        %v5545 = vrot.slane %v5427, 1
        %v5546 = vrot.slane %v5428, 1
        %v5547 = vsel %vm1736, %v5545, %v5546
        %v5548 = vrot.slane %v5429, 1
        %v5549 = vsel %vm1736, %v5546, %v5548
        %v5550 = vrot.slane %v5430, 1
        %v5551 = vrot.slane %v5431, 1
        %v5552 = vsel %vm1736, %v5550, %v5551
        %v5553 = vrot.slane %v5432, 1
        %v5554 = vsel %vm1736, %v5551, %v5553
        %v5555 = vrot.slane %v5433, 1
        %v5556 = vrot.slane %v5434, 1
        %v5557 = vsel %vm1736, %v5555, %v5556
        %v5558 = vrot.slane %v5435, 1
        %v5559 = vsel %vm1736, %v5556, %v5558
        %v5560 = vrot.slane %v5436, 1
        %v5561 = vrot.slane %v5437, 1
        %v5562 = vsel %vm1736, %v5560, %v5561
        %v5563 = vrot.slane %v5438, 1
        %v5564 = vsel %vm1736, %v5561, %v5563
        %v5565 = vrot.slane %v5439, 1
        %v5566 = vrot.slane %v5440, 1
        %v5567 = vsel %vm1736, %v5565, %v5566
        %v5568 = vrot.slane %v5441, 1
        %v5569 = vsel %vm1736, %v5566, %v5568
        %v5602 = vadd.f32 %v5354, %v5492
        %v5603 = vadd.f32 %v5355, %v5494
        %v5604 = vadd.f32 %v5356, %v5497
        %v5605 = vadd.f32 %v5357, %v5499
        %v5606 = vadd.f32 %v5358, %v5502
        %v5607 = vadd.f32 %v5359, %v5504
        %v5608 = vadd.f32 %v5360, %v5507
        %v5609 = vadd.f32 %v5361, %v5509
        %v5610 = vadd.f32 %v5362, %v5512
        %v5611 = vadd.f32 %v5363, %v5514
        %v5612 = vadd.f32 %v5364, %v5517
        %v5613 = vadd.f32 %v5365, %v5519
        %v5614 = vadd.f32 %v5366, %v5522
        %v5615 = vadd.f32 %v5367, %v5524
        %v5616 = vadd.f32 %v5368, %v5527
        %v5617 = vadd.f32 %v5369, %v5529
        %v5618 = vadd.f32 %v5370, %v5532
        %v5619 = vadd.f32 %v5371, %v5534
        %v5620 = vadd.f32 %v5372, %v5537
        %v5621 = vadd.f32 %v5373, %v5539
        %v5622 = vadd.f32 %v5374, %v5542
        %v5623 = vadd.f32 %v5375, %v5544
        %v5624 = vadd.f32 %v5376, %v5547
        %v5625 = vadd.f32 %v5377, %v5549
        %v5626 = vadd.f32 %v5378, %v5552
        %v5627 = vadd.f32 %v5379, %v5554
        %v5628 = vadd.f32 %v5380, %v5557
        %v5629 = vadd.f32 %v5381, %v5559
        %v5630 = vadd.f32 %v5382, %v5562
        %v5631 = vadd.f32 %v5383, %v5564
        %v5632 = vadd.f32 %v5384, %v5567
        %v5633 = vadd.f32 %v5385, %v5569
        %5634 = vset.pattern.permute.xlu0 2
        %5635 = vperm.xlu0 %5634, %v192
        %v5636 = vpop.permute.xlu0 %5635
        %v5638 = vlaneseq
        %v5639 = vshrl.u32 %v5638, 7
        %v5640 = vsub.s32 2, %v5639
        %v5641 = vrot.slane %v315, %v5640
        %v5642 = vmul.f32 %v750, %v5641
        %v5643 = vmul.f32 %v754, %v5641
        %v5644 = vmul.f32 %v2195, %v5641
        %v5645 = vmul.f32 %v758, %v5641
        %v5646 = vmul.f32 %v762, %v5641
        %v5647 = vmul.f32 %v2199, %v5641
        %v5648 = vmul.f32 %v766, %v5641
        %v5649 = vmul.f32 %v770, %v5641
        %v5650 = vmul.f32 %v2203, %v5641
        %v5651 = vmul.f32 %v774, %v5641
        %v5652 = vmul.f32 %v778, %v5641
        %v5653 = vmul.f32 %v2207, %v5641
        %v5654 = vmul.f32 %v782, %v5641
        %v5655 = vmul.f32 %v786, %v5641
        %v5656 = vmul.f32 %v2211, %v5641
        %v5657 = vmul.f32 %v790, %v5641
        %v5658 = vmul.f32 %v794, %v5641
        %v5659 = vmul.f32 %v2215, %v5641
        %v5660 = vmul.f32 %v798, %v5641
        %v5661 = vmul.f32 %v802, %v5641
        %v5662 = vmul.f32 %v2219, %v5641
        %v5663 = vmul.f32 %v806, %v5641
        %v5664 = vmul.f32 %v810, %v5641
        %v5665 = vmul.f32 %v2223, %v5641
        %v5666 = vmul.f32 %v814, %v5641
        %v5667 = vmul.f32 %v818, %v5641
        %v5668 = vmul.f32 %v2227, %v5641
        %v5669 = vmul.f32 %v822, %v5641
        %v5670 = vmul.f32 %v826, %v5641
        %v5671 = vmul.f32 %v2231, %v5641
        %v5672 = vmul.f32 %v830, %v5641
        %v5673 = vmul.f32 %v834, %v5641
        %v5674 = vmul.f32 %v2235, %v5641
        %v5675 = vmul.f32 %v838, %v5641
        %v5676 = vmul.f32 %v842, %v5641
        %v5677 = vmul.f32 %v2239, %v5641
        %v5678 = vmul.f32 %v846, %v5641
        %v5679 = vmul.f32 %v850, %v5641
        %v5680 = vmul.f32 %v2243, %v5641
        %v5681 = vmul.f32 %v854, %v5641
        %v5682 = vmul.f32 %v858, %v5641
        %v5683 = vmul.f32 %v2247, %v5641
        %v5684 = vmul.f32 %v862, %v5641
        %v5685 = vmul.f32 %v866, %v5641
        %v5686 = vmul.f32 %v2251, %v5641
        %v5687 = vmul.f32 %v4833, %v5641
        %v5688 = vmul.f32 %v4837, %v5641
        %v5689 = vmul.f32 %v5636, %v5641
        %v5738 = vrot.slane %v5642, 1
        %v5739 = vrot.slane %v5643, 1
        %v5740 = vsel %vm1736, %v5738, %v5739
        %v5741 = vrot.slane %v5644, 1
        %v5742 = vsel %vm1736, %v5739, %v5741
        %v5743 = vrot.slane %v5645, 1
        %v5744 = vrot.slane %v5646, 1
        %v5745 = vsel %vm1736, %v5743, %v5744
        %v5746 = vrot.slane %v5647, 1
        %v5747 = vsel %vm1736, %v5744, %v5746
        %v5748 = vrot.slane %v5648, 1
        %v5749 = vrot.slane %v5649, 1
        %v5750 = vsel %vm1736, %v5748, %v5749
        %v5751 = vrot.slane %v5650, 1
        %v5752 = vsel %vm1736, %v5749, %v5751
        %v5753 = vrot.slane %v5651, 1
        %v5754 = vrot.slane %v5652, 1
        %v5755 = vsel %vm1736, %v5753, %v5754
        %v5756 = vrot.slane %v5653, 1
        %v5757 = vsel %vm1736, %v5754, %v5756
        %v5758 = vrot.slane %v5654, 1
        %v5759 = vrot.slane %v5655, 1
        %v5760 = vsel %vm1736, %v5758, %v5759
        %v5761 = vrot.slane %v5656, 1
        %v5762 = vsel %vm1736, %v5759, %v5761
        %v5763 = vrot.slane %v5657, 1
        %v5764 = vrot.slane %v5658, 1
        %v5765 = vsel %vm1736, %v5763, %v5764
        %v5766 = vrot.slane %v5659, 1
        %v5767 = vsel %vm1736, %v5764, %v5766
        %v5768 = vrot.slane %v5660, 1
        %v5769 = vrot.slane %v5661, 1
        %v5770 = vsel %vm1736, %v5768, %v5769
        %v5771 = vrot.slane %v5662, 1
        %v5772 = vsel %vm1736, %v5769, %v5771
        %v5773 = vrot.slane %v5663, 1
        %v5774 = vrot.slane %v5664, 1
        %v5775 = vsel %vm1736, %v5773, %v5774
        %v5776 = vrot.slane %v5665, 1
        %v5777 = vsel %vm1736, %v5774, %v5776
        %v5778 = vrot.slane %v5666, 1
        %v5779 = vrot.slane %v5667, 1
        %v5780 = vsel %vm1736, %v5778, %v5779
        %v5781 = vrot.slane %v5668, 1
        %v5782 = vsel %vm1736, %v5779, %v5781
        %v5783 = vrot.slane %v5669, 1
        %v5784 = vrot.slane %v5670, 1
        %v5785 = vsel %vm1736, %v5783, %v5784
        %v5786 = vrot.slane %v5671, 1
        %v5787 = vsel %vm1736, %v5784, %v5786
        %v5788 = vrot.slane %v5672, 1
        %v5789 = vrot.slane %v5673, 1
        %v5790 = vsel %vm1736, %v5788, %v5789
        %v5791 = vrot.slane %v5674, 1
        %v5792 = vsel %vm1736, %v5789, %v5791
        %v5793 = vrot.slane %v5675, 1
        %v5794 = vrot.slane %v5676, 1
        %v5795 = vsel %vm1736, %v5793, %v5794
        %v5796 = vrot.slane %v5677, 1
        %v5797 = vsel %vm1736, %v5794, %v5796
        %v5798 = vrot.slane %v5678, 1
        %v5799 = vrot.slane %v5679, 1
        %v5800 = vsel %vm1736, %v5798, %v5799
        %v5801 = vrot.slane %v5680, 1
        %v5802 = vsel %vm1736, %v5799, %v5801
        %v5803 = vrot.slane %v5681, 1
        %v5804 = vrot.slane %v5682, 1
        %v5805 = vsel %vm1736, %v5803, %v5804
        %v5806 = vrot.slane %v5683, 1
        %v5807 = vsel %vm1736, %v5804, %v5806
        %v5808 = vrot.slane %v5684, 1
        %v5809 = vrot.slane %v5685, 1
        %v5810 = vsel %vm1736, %v5808, %v5809
        %v5811 = vrot.slane %v5686, 1
        %v5812 = vsel %vm1736, %v5809, %v5811
        %v5813 = vrot.slane %v5687, 1
        %v5814 = vrot.slane %v5688, 1
        %v5815 = vsel %vm1736, %v5813, %v5814
        %v5816 = vrot.slane %v5689, 1
        %v5817 = vsel %vm1736, %v5814, %v5816
        %v5850 = vadd.f32 %v5602, %v5740
        %v5851 = vadd.f32 %v5603, %v5742
        %v5852 = vadd.f32 %v5604, %v5745
        %v5853 = vadd.f32 %v5605, %v5747
        %v5854 = vadd.f32 %v5606, %v5750
        %v5855 = vadd.f32 %v5607, %v5752
        %v5856 = vadd.f32 %v5608, %v5755
        %v5857 = vadd.f32 %v5609, %v5757
        %v5858 = vadd.f32 %v5610, %v5760
        %v5859 = vadd.f32 %v5611, %v5762
        %v5860 = vadd.f32 %v5612, %v5765
        %v5861 = vadd.f32 %v5613, %v5767
        %v5862 = vadd.f32 %v5614, %v5770
        %v5863 = vadd.f32 %v5615, %v5772
        %v5864 = vadd.f32 %v5616, %v5775
        %v5865 = vadd.f32 %v5617, %v5777
        %v5866 = vadd.f32 %v5618, %v5780
        %v5867 = vadd.f32 %v5619, %v5782
        %v5868 = vadd.f32 %v5620, %v5785
        %v5869 = vadd.f32 %v5621, %v5787
        %v5870 = vadd.f32 %v5622, %v5790
        %v5871 = vadd.f32 %v5623, %v5792
        %v5872 = vadd.f32 %v5624, %v5795
        %v5873 = vadd.f32 %v5625, %v5797
        %v5874 = vadd.f32 %v5626, %v5800
        %v5875 = vadd.f32 %v5627, %v5802
        %v5876 = vadd.f32 %v5628, %v5805
        %v5877 = vadd.f32 %v5629, %v5807
        %v5878 = vadd.f32 %v5630, %v5810
        %v5879 = vadd.f32 %v5631, %v5812
        %v5880 = vadd.f32 %v5632, %v5815
        %v5881 = vadd.f32 %v5633, %v5817
        %vm5882 = vcmask 195584
        %5883 = vst.msk [vmem:[%s136] sm:$0xff] %vm5882, %v5850
        %5884 = vst.msk [vmem:[%s136 + $0x8] sm:$0xff] %vm5882, %v5851
        %5885 = vst.msk [vmem:[%s136 + $0x10] sm:$0xff] %vm5882, %v5852
        %5886 = vst.msk [vmem:[%s136 + $0x18] sm:$0xff] %vm5882, %v5853
        %5887 = vst.msk [vmem:[%s136 + $0x20] sm:$0xff] %vm5882, %v5854
        %5888 = vst.msk [vmem:[%s136 + $0x28] sm:$0xff] %vm5882, %v5855
        %5889 = vst.msk [vmem:[%s136 + $0x30] sm:$0xff] %vm5882, %v5856
        %5890 = vst.msk [vmem:[%s136 + $0x38] sm:$0xff] %vm5882, %v5857
        %5891 = vst.msk [vmem:[%s136 + $0x40] sm:$0xff] %vm5882, %v5858
        %5892 = vst.msk [vmem:[%s136 + $0x48] sm:$0xff] %vm5882, %v5859
        %5893 = vst.msk [vmem:[%s136 + $0x50] sm:$0xff] %vm5882, %v5860
        %5894 = vst.msk [vmem:[%s136 + $0x58] sm:$0xff] %vm5882, %v5861
        %5895 = vst.msk [vmem:[%s136 + $0x60] sm:$0xff] %vm5882, %v5862
        %5896 = vst.msk [vmem:[%s136 + $0x68] sm:$0xff] %vm5882, %v5863
        %5897 = vst.msk [vmem:[%s136 + $0x70] sm:$0xff] %vm5882, %v5864
        %5898 = vst.msk [vmem:[%s136 + $0x78] sm:$0xff] %vm5882, %v5865
        %5899 = vst.msk [vmem:[%s136 + $0x80] sm:$0xff] %vm5882, %v5866
        %5900 = vst.msk [vmem:[%s136 + $0x88] sm:$0xff] %vm5882, %v5867
        %5901 = vst.msk [vmem:[%s136 + $0x90] sm:$0xff] %vm5882, %v5868
        %5902 = vst.msk [vmem:[%s136 + $0x98] sm:$0xff] %vm5882, %v5869
        %5903 = vst.msk [vmem:[%s136 + $0xa0] sm:$0xff] %vm5882, %v5870
        %5904 = vst.msk [vmem:[%s136 + $0xa8] sm:$0xff] %vm5882, %v5871
        %5905 = vst.msk [vmem:[%s136 + $0xb0] sm:$0xff] %vm5882, %v5872
        %5906 = vst.msk [vmem:[%s136 + $0xb8] sm:$0xff] %vm5882, %v5873
        %5907 = vst.msk [vmem:[%s136 + $0xc0] sm:$0xff] %vm5882, %v5874
        %5908 = vst.msk [vmem:[%s136 + $0xc8] sm:$0xff] %vm5882, %v5875
        %5909 = vst.msk [vmem:[%s136 + $0xd0] sm:$0xff] %vm5882, %v5876
        %5910 = vst.msk [vmem:[%s136 + $0xd8] sm:$0xff] %vm5882, %v5877
        %5911 = vst.msk [vmem:[%s136 + $0xe0] sm:$0xff] %vm5882, %v5878
        %5912 = vst.msk [vmem:[%s136 + $0xe8] sm:$0xff] %vm5882, %v5879
        %5913 = vst.msk [vmem:[%s136 + $0xf0] sm:$0xff] %vm5882, %v5880
        %5914 = vst.msk [vmem:[%s136 + $0xf8] sm:$0xff] %vm5882, %v5881
        %s5915 = sand.u32 %s71, 1
        %s5916 = scalar_lea.sflag [#allocation3], %s5915
        %s5917 = sand.u32 %s71, 1
        %s5918 = smul.addr %s5917, 256
        %s5919 = scalar_lea.vmem [#allocation2], %s5918
        // Predicated region
        $region29: #{stem_conv_s2.1} parent=27 // pred_check
          %p5920 = pneg %p81
        $region30: #{stem_conv_s2.1} parent=27 // pred_check_branch
          %5922 = sbr.rel (%p5920) target = $region32
        $region31: #{stem_conv_s2.1} parent=27 // pred_region
          %s5924 = ssub.s32 4096, 4096
          %5925 = vsyncadd %s5916, %s5924
          %s5926 = smul.addr %s16, 32
          %s5927 = smul.addr %s5926, 128
          %s5928 = scalar_lea.hbm %s2, %s5927
          %s5929 = sshll.u32 %s5919, 4
          %s5930 = int_to_ptr.vmem [resolvable:$true] %s5929
          %5935 = dma.vmem_to_hbm [thread:$0]  %s5930, 4096, %s5928, %s5916, 128, 128, 8
        $region32: #{stem_conv_s2.1} parent=27 // pred_fallthru
          _
      $region28: #{stem_conv_s2.1} parent=5 // pred_fallthru
        _
      %p5936 = scmp.le.s32.totalorder 2, %s11
      // Predicated region
      $region33: #{stem_conv_s2.1} parent=5 // pred_check
        %p5937 = pneg %p5936
      $region34: #{stem_conv_s2.1} parent=5 // pred_check_branch
        %5939 = sbr.rel (%p5937) target = $region36
      $region35: #{stem_conv_s2.1} parent=5 // pred_region
        %s5940 = ssub.s32 %s11, 2
        // Predicated region
        $region37: #{stem_conv_s2.1} parent=35 // pred_check
          %p5941 = pneg %p87
        $region38: #{stem_conv_s2.1} parent=35 // pred_check_branch
          %5943 = sbr.rel (%p5941) target = $region40
        $region39: #{stem_conv_s2.1} parent=35 // pred_region
          %s5944 = sand.u32 %s72, 1
          %s5945 = scalar_lea.sflag [#allocation3], %s5944
          %s5946 = sand.u32 %s72, 1
          %s5947 = smul.addr %s5946, 256
          %s5948 = scalar_lea.vmem [#allocation2], %s5947
          %5949 = dma.done %s5945, 4096
        $region40: #{stem_conv_s2.1} parent=35 // pred_fallthru
          _
      $region36: #{stem_conv_s2.1} parent=5 // pred_fallthru
        _
    $region6: #{stem_conv_s2.1} parent=1 // loop_footer
      %s15 = sadd.s32 1, %s11
    $region7: #{stem_conv_s2.1} parent=1 // loop_footer_branch
      %10 = sbr.rel target = $region3
    $region8: #{stem_conv_s2.1} parent=1 // loop_exit
      _
    %5950 = vsyncpa [#allocation3], 1
    %s5951 = scalar_lea.sflag [#allocation3], 1
    %5952 = vsyncpa %s5951, 1

</llo_original>
